<compile_context>
chip_gen: v7x
topology: tpu7x:2x2x1
jax: 0.10.0
libtpu: 0.0.40
codegen_flags: <defaults>
</compile_context>

<pallas_src>
import math
from functools import partial

import jax
import jax.numpy as jnp
from jax.experimental import pallas as pl
from jax.experimental.pallas import tpu as pltpu


def _round_up(x, m):
    return (x + m - 1) // m * m


# ----------------------------------------------------------------------------
# Pallas kernels
# ----------------------------------------------------------------------------
def _rnn_seq_kernel(x_ref, wih_hbm, whh_hbm, b_ref, out_ref,
                    wih_vmem, whh_vmem, h_scratch, xp_ref, dma_sem,
                    *, unroll):
    """One RNN(ReLU) layer over one time chunk, emitting the hidden sequence.

    x_ref  : (t_blk, Bp, D)   raw layer input (bf16/fp32)
    wih/whh: full weights in HBM (pl.ANY), DMA'd once into VMEM scratch
    b_ref  : (1, Hp) fp32     folded b_ih + b_hh
    out_ref: (t_blk, Bp, Hp)  hidden sequence (streamed dtype)
    """
    c = pl.program_id(0)

    @pl.when(c == 0)
    def _():
        # Grid-invariant weights: single-buffered manual DMA instead of a
        # double-buffered BlockSpec (halves weight VMEM footprint).
        cp_ih = pltpu.make_async_copy(wih_hbm, wih_vmem, dma_sem.at[0])
        cp_hh = pltpu.make_async_copy(whh_hbm, whh_vmem, dma_sem.at[1])
        cp_ih.start(); cp_hh.start()
        cp_ih.wait(); cp_hh.wait()
        h_scratch[...] = jnp.zeros_like(h_scratch)

    t_blk, Bp, D = x_ref.shape
    Hp = h_scratch.shape[1]

    # Fused input projection for the whole chunk: one MXU matmul, fp32 accum.
    x2d = x_ref[...].reshape(t_blk * Bp, D)
    xp_ref[...] = (
        jnp.dot(x2d, wih_vmem[...], preferred_element_type=jnp.float32)
        + b_ref[...]
    ).reshape(t_blk, Bp, Hp)

    def step(i, h):
        pre = xp_ref[i] + jnp.dot(h.astype(whh_vmem.dtype), whh_vmem[...],
                                  preferred_element_type=jnp.float32)
        h_new = jnp.maximum(pre, 0.0)                 # nonlinearity='relu'
        out_ref[i] = h_new.astype(out_ref.dtype)
        return h_new

    # No padded-time masking here: padded-time outputs of intermediate layers
    # are never consumed (the final layer freezes h on padded steps).
    h_scratch[...] = jax.lax.fori_loop(0, t_blk, step, h_scratch[...],
                                       unroll=unroll)


def _rnn_final_kernel(x_ref, wih_hbm, whh_hbm, b_ref, wfc_ref, bfc_ref, out_ref,
                      wih_vmem, whh_vmem, h_scratch, xp_ref, dma_sem,
                      *, t_real, unroll, need_mask):
    """Last RNN layer fused with the FC head: only (Bp, Cp) logits are emitted."""
    c = pl.program_id(0)
    last = pl.num_programs(0) - 1

    @pl.when(c == 0)
    def _():
        cp_ih = pltpu.make_async_copy(wih_hbm, wih_vmem, dma_sem.at[0])
        cp_hh = pltpu.make_async_copy(whh_hbm, whh_vmem, dma_sem.at[1])
        cp_ih.start(); cp_hh.start()
        cp_ih.wait(); cp_hh.wait()
        h_scratch[...] = jnp.zeros_like(h_scratch)
        out_ref[...] = jnp.zeros_like(out_ref)        # avoid uninit writeback

    t_blk, Bp, D = x_ref.shape
    Hp = h_scratch.shape[1]

    x2d = x_ref[...].reshape(t_blk * Bp, D)
    xp_ref[...] = (
        jnp.dot(x2d, wih_vmem[...], preferred_element_type=jnp.float32)
        + b_ref[...]
    ).reshape(t_blk, Bp, Hp)

    def make_step(masked):
        def step(i, h):
            pre = xp_ref[i] + jnp.dot(h.astype(whh_vmem.dtype), whh_vmem[...],
                                      preferred_element_type=jnp.float32)
            h_new = jnp.maximum(pre, 0.0)
            if masked:  # freeze state on padded time steps
                h_new = jnp.where(c * t_blk + i < t_real, h_new, h)
            return h_new
        return step

    if need_mask:
        # Only the last chunk can contain padded steps: keep the mask off the
        # recurrence critical path for every full chunk.
        @pl.when(c != last)
        def _():
            h_scratch[...] = jax.lax.fori_loop(0, t_blk, make_step(False),
                                               h_scratch[...], unroll=unroll)

        @pl.when(c == last)
        def _():
            h_scratch[...] = jax.lax.fori_loop(0, t_blk, make_step(True),
                                               h_scratch[...], unroll=unroll)
    else:
        h_scratch[...] = jax.lax.fori_loop(0, t_blk, make_step(False),
                                           h_scratch[...], unroll=unroll)

    @pl.when(c == last)
    def _():
        h_final = h_scratch[...]
        out_ref[...] = (
            jnp.dot(h_final.astype(wfc_ref.dtype), wfc_ref[...],
                    preferred_element_type=jnp.float32)
            + bfc_ref[...]
        ).astype(out_ref.dtype)


# ----------------------------------------------------------------------------
# pallas_call wrappers
# ----------------------------------------------------------------------------
def _rnn_seq_layer(x, wih_p, whh_p, bias_p, *, t_blk, unroll,
                   compute_dtype, vmem_limit):
    Tpad, Bp, D = x.shape
    Hp = whh_p.shape[1]
    kernel = partial(_rnn_seq_kernel, unroll=unroll)
    return pl.pallas_call(
        kernel,
        out_shape=jax.ShapeDtypeStruct((Tpad, Bp, Hp), compute_dtype),
        grid_spec=pltpu.PrefetchScalarGridSpec(
            num_scalar_prefetch=0,
            grid=(Tpad // t_blk,),
            in_specs=[
                pl.BlockSpec((t_blk, Bp, D), lambda c: (c, 0, 0)),
                pl.BlockSpec(memory_space=pl.ANY),      # W_ih (DMA'd once)
                pl.BlockSpec(memory_space=pl.ANY),      # W_hh (DMA'd once)
                pl.BlockSpec((1, Hp), lambda c: (0, 0)),
            ],
            out_specs=pl.BlockSpec((t_blk, Bp, Hp), lambda c: (c, 0, 0)),
            scratch_shapes=[
                pltpu.VMEM(wih_p.shape, compute_dtype),
                pltpu.VMEM(whh_p.shape, compute_dtype),
                pltpu.VMEM((Bp, Hp), jnp.float32),            # carried h (fp32)
                pltpu.VMEM((t_blk, Bp, Hp), jnp.float32),     # chunk projection
                pltpu.SemaphoreType.DMA((2,)),
            ],
        ),
        compiler_params=pltpu.CompilerParams(
            dimension_semantics=("arbitrary",),   # time recurrence is sequential
            vmem_limit_bytes=vmem_limit,
        ),
    )(x, wih_p, whh_p, bias_p)


def _rnn_final_layer(x, wih_p, whh_p, bias_p, wfc_p, bfc_p, *,
                     t_real, t_blk, unroll, need_mask, vmem_limit):
    Tpad, Bp, D = x.shape
    Hp = whh_p.shape[1]
    Cp = wfc_p.shape[1]
    kernel = partial(_rnn_final_kernel, t_real=t_real, unroll=unroll,
                     need_mask=need_mask)
    return pl.pallas_call(
        kernel,
        out_shape=jax.ShapeDtypeStruct((Bp, Cp), jnp.float32),
        grid_spec=pltpu.PrefetchScalarGridSpec(
            num_scalar_prefetch=0,
            grid=(Tpad // t_blk,),
            in_specs=[
                pl.BlockSpec((t_blk, Bp, D), lambda c: (c, 0, 0)),
                pl.BlockSpec(memory_space=pl.ANY),      # W_ih
                pl.BlockSpec(memory_space=pl.ANY),      # W_hh
                pl.BlockSpec((1, Hp), lambda c: (0, 0)),
                pl.BlockSpec((Hp, Cp), lambda c: (0, 0)),
                pl.BlockSpec((1, Cp), lambda c: (0, 0)),
            ],
            # same block every chunk: logits stay resident, written once
            out_specs=pl.BlockSpec((Bp, Cp), lambda c: (0, 0)),
            scratch_shapes=[
                pltpu.VMEM(wih_p.shape, wih_p.dtype),
                pltpu.VMEM(whh_p.shape, whh_p.dtype),
                pltpu.VMEM((Bp, Hp), jnp.float32),
                pltpu.VMEM((t_blk, Bp, Hp), jnp.float32),
                pltpu.SemaphoreType.DMA((2,)),
            ],
        ),
        compiler_params=pltpu.CompilerParams(
            dimension_semantics=("arbitrary",),
            vmem_limit_bytes=vmem_limit,
        ),
    )(x, wih_p, whh_p, bias_p, wfc_p, bfc_p)


# ----------------------------------------------------------------------------
# One-time parameter preparation (padding + dtype cast hoisted out of forward)
# ----------------------------------------------------------------------------
def prepare_params(params, compute_dtype=jnp.bfloat16):
    H = params["rnn"][0]["w_hh_t"].shape[0]
    C = params["fc"]["w_t"].shape[1]
    Hp = _round_up(H, 128)
    Cp = _round_up(C, 128)
    prep = {"rnn": [], "fc": {}}
    for l, layer in enumerate(params["rnn"]):
        w_ih = layer["w_ih_t"]                       # (d_in, H)
        w_hh = layer["w_hh_t"]                       # (H, H)
        d_in = w_ih.shape[0]
        d_in_p = d_in if l == 0 else Hp              # layer >0 consumes padded H
        bias = (layer["b_ih"] + layer["b_hh"]).reshape(1, -1)   # fold biases
        w_ih_p = jnp.zeros((d_in_p, Hp), compute_dtype).at[:d_in, :H].set(
            w_ih.astype(compute_dtype))
        w_hh_p = jnp.zeros((Hp, Hp), compute_dtype).at[:H, :H].set(
            w_hh.astype(compute_dtype))
        bias_p = jnp.zeros((1, Hp), jnp.float32).at[:, :H].set(bias)
        prep["rnn"].append({"w_ih": w_ih_p, "w_hh": w_hh_p, "bias": bias_p})
    w_fc = params["fc"]["w_t"]                       # (H, C)
    b_fc = params["fc"]["b"].reshape(1, -1)
    prep["fc"]["w"] = jnp.zeros((Hp, Cp), compute_dtype).at[:H, :C].set(
        w_fc.astype(compute_dtype))
    prep["fc"]["b"] = jnp.zeros((1, Cp), jnp.float32).at[:, :C].set(b_fc)
    return prep


# ----------------------------------------------------------------------------
# Model forward
# ----------------------------------------------------------------------------
def rnn_model_forward(x_btd, prep, *, num_classes, compute_dtype=jnp.bfloat16):
    """Forward pass of RNNModel.  x_btd: (B, T, input_size).  Returns (B, C)."""
    B, T, _ = x_btd.shape
    Hp = prep["rnn"][0]["w_hh"].shape[0]
    Cp = prep["fc"]["w"].shape[1]

    # bf16 packs 2 rows per sublane -> pad batch to 16; fp32 -> 8.
    sub = 16 if compute_dtype == jnp.bfloat16 else 8
    Bp = _round_up(B, sub)

    # Pick t_blk so it divides T whenever possible (statically elides masking).
    t_blk = T if T <= 128 else 128
    Tpad = _round_up(T, t_blk)
    need_mask = Tpad != T
    unroll = True if t_blk <= 32 else 8   # TODO(synk): sweep {4,8,16} per TPU gen.

    # time-major, zero-pad time/batch, cast streamed activations
    x = jnp.transpose(x_btd, (1, 0, 2)).astype(compute_dtype)   # (T, B, D)
    x = jnp.pad(x, ((0, Tpad - T), (0, Bp - B), (0, 0)))        # (Tpad, Bp, D)

    n_layers = len(prep["rnn"])
    isz = jnp.dtype(compute_dtype).itemsize
    out = None
    for l, layer in enumerate(prep["rnn"]):
        D = x.shape[-1]
        # rough per-call VMEM budget (re-derived per layer, explicit for
        # v5e 16 MiB / v7x 32 MiB scoped defaults)
        need = (2 * t_blk * Bp * D * isz              # input blocks (2 bufs)
                + 2 * t_blk * Bp * Hp * isz           # output blocks (2 bufs)
                + (D * Hp + Hp * Hp) * isz            # single-buffered weights
                + t_blk * Bp * Hp * 4 + Bp * Hp * 4   # xp + h scratch (fp32)
                + 2 * Hp * Cp * isz + 2 * Cp * 4)     # fc blocks (final layer)
        vmem_limit = int(min(96 * 2**20, max(32 * 2**20, 2 * need)))

        if l == n_layers - 1:
            # self.dropout(out[:, -1, :]) is identity in eval mode; FC fused.
            out = _rnn_final_layer(
                x, layer["w_ih"], layer["w_hh"], layer["bias"],
                prep["fc"]["w"], prep["fc"]["b"],
                t_real=T, t_blk=t_blk, unroll=unroll,
                need_mask=need_mask, vmem_limit=vmem_limit)
        else:
            x = _rnn_seq_layer(
                x, layer["w_ih"], layer["w_hh"], layer["bias"],
                t_blk=t_blk, unroll=unroll,
                compute_dtype=compute_dtype, vmem_limit=vmem_limit)
            # TODO(synk): nn.RNN inter-layer dropout is train-only; eval
            # forward is identity, so nothing is applied here.

    return out[:B, :num_classes]


# ----------------------------------------------------------------------------
# Deterministic parameter init (PyTorch shapes, uniform(-1/sqrt(H), 1/sqrt(H)))
# ----------------------------------------------------------------------------
def init_params(key, input_size, hidden_size, num_layers, num_classes):
    bound = 1.0 / math.sqrt(hidden_size)
    params = {"rnn": [], "fc": {}}
    for l in range(num_layers):
        d_in = input_size if l == 0 else hidden_size
        key, k1, k2, k3, k4 = jax.random.split(key, 5)
        params["rnn"].append(
            {
                # PyTorch stores W_ih as (H, d_in); pre-transposed for x @ W.T
                "w_ih_t": jax.random.uniform(k1, (d_in, hidden_size), jnp.float32, -bound, bound),
                "w_hh_t": jax.random.uniform(k2, (hidden_size, hidden_size), jnp.float32, -bound, bound),
                "b_ih": jax.random.uniform(k3, (1, hidden_size), jnp.float32, -bound, bound),
                "b_hh": jax.random.uniform(k4, (1, hidden_size), jnp.float32, -bound, bound),
            }
        )
    key, k1, k2 = jax.random.split(key, 3)
    params["fc"]["w_t"] = jax.random.uniform(
        k1, (hidden_size, num_classes), jnp.float32, -bound, bound)
    params["fc"]["b"] = jax.random.uniform(
        k2, (1, num_classes), jnp.float32, -bound, bound)
    return params


# ----------------------------------------------------------------------------
# Pure-JAX reference for a sanity check
# ----------------------------------------------------------------------------
def rnn_model_ref(x_btd, params):
    x = jnp.transpose(x_btd, (1, 0, 2)).astype(jnp.float32)  # (T, B, D)
    T, B, _ = x.shape
    for layer in params["rnn"]:
        H = layer["w_hh_t"].shape[0]
        h = jnp.zeros((B, H), jnp.float32)
        outs = []
        for t in range(T):
            h = jnp.maximum(
                x[t] @ layer["w_ih_t"] + h @ layer["w_hh_t"]
                + layer["b_ih"] + layer["b_hh"], 0.0)
            outs.append(h)
        x = jnp.stack(outs, axis=0)
    return x[-1] @ params["fc"]["w_t"] + params["fc"]["b"]


# ----------------------------------------------------------------------------
if __name__ == "__main__":
    B, T = 2, 8
    input_size, hidden_size, num_layers, num_classes = 4, 32, 2, 3

    key = jax.random.PRNGKey(0)
    key, xkey = jax.random.split(key)
    x = jax.random.normal(xkey, (B, T, input_size), jnp.float32)

    params = init_params(key, input_size, hidden_size, num_layers, num_classes)
    ref = rnn_model_ref(x, params)

    # fp32 path: verifies the kernel structure bit-exactly against the reference
    prep32 = prepare_params(params, compute_dtype=jnp.float32)
    fwd32 = jax.jit(partial(rnn_model_forward, num_classes=num_classes,
                            compute_dtype=jnp.float32))
    out32 = jax.block_until_ready(fwd32(x, prep32))
    assert out32.shape == (B, num_classes), out32.shape
    assert jnp.allclose(out32, ref, atol=1e-5, rtol=1e-5), (out32, ref)

    # bf16 streaming path (the performance configuration): fp32 accumulation,
    # bf16 weights/activations -> slightly looser tolerance.
    prep16 = prepare_params(params, compute_dtype=jnp.bfloat16)
    fwd16 = jax.jit(partial(rnn_model_forward, num_classes=num_classes,
                            compute_dtype=jnp.bfloat16))
    out16 = jax.block_until_ready(fwd16(x, prep16))
    assert out16.shape == (B, num_classes), out16.shape
    assert jnp.allclose(out16, ref, atol=5e-2, rtol=5e-2), (out16, ref)

    print("KERNEL_OK")
</pallas_src>

<mosaic_0001>
module attributes {stable_mosaic.version = 11 : i64} {
  func.func @_rnn_seq_kernel(%arg0: i32, %arg1: memref<8x8x4xf32, #tpu.memory_space<vmem>>, %arg2: memref<4x128xf32, #tpu.memory_space<any>>, %arg3: memref<128x128xf32, #tpu.memory_space<any>>, %arg4: memref<1x128xf32, #tpu.memory_space<vmem>>, %arg5: memref<8x8x128xf32, #tpu.memory_space<vmem>>, %arg6: memref<4x128xf32, #tpu.memory_space<vmem>>, %arg7: memref<128x128xf32, #tpu.memory_space<vmem>>, %arg8: memref<8x128xf32, #tpu.memory_space<vmem>>, %arg9: memref<8x8x128xf32, #tpu.memory_space<vmem>>, %arg10: memref<2x!tpu.dma_semaphore, #tpu.memory_space<semaphore_mem>>) attributes {dimension_semantics = [#tpu.dimension_semantics<arbitrary>], iteration_bounds = array<i64: 1>, scalar_prefetch = 0 : i64, scratch_operands = 5 : i64, tpu.core_type = #tpu.core_type<tc>, window_params = [{transform_indices = @transform_0, window_bounds = array<i64: 8, 8, 4>}, {}, {}, {pipeline_mode = #tpu.pipeline_mode<synchronous>, transform_indices = @transform_3, window_bounds = array<i64: 1, 128>}, {transform_indices = @transform_4, window_bounds = array<i64: 8, 8, 128>}]} {
    %c0_i32 = arith.constant 0 : i32
    %0 = arith.cmpi eq, %arg0, %c0_i32 : i32
    %1 = arith.extui %0 : i1 to i32
    %c0_i32_0 = arith.constant 0 : i32
    %2 = arith.cmpi ne, %1, %c0_i32_0 : i32
    scf.if %2 {
      %c0_i32_79 = arith.constant 0 : i32
      %110 = tpu.memref_slice %arg10[%c0_i32_79] : memref<2x!tpu.dma_semaphore, #tpu.memory_space<semaphore_mem>> -> memref<1x!tpu.dma_semaphore, #tpu.memory_space<semaphore_mem>>
      %111 = tpu.memref_squeeze %110 : memref<1x!tpu.dma_semaphore, #tpu.memory_space<semaphore_mem>> -> memref<!tpu.dma_semaphore, #tpu.memory_space<semaphore_mem>>
      tpu.enqueue_dma source(%arg2 : memref<4x128xf32, #tpu.memory_space<any>>) target(%arg6 : memref<4x128xf32, #tpu.memory_space<vmem>>) target_semaphore(%111 : memref<!tpu.dma_semaphore, #tpu.memory_space<semaphore_mem>>)
      %c1_i32_80 = arith.constant 1 : i32
      %112 = tpu.memref_slice %arg10[%c1_i32_80] : memref<2x!tpu.dma_semaphore, #tpu.memory_space<semaphore_mem>> -> memref<1x!tpu.dma_semaphore, #tpu.memory_space<semaphore_mem>>
      %113 = tpu.memref_squeeze %112 : memref<1x!tpu.dma_semaphore, #tpu.memory_space<semaphore_mem>> -> memref<!tpu.dma_semaphore, #tpu.memory_space<semaphore_mem>>
      tpu.enqueue_dma source(%arg3 : memref<128x128xf32, #tpu.memory_space<any>>) target(%arg7 : memref<128x128xf32, #tpu.memory_space<vmem>>) target_semaphore(%113 : memref<!tpu.dma_semaphore, #tpu.memory_space<semaphore_mem>>)
      %c0_i32_81 = arith.constant 0 : i32
      %114 = tpu.memref_slice %arg10[%c0_i32_81] : memref<2x!tpu.dma_semaphore, #tpu.memory_space<semaphore_mem>> -> memref<1x!tpu.dma_semaphore, #tpu.memory_space<semaphore_mem>>
      %115 = tpu.memref_squeeze %114 : memref<1x!tpu.dma_semaphore, #tpu.memory_space<semaphore_mem>> -> memref<!tpu.dma_semaphore, #tpu.memory_space<semaphore_mem>>
      tpu.wait_dma2 semaphore(%115 : memref<!tpu.dma_semaphore, #tpu.memory_space<semaphore_mem>>) src(%arg2 : memref<4x128xf32, #tpu.memory_space<any>>) dst(%arg6 : memref<4x128xf32, #tpu.memory_space<vmem>>)
      %c1_i32_82 = arith.constant 1 : i32
      %116 = tpu.memref_slice %arg10[%c1_i32_82] : memref<2x!tpu.dma_semaphore, #tpu.memory_space<semaphore_mem>> -> memref<1x!tpu.dma_semaphore, #tpu.memory_space<semaphore_mem>>
      %117 = tpu.memref_squeeze %116 : memref<1x!tpu.dma_semaphore, #tpu.memory_space<semaphore_mem>> -> memref<!tpu.dma_semaphore, #tpu.memory_space<semaphore_mem>>
      tpu.wait_dma2 semaphore(%117 : memref<!tpu.dma_semaphore, #tpu.memory_space<semaphore_mem>>) src(%arg3 : memref<128x128xf32, #tpu.memory_space<any>>) dst(%arg7 : memref<128x128xf32, #tpu.memory_space<vmem>>)
      %cst_83 = arith.constant 0.000000e+00 : f32
      %118 = vector.broadcast %cst_83 : f32 to vector<8x128xf32>
      %c0_84 = arith.constant 0 : index
      %c0_85 = arith.constant 0 : index
      %119 = vector.load %arg8[%c0_84, %c0_85] : memref<8x128xf32, #tpu.memory_space<vmem>>, vector<8x128xf32>
      tpu.vector_store %arg8[%c0_84, %c0_85], %118 {strides = array<i32>} : memref<8x128xf32, #tpu.memory_space<vmem>>, vector<8x128xf32>,
    } else {
    }
    %c0 = arith.constant 0 : index
    %c0_1 = arith.constant 0 : index
    %c0_2 = arith.constant 0 : index
    %3 = vector.load %arg1[%c0, %c0_1, %c0_2] : memref<8x8x4xf32, #tpu.memory_space<vmem>>, vector<8x8x4xf32>
    %4 = vector.shape_cast %3 : vector<8x8x4xf32> to vector<64x4xf32>
    %c0_3 = arith.constant 0 : index
    %c0_4 = arith.constant 0 : index
    %5 = vector.load %arg6[%c0_3, %c0_4] : memref<4x128xf32, #tpu.memory_space<vmem>>, vector<4x128xf32>
    %cst = arith.constant dense<0.000000e+00> : vector<64x128xf32>
    %6 = tpu.matmul %4, %5, %cst {dimension_numbers = #tpu.dot_dimension_numbers<[1], [0], [0], [1], [0, 0, 1, 1], [], []>} : vector<64x4xf32>, vector<4x128xf32>, vector<64x128xf32> -> vector<64x128xf32>
    %c0_5 = arith.constant 0 : index
    %c0_6 = arith.constant 0 : index
    %7 = vector.load %arg4[%c0_5, %c0_6] : memref<1x128xf32, #tpu.memory_space<vmem>>, vector<1x128xf32>
    %8 = vector.broadcast %7 : vector<1x128xf32> to vector<64x128xf32>
    %9 = arith.addf %6, %8 : vector<64x128xf32>
    %10 = vector.shape_cast %9 : vector<64x128xf32> to vector<8x8x128xf32>
    %c0_7 = arith.constant 0 : index
    %c0_8 = arith.constant 0 : index
    %c0_9 = arith.constant 0 : index
    %11 = vector.load %arg9[%c0_7, %c0_8, %c0_9] : memref<8x8x128xf32, #tpu.memory_space<vmem>>, vector<8x8x128xf32>
    tpu.vector_store %arg9[%c0_7, %c0_8, %c0_9], %10 {strides = array<i32>} : memref<8x8x128xf32, #tpu.memory_space<vmem>>, vector<8x8x128xf32>,
    %c0_10 = arith.constant 0 : index
    %c0_11 = arith.constant 0 : index
    %12 = vector.load %arg8[%c0_10, %c0_11] : memref<8x128xf32, #tpu.memory_space<vmem>>, vector<8x128xf32>
    %c0_i32_12 = arith.constant 0 : i32
    %13 = arith.index_cast %c0_i32_12 : i32 to index
    %c0_13 = arith.constant 0 : index
    %c0_14 = arith.constant 0 : index
    %14 = vector.load %arg9[%13, %c0_13, %c0_14] : memref<8x8x128xf32, #tpu.memory_space<vmem>>, vector<1x8x128xf32>
    %15 = vector.shape_cast %14 : vector<1x8x128xf32> to vector<8x128xf32>
    %c0_15 = arith.constant 0 : index
    %c0_16 = arith.constant 0 : index
    %16 = vector.load %arg7[%c0_15, %c0_16] : memref<128x128xf32, #tpu.memory_space<vmem>>, vector<128x128xf32>
    %cst_17 = arith.constant dense<0.000000e+00> : vector<8x128xf32>
    %17 = tpu.matmul %12, %16, %cst_17 {dimension_numbers = #tpu.dot_dimension_numbers<[1], [0], [0], [1], [0, 0, 1, 1], [], []>} : vector<8x128xf32>, vector<128x128xf32>, vector<8x128xf32> -> vector<8x128xf32>
    %18 = arith.addf %15, %17 : vector<8x128xf32>
    %cst_18 = arith.constant 0.000000e+00 : f32
    %19 = vector.broadcast %cst_18 : f32 to vector<8x128xf32>
    %20 = arith.maximumf %18, %19 : vector<8x128xf32>
    %21 = arith.index_cast %c0_i32_12 : i32 to index
    %c0_19 = arith.constant 0 : index
    %c0_20 = arith.constant 0 : index
    %22 = vector.load %arg5[%21, %c0_19, %c0_20] : memref<8x8x128xf32, #tpu.memory_space<vmem>>, vector<1x8x128xf32>
    %23 = vector.shape_cast %22 : vector<1x8x128xf32> to vector<8x128xf32>
    %24 = vector.shape_cast %20 : vector<8x128xf32> to vector<1x8x128xf32>
    tpu.vector_store %arg5[%21, %c0_19, %c0_20], %24 {strides = array<i32>} : memref<8x8x128xf32, #tpu.memory_space<vmem>>, vector<1x8x128xf32>,
    %c1_i32 = arith.constant 1 : i32
    %25 = arith.index_cast %c1_i32 : i32 to index
    %c0_21 = arith.constant 0 : index
    %c0_22 = arith.constant 0 : index
    %26 = vector.load %arg9[%25, %c0_21, %c0_22] : memref<8x8x128xf32, #tpu.memory_space<vmem>>, vector<1x8x128xf32>
    %27 = vector.shape_cast %26 : vector<1x8x128xf32> to vector<8x128xf32>
    %c0_23 = arith.constant 0 : index
    %c0_24 = arith.constant 0 : index
    %28 = vector.load %arg7[%c0_23, %c0_24] : memref<128x128xf32, #tpu.memory_space<vmem>>, vector<128x128xf32>
    %cst_25 = arith.constant dense<0.000000e+00> : vector<8x128xf32>
    %29 = tpu.matmul %20, %28, %cst_25 {dimension_numbers = #tpu.dot_dimension_numbers<[1], [0], [0], [1], [0, 0, 1, 1], [], []>} : vector<8x128xf32>, vector<128x128xf32>, vector<8x128xf32> -> vector<8x128xf32>
    %30 = arith.addf %27, %29 : vector<8x128xf32>
    %cst_26 = arith.constant 0.000000e+00 : f32
    %31 = vector.broadcast %cst_26 : f32 to vector<8x128xf32>
    %32 = arith.maximumf %30, %31 : vector<8x128xf32>
    %33 = arith.index_cast %c1_i32 : i32 to index
    %c0_27 = arith.constant 0 : index
    %c0_28 = arith.constant 0 : index
    %34 = vector.load %arg5[%33, %c0_27, %c0_28] : memref<8x8x128xf32, #tpu.memory_space<vmem>>, vector<1x8x128xf32>
    %35 = vector.shape_cast %34 : vector<1x8x128xf32> to vector<8x128xf32>
    %36 = vector.shape_cast %32 : vector<8x128xf32> to vector<1x8x128xf32>
    tpu.vector_store %arg5[%33, %c0_27, %c0_28], %36 {strides = array<i32>} : memref<8x8x128xf32, #tpu.memory_space<vmem>>, vector<1x8x128xf32>,
    %c2_i32 = arith.constant 2 : i32
    %37 = arith.index_cast %c2_i32 : i32 to index
    %c0_29 = arith.constant 0 : index
    %c0_30 = arith.constant 0 : index
    %38 = vector.load %arg9[%37, %c0_29, %c0_30] : memref<8x8x128xf32, #tpu.memory_space<vmem>>, vector<1x8x128xf32>
    %39 = vector.shape_cast %38 : vector<1x8x128xf32> to vector<8x128xf32>
    %c0_31 = arith.constant 0 : index
    %c0_32 = arith.constant 0 : index
    %40 = vector.load %arg7[%c0_31, %c0_32] : memref<128x128xf32, #tpu.memory_space<vmem>>, vector<128x128xf32>
    %cst_33 = arith.constant dense<0.000000e+00> : vector<8x128xf32>
    %41 = tpu.matmul %32, %40, %cst_33 {dimension_numbers = #tpu.dot_dimension_numbers<[1], [0], [0], [1], [0, 0, 1, 1], [], []>} : vector<8x128xf32>, vector<128x128xf32>, vector<8x128xf32> -> vector<8x128xf32>
    %42 = arith.addf %39, %41 : vector<8x128xf32>
    %cst_34 = arith.constant 0.000000e+00 : f32
    %43 = vector.broadcast %cst_34 : f32 to vector<8x128xf32>
    %44 = arith.maximumf %42, %43 : vector<8x128xf32>
    %45 = arith.index_cast %c2_i32 : i32 to index
    %c0_35 = arith.constant 0 : index
    %c0_36 = arith.constant 0 : index
    %46 = vector.load %arg5[%45, %c0_35, %c0_36] : memref<8x8x128xf32, #tpu.memory_space<vmem>>, vector<1x8x128xf32>
    %47 = vector.shape_cast %46 : vector<1x8x128xf32> to vector<8x128xf32>
    %48 = vector.shape_cast %44 : vector<8x128xf32> to vector<1x8x128xf32>
    tpu.vector_store %arg5[%45, %c0_35, %c0_36], %48 {strides = array<i32>} : memref<8x8x128xf32, #tpu.memory_space<vmem>>, vector<1x8x128xf32>,
    %c3_i32 = arith.constant 3 : i32
    %49 = arith.index_cast %c3_i32 : i32 to index
    %c0_37 = arith.constant 0 : index
    %c0_38 = arith.constant 0 : index
    %50 = vector.load %arg9[%49, %c0_37, %c0_38] : memref<8x8x128xf32, #tpu.memory_space<vmem>>, vector<1x8x128xf32>
    %51 = vector.shape_cast %50 : vector<1x8x128xf32> to vector<8x128xf32>
    %c0_39 = arith.constant 0 : index
    %c0_40 = arith.constant 0 : index
    %52 = vector.load %arg7[%c0_39, %c0_40] : memref<128x128xf32, #tpu.memory_space<vmem>>, vector<128x128xf32>
    %cst_41 = arith.constant dense<0.000000e+00> : vector<8x128xf32>
    %53 = tpu.matmul %44, %52, %cst_41 {dimension_numbers = #tpu.dot_dimension_numbers<[1], [0], [0], [1], [0, 0, 1, 1], [], []>} : vector<8x128xf32>, vector<128x128xf32>, vector<8x128xf32> -> vector<8x128xf32>
    %54 = arith.addf %51, %53 : vector<8x128xf32>
    %cst_42 = arith.constant 0.000000e+00 : f32
    %55 = vector.broadcast %cst_42 : f32 to vector<8x128xf32>
    %56 = arith.maximumf %54, %55 : vector<8x128xf32>
    %57 = arith.index_cast %c3_i32 : i32 to index
    %c0_43 = arith.constant 0 : index
    %c0_44 = arith.constant 0 : index
    %58 = vector.load %arg5[%57, %c0_43, %c0_44] : memref<8x8x128xf32, #tpu.memory_space<vmem>>, vector<1x8x128xf32>
    %59 = vector.shape_cast %58 : vector<1x8x128xf32> to vector<8x128xf32>
    %60 = vector.shape_cast %56 : vector<8x128xf32> to vector<1x8x128xf32>
    tpu.vector_store %arg5[%57, %c0_43, %c0_44], %60 {strides = array<i32>} : memref<8x8x128xf32, #tpu.memory_space<vmem>>, vector<1x8x128xf32>,
    %c4_i32 = arith.constant 4 : i32
    %61 = arith.index_cast %c4_i32 : i32 to index
    %c0_45 = arith.constant 0 : index
    %c0_46 = arith.constant 0 : index
    %62 = vector.load %arg9[%61, %c0_45, %c0_46] : memref<8x8x128xf32, #tpu.memory_space<vmem>>, vector<1x8x128xf32>
    %63 = vector.shape_cast %62 : vector<1x8x128xf32> to vector<8x128xf32>
    %c0_47 = arith.constant 0 : index
    %c0_48 = arith.constant 0 : index
    %64 = vector.load %arg7[%c0_47, %c0_48] : memref<128x128xf32, #tpu.memory_space<vmem>>, vector<128x128xf32>
    %cst_49 = arith.constant dense<0.000000e+00> : vector<8x128xf32>
    %65 = tpu.matmul %56, %64, %cst_49 {dimension_numbers = #tpu.dot_dimension_numbers<[1], [0], [0], [1], [0, 0, 1, 1], [], []>} : vector<8x128xf32>, vector<128x128xf32>, vector<8x128xf32> -> vector<8x128xf32>
    %66 = arith.addf %63, %65 : vector<8x128xf32>
    %cst_50 = arith.constant 0.000000e+00 : f32
    %67 = vector.broadcast %cst_50 : f32 to vector<8x128xf32>
    %68 = arith.maximumf %66, %67 : vector<8x128xf32>
    %69 = arith.index_cast %c4_i32 : i32 to index
    %c0_51 = arith.constant 0 : index
    %c0_52 = arith.constant 0 : index
    %70 = vector.load %arg5[%69, %c0_51, %c0_52] : memref<8x8x128xf32, #tpu.memory_space<vmem>>, vector<1x8x128xf32>
    %71 = vector.shape_cast %70 : vector<1x8x128xf32> to vector<8x128xf32>
    %72 = vector.shape_cast %68 : vector<8x128xf32> to vector<1x8x128xf32>
    tpu.vector_store %arg5[%69, %c0_51, %c0_52], %72 {strides = array<i32>} : memref<8x8x128xf32, #tpu.memory_space<vmem>>, vector<1x8x128xf32>,
    %c5_i32 = arith.constant 5 : i32
    %73 = arith.index_cast %c5_i32 : i32 to index
    %c0_53 = arith.constant 0 : index
    %c0_54 = arith.constant 0 : index
    %74 = vector.load %arg9[%73, %c0_53, %c0_54] : memref<8x8x128xf32, #tpu.memory_space<vmem>>, vector<1x8x128xf32>
    %75 = vector.shape_cast %74 : vector<1x8x128xf32> to vector<8x128xf32>
    %c0_55 = arith.constant 0 : index
    %c0_56 = arith.constant 0 : index
    %76 = vector.load %arg7[%c0_55, %c0_56] : memref<128x128xf32, #tpu.memory_space<vmem>>, vector<128x128xf32>
    %cst_57 = arith.constant dense<0.000000e+00> : vector<8x128xf32>
    %77 = tpu.matmul %68, %76, %cst_57 {dimension_numbers = #tpu.dot_dimension_numbers<[1], [0], [0], [1], [0, 0, 1, 1], [], []>} : vector<8x128xf32>, vector<128x128xf32>, vector<8x128xf32> -> vector<8x128xf32>
    %78 = arith.addf %75, %77 : vector<8x128xf32>
    %cst_58 = arith.constant 0.000000e+00 : f32
    %79 = vector.broadcast %cst_58 : f32 to vector<8x128xf32>
    %80 = arith.maximumf %78, %79 : vector<8x128xf32>
    %81 = arith.index_cast %c5_i32 : i32 to index
    %c0_59 = arith.constant 0 : index
    %c0_60 = arith.constant 0 : index
    %82 = vector.load %arg5[%81, %c0_59, %c0_60] : memref<8x8x128xf32, #tpu.memory_space<vmem>>, vector<1x8x128xf32>
    %83 = vector.shape_cast %82 : vector<1x8x128xf32> to vector<8x128xf32>
    %84 = vector.shape_cast %80 : vector<8x128xf32> to vector<1x8x128xf32>
    tpu.vector_store %arg5[%81, %c0_59, %c0_60], %84 {strides = array<i32>} : memref<8x8x128xf32, #tpu.memory_space<vmem>>, vector<1x8x128xf32>,
    %c6_i32 = arith.constant 6 : i32
    %85 = arith.index_cast %c6_i32 : i32 to index
    %c0_61 = arith.constant 0 : index
    %c0_62 = arith.constant 0 : index
    %86 = vector.load %arg9[%85, %c0_61, %c0_62] : memref<8x8x128xf32, #tpu.memory_space<vmem>>, vector<1x8x128xf32>
    %87 = vector.shape_cast %86 : vector<1x8x128xf32> to vector<8x128xf32>
    %c0_63 = arith.constant 0 : index
    %c0_64 = arith.constant 0 : index
    %88 = vector.load %arg7[%c0_63, %c0_64] : memref<128x128xf32, #tpu.memory_space<vmem>>, vector<128x128xf32>
    %cst_65 = arith.constant dense<0.000000e+00> : vector<8x128xf32>
    %89 = tpu.matmul %80, %88, %cst_65 {dimension_numbers = #tpu.dot_dimension_numbers<[1], [0], [0], [1], [0, 0, 1, 1], [], []>} : vector<8x128xf32>, vector<128x128xf32>, vector<8x128xf32> -> vector<8x128xf32>
    %90 = arith.addf %87, %89 : vector<8x128xf32>
    %cst_66 = arith.constant 0.000000e+00 : f32
    %91 = vector.broadcast %cst_66 : f32 to vector<8x128xf32>
    %92 = arith.maximumf %90, %91 : vector<8x128xf32>
    %93 = arith.index_cast %c6_i32 : i32 to index
    %c0_67 = arith.constant 0 : index
    %c0_68 = arith.constant 0 : index
    %94 = vector.load %arg5[%93, %c0_67, %c0_68] : memref<8x8x128xf32, #tpu.memory_space<vmem>>, vector<1x8x128xf32>
    %95 = vector.shape_cast %94 : vector<1x8x128xf32> to vector<8x128xf32>
    %96 = vector.shape_cast %92 : vector<8x128xf32> to vector<1x8x128xf32>
    tpu.vector_store %arg5[%93, %c0_67, %c0_68], %96 {strides = array<i32>} : memref<8x8x128xf32, #tpu.memory_space<vmem>>, vector<1x8x128xf32>,
    %c7_i32 = arith.constant 7 : i32
    %97 = arith.index_cast %c7_i32 : i32 to index
    %c0_69 = arith.constant 0 : index
    %c0_70 = arith.constant 0 : index
    %98 = vector.load %arg9[%97, %c0_69, %c0_70] : memref<8x8x128xf32, #tpu.memory_space<vmem>>, vector<1x8x128xf32>
    %99 = vector.shape_cast %98 : vector<1x8x128xf32> to vector<8x128xf32>
    %c0_71 = arith.constant 0 : index
    %c0_72 = arith.constant 0 : index
    %100 = vector.load %arg7[%c0_71, %c0_72] : memref<128x128xf32, #tpu.memory_space<vmem>>, vector<128x128xf32>
    %cst_73 = arith.constant dense<0.000000e+00> : vector<8x128xf32>
    %101 = tpu.matmul %92, %100, %cst_73 {dimension_numbers = #tpu.dot_dimension_numbers<[1], [0], [0], [1], [0, 0, 1, 1], [], []>} : vector<8x128xf32>, vector<128x128xf32>, vector<8x128xf32> -> vector<8x128xf32>
    %102 = arith.addf %99, %101 : vector<8x128xf32>
    %cst_74 = arith.constant 0.000000e+00 : f32
    %103 = vector.broadcast %cst_74 : f32 to vector<8x128xf32>
    %104 = arith.maximumf %102, %103 : vector<8x128xf32>
    %105 = arith.index_cast %c7_i32 : i32 to index
    %c0_75 = arith.constant 0 : index
    %c0_76 = arith.constant 0 : index
    %106 = vector.load %arg5[%105, %c0_75, %c0_76] : memref<8x8x128xf32, #tpu.memory_space<vmem>>, vector<1x8x128xf32>
    %107 = vector.shape_cast %106 : vector<1x8x128xf32> to vector<8x128xf32>
    %108 = vector.shape_cast %104 : vector<8x128xf32> to vector<1x8x128xf32>
    tpu.vector_store %arg5[%105, %c0_75, %c0_76], %108 {strides = array<i32>} : memref<8x8x128xf32, #tpu.memory_space<vmem>>, vector<1x8x128xf32>,
    %c8_i32 = arith.constant 8 : i32
    %c0_77 = arith.constant 0 : index
    %c0_78 = arith.constant 0 : index
    %109 = vector.load %arg8[%c0_77, %c0_78] : memref<8x128xf32, #tpu.memory_space<vmem>>, vector<8x128xf32>
    tpu.vector_store %arg8[%c0_77, %c0_78], %104 {strides = array<i32>} : memref<8x128xf32, #tpu.memory_space<vmem>>, vector<8x128xf32>,
    return
  }
  func.func @transform_0(%arg0: i32) -> (i32, i32, i32) {
    %c0_i32 = arith.constant 0 : i32
    %c0_i32_0 = arith.constant 0 : i32
    %c0_i32_1 = arith.constant 0 : i32
    return %arg0, %c0_i32, %c0_i32_0 : i32, i32, i32
  }
  func.func @transform_3(%arg0: i32) -> (i32, i32) {
    %c0_i32 = arith.constant 0 : i32
    %c0_i32_0 = arith.constant 0 : i32
    %c0_i32_1 = arith.constant 0 : i32
    return %c0_i32, %c0_i32_0 : i32, i32
  }
  func.func @transform_4(%arg0: i32) -> (i32, i32, i32) {
    %c0_i32 = arith.constant 0 : i32
    %c0_i32_0 = arith.constant 0 : i32
    %c0_i32_1 = arith.constant 0 : i32
    return %arg0, %c0_i32, %c0_i32_0 : i32, i32, i32
  }
}

module attributes {stable_mosaic.version = 11 : i64} {
  func.func @_rnn_final_kernel(%arg0: i32, %arg1: memref<8x8x128xf32, #tpu.memory_space<vmem>>, %arg2: memref<128x128xf32, #tpu.memory_space<any>>, %arg3: memref<128x128xf32, #tpu.memory_space<any>>, %arg4: memref<1x128xf32, #tpu.memory_space<vmem>>, %arg5: memref<128x128xf32, #tpu.memory_space<vmem>>, %arg6: memref<1x128xf32, #tpu.memory_space<vmem>>, %arg7: memref<8x128xf32, #tpu.memory_space<vmem>>, %arg8: memref<128x128xf32, #tpu.memory_space<vmem>>, %arg9: memref<128x128xf32, #tpu.memory_space<vmem>>, %arg10: memref<8x128xf32, #tpu.memory_space<vmem>>, %arg11: memref<8x8x128xf32, #tpu.memory_space<vmem>>, %arg12: memref<2x!tpu.dma_semaphore, #tpu.memory_space<semaphore_mem>>) attributes {dimension_semantics = [#tpu.dimension_semantics<arbitrary>], iteration_bounds = array<i64: 1>, scalar_prefetch = 0 : i64, scratch_operands = 5 : i64, tpu.core_type = #tpu.core_type<tc>, window_params = [{transform_indices = @transform_0, window_bounds = array<i64: 8, 8, 128>}, {}, {}, {pipeline_mode = #tpu.pipeline_mode<synchronous>, transform_indices = @transform_3, window_bounds = array<i64: 1, 128>}, {pipeline_mode = #tpu.pipeline_mode<synchronous>, transform_indices = @transform_4, window_bounds = array<i64: 128, 128>}, {pipeline_mode = #tpu.pipeline_mode<synchronous>, transform_indices = @transform_5, window_bounds = array<i64: 1, 128>}, {pipeline_mode = #tpu.pipeline_mode<synchronous>, transform_indices = @transform_6, window_bounds = array<i64: 8, 128>}]} {
    %c0_i32 = arith.constant 0 : i32
    %0 = arith.cmpi eq, %arg0, %c0_i32 : i32
    %1 = arith.extui %0 : i1 to i32
    %c0_i32_0 = arith.constant 0 : i32
    %2 = arith.cmpi ne, %1, %c0_i32_0 : i32
    scf.if %2 {
      %c0_i32_65 = arith.constant 0 : i32
      %81 = tpu.memref_slice %arg12[%c0_i32_65] : memref<2x!tpu.dma_semaphore, #tpu.memory_space<semaphore_mem>> -> memref<1x!tpu.dma_semaphore, #tpu.memory_space<semaphore_mem>>
      %82 = tpu.memref_squeeze %81 : memref<1x!tpu.dma_semaphore, #tpu.memory_space<semaphore_mem>> -> memref<!tpu.dma_semaphore, #tpu.memory_space<semaphore_mem>>
      tpu.enqueue_dma source(%arg2 : memref<128x128xf32, #tpu.memory_space<any>>) target(%arg8 : memref<128x128xf32, #tpu.memory_space<vmem>>) target_semaphore(%82 : memref<!tpu.dma_semaphore, #tpu.memory_space<semaphore_mem>>)
      %c1_i32_66 = arith.constant 1 : i32
      %83 = tpu.memref_slice %arg12[%c1_i32_66] : memref<2x!tpu.dma_semaphore, #tpu.memory_space<semaphore_mem>> -> memref<1x!tpu.dma_semaphore, #tpu.memory_space<semaphore_mem>>
      %84 = tpu.memref_squeeze %83 : memref<1x!tpu.dma_semaphore, #tpu.memory_space<semaphore_mem>> -> memref<!tpu.dma_semaphore, #tpu.memory_space<semaphore_mem>>
      tpu.enqueue_dma source(%arg3 : memref<128x128xf32, #tpu.memory_space<any>>) target(%arg9 : memref<128x128xf32, #tpu.memory_space<vmem>>) target_semaphore(%84 : memref<!tpu.dma_semaphore, #tpu.memory_space<semaphore_mem>>)
      %c0_i32_67 = arith.constant 0 : i32
      %85 = tpu.memref_slice %arg12[%c0_i32_67] : memref<2x!tpu.dma_semaphore, #tpu.memory_space<semaphore_mem>> -> memref<1x!tpu.dma_semaphore, #tpu.memory_space<semaphore_mem>>
      %86 = tpu.memref_squeeze %85 : memref<1x!tpu.dma_semaphore, #tpu.memory_space<semaphore_mem>> -> memref<!tpu.dma_semaphore, #tpu.memory_space<semaphore_mem>>
      tpu.wait_dma2 semaphore(%86 : memref<!tpu.dma_semaphore, #tpu.memory_space<semaphore_mem>>) src(%arg2 : memref<128x128xf32, #tpu.memory_space<any>>) dst(%arg8 : memref<128x128xf32, #tpu.memory_space<vmem>>)
      %c1_i32_68 = arith.constant 1 : i32
      %87 = tpu.memref_slice %arg12[%c1_i32_68] : memref<2x!tpu.dma_semaphore, #tpu.memory_space<semaphore_mem>> -> memref<1x!tpu.dma_semaphore, #tpu.memory_space<semaphore_mem>>
      %88 = tpu.memref_squeeze %87 : memref<1x!tpu.dma_semaphore, #tpu.memory_space<semaphore_mem>> -> memref<!tpu.dma_semaphore, #tpu.memory_space<semaphore_mem>>
      tpu.wait_dma2 semaphore(%88 : memref<!tpu.dma_semaphore, #tpu.memory_space<semaphore_mem>>) src(%arg3 : memref<128x128xf32, #tpu.memory_space<any>>) dst(%arg9 : memref<128x128xf32, #tpu.memory_space<vmem>>)
      %cst_69 = arith.constant 0.000000e+00 : f32
      %89 = vector.broadcast %cst_69 : f32 to vector<8x128xf32>
      %c0_70 = arith.constant 0 : index
      %c0_71 = arith.constant 0 : index
      %90 = vector.load %arg10[%c0_70, %c0_71] : memref<8x128xf32, #tpu.memory_space<vmem>>, vector<8x128xf32>
      tpu.vector_store %arg10[%c0_70, %c0_71], %89 {strides = array<i32>} : memref<8x128xf32, #tpu.memory_space<vmem>>, vector<8x128xf32>,
      %cst_72 = arith.constant 0.000000e+00 : f32
      %91 = vector.broadcast %cst_72 : f32 to vector<8x128xf32>
      %c0_73 = arith.constant 0 : index
      %c0_74 = arith.constant 0 : index
      %92 = vector.load %arg7[%c0_73, %c0_74] : memref<8x128xf32, #tpu.memory_space<vmem>>, vector<8x128xf32>
      tpu.vector_store %arg7[%c0_73, %c0_74], %91 {strides = array<i32>} : memref<8x128xf32, #tpu.memory_space<vmem>>, vector<8x128xf32>,
    } else {
    }
    %c0 = arith.constant 0 : index
    %c0_1 = arith.constant 0 : index
    %c0_2 = arith.constant 0 : index
    %3 = vector.load %arg1[%c0, %c0_1, %c0_2] : memref<8x8x128xf32, #tpu.memory_space<vmem>>, vector<8x8x128xf32>
    %4 = vector.shape_cast %3 : vector<8x8x128xf32> to vector<64x128xf32>
    %c0_3 = arith.constant 0 : index
    %c0_4 = arith.constant 0 : index
    %5 = vector.load %arg8[%c0_3, %c0_4] : memref<128x128xf32, #tpu.memory_space<vmem>>, vector<128x128xf32>
    %cst = arith.constant dense<0.000000e+00> : vector<64x128xf32>
    %6 = tpu.matmul %4, %5, %cst {dimension_numbers = #tpu.dot_dimension_numbers<[1], [0], [0], [1], [0, 0, 1, 1], [], []>} : vector<64x128xf32>, vector<128x128xf32>, vector<64x128xf32> -> vector<64x128xf32>
    %c0_5 = arith.constant 0 : index
    %c0_6 = arith.constant 0 : index
    %7 = vector.load %arg4[%c0_5, %c0_6] : memref<1x128xf32, #tpu.memory_space<vmem>>, vector<1x128xf32>
    %8 = vector.broadcast %7 : vector<1x128xf32> to vector<64x128xf32>
    %9 = arith.addf %6, %8 : vector<64x128xf32>
    %10 = vector.shape_cast %9 : vector<64x128xf32> to vector<8x8x128xf32>
    %c0_7 = arith.constant 0 : index
    %c0_8 = arith.constant 0 : index
    %c0_9 = arith.constant 0 : index
    %11 = vector.load %arg11[%c0_7, %c0_8, %c0_9] : memref<8x8x128xf32, #tpu.memory_space<vmem>>, vector<8x8x128xf32>
    tpu.vector_store %arg11[%c0_7, %c0_8, %c0_9], %10 {strides = array<i32>} : memref<8x8x128xf32, #tpu.memory_space<vmem>>, vector<8x8x128xf32>,
    %c0_10 = arith.constant 0 : index
    %c0_11 = arith.constant 0 : index
    %12 = vector.load %arg10[%c0_10, %c0_11] : memref<8x128xf32, #tpu.memory_space<vmem>>, vector<8x128xf32>
    %c0_i32_12 = arith.constant 0 : i32
    %13 = arith.index_cast %c0_i32_12 : i32 to index
    %c0_13 = arith.constant 0 : index
    %c0_14 = arith.constant 0 : index
    %14 = vector.load %arg11[%13, %c0_13, %c0_14] : memref<8x8x128xf32, #tpu.memory_space<vmem>>, vector<1x8x128xf32>
    %15 = vector.shape_cast %14 : vector<1x8x128xf32> to vector<8x128xf32>
    %c0_15 = arith.constant 0 : index
    %c0_16 = arith.constant 0 : index
    %16 = vector.load %arg9[%c0_15, %c0_16] : memref<128x128xf32, #tpu.memory_space<vmem>>, vector<128x128xf32>
    %cst_17 = arith.constant dense<0.000000e+00> : vector<8x128xf32>
    %17 = tpu.matmul %12, %16, %cst_17 {dimension_numbers = #tpu.dot_dimension_numbers<[1], [0], [0], [1], [0, 0, 1, 1], [], []>} : vector<8x128xf32>, vector<128x128xf32>, vector<8x128xf32> -> vector<8x128xf32>
    %18 = arith.addf %15, %17 : vector<8x128xf32>
    %cst_18 = arith.constant 0.000000e+00 : f32
    %19 = vector.broadcast %cst_18 : f32 to vector<8x128xf32>
    %20 = arith.maximumf %18, %19 : vector<8x128xf32>
    %c1_i32 = arith.constant 1 : i32
    %21 = arith.index_cast %c1_i32 : i32 to index
    %c0_19 = arith.constant 0 : index
    %c0_20 = arith.constant 0 : index
    %22 = vector.load %arg11[%21, %c0_19, %c0_20] : memref<8x8x128xf32, #tpu.memory_space<vmem>>, vector<1x8x128xf32>
    %23 = vector.shape_cast %22 : vector<1x8x128xf32> to vector<8x128xf32>
    %c0_21 = arith.constant 0 : index
    %c0_22 = arith.constant 0 : index
    %24 = vector.load %arg9[%c0_21, %c0_22] : memref<128x128xf32, #tpu.memory_space<vmem>>, vector<128x128xf32>
    %cst_23 = arith.constant dense<0.000000e+00> : vector<8x128xf32>
    %25 = tpu.matmul %20, %24, %cst_23 {dimension_numbers = #tpu.dot_dimension_numbers<[1], [0], [0], [1], [0, 0, 1, 1], [], []>} : vector<8x128xf32>, vector<128x128xf32>, vector<8x128xf32> -> vector<8x128xf32>
    %26 = arith.addf %23, %25 : vector<8x128xf32>
    %cst_24 = arith.constant 0.000000e+00 : f32
    %27 = vector.broadcast %cst_24 : f32 to vector<8x128xf32>
    %28 = arith.maximumf %26, %27 : vector<8x128xf32>
    %c2_i32 = arith.constant 2 : i32
    %29 = arith.index_cast %c2_i32 : i32 to index
    %c0_25 = arith.constant 0 : index
    %c0_26 = arith.constant 0 : index
    %30 = vector.load %arg11[%29, %c0_25, %c0_26] : memref<8x8x128xf32, #tpu.memory_space<vmem>>, vector<1x8x128xf32>
    %31 = vector.shape_cast %30 : vector<1x8x128xf32> to vector<8x128xf32>
    %c0_27 = arith.constant 0 : index
    %c0_28 = arith.constant 0 : index
    %32 = vector.load %arg9[%c0_27, %c0_28] : memref<128x128xf32, #tpu.memory_space<vmem>>, vector<128x128xf32>
    %cst_29 = arith.constant dense<0.000000e+00> : vector<8x128xf32>
    %33 = tpu.matmul %28, %32, %cst_29 {dimension_numbers = #tpu.dot_dimension_numbers<[1], [0], [0], [1], [0, 0, 1, 1], [], []>} : vector<8x128xf32>, vector<128x128xf32>, vector<8x128xf32> -> vector<8x128xf32>
    %34 = arith.addf %31, %33 : vector<8x128xf32>
    %cst_30 = arith.constant 0.000000e+00 : f32
    %35 = vector.broadcast %cst_30 : f32 to vector<8x128xf32>
    %36 = arith.maximumf %34, %35 : vector<8x128xf32>
    %c3_i32 = arith.constant 3 : i32
    %37 = arith.index_cast %c3_i32 : i32 to index
    %c0_31 = arith.constant 0 : index
    %c0_32 = arith.constant 0 : index
    %38 = vector.load %arg11[%37, %c0_31, %c0_32] : memref<8x8x128xf32, #tpu.memory_space<vmem>>, vector<1x8x128xf32>
    %39 = vector.shape_cast %38 : vector<1x8x128xf32> to vector<8x128xf32>
    %c0_33 = arith.constant 0 : index
    %c0_34 = arith.constant 0 : index
    %40 = vector.load %arg9[%c0_33, %c0_34] : memref<128x128xf32, #tpu.memory_space<vmem>>, vector<128x128xf32>
    %cst_35 = arith.constant dense<0.000000e+00> : vector<8x128xf32>
    %41 = tpu.matmul %36, %40, %cst_35 {dimension_numbers = #tpu.dot_dimension_numbers<[1], [0], [0], [1], [0, 0, 1, 1], [], []>} : vector<8x128xf32>, vector<128x128xf32>, vector<8x128xf32> -> vector<8x128xf32>
    %42 = arith.addf %39, %41 : vector<8x128xf32>
    %cst_36 = arith.constant 0.000000e+00 : f32
    %43 = vector.broadcast %cst_36 : f32 to vector<8x128xf32>
    %44 = arith.maximumf %42, %43 : vector<8x128xf32>
    %c4_i32 = arith.constant 4 : i32
    %45 = arith.index_cast %c4_i32 : i32 to index
    %c0_37 = arith.constant 0 : index
    %c0_38 = arith.constant 0 : index
    %46 = vector.load %arg11[%45, %c0_37, %c0_38] : memref<8x8x128xf32, #tpu.memory_space<vmem>>, vector<1x8x128xf32>
    %47 = vector.shape_cast %46 : vector<1x8x128xf32> to vector<8x128xf32>
    %c0_39 = arith.constant 0 : index
    %c0_40 = arith.constant 0 : index
    %48 = vector.load %arg9[%c0_39, %c0_40] : memref<128x128xf32, #tpu.memory_space<vmem>>, vector<128x128xf32>
    %cst_41 = arith.constant dense<0.000000e+00> : vector<8x128xf32>
    %49 = tpu.matmul %44, %48, %cst_41 {dimension_numbers = #tpu.dot_dimension_numbers<[1], [0], [0], [1], [0, 0, 1, 1], [], []>} : vector<8x128xf32>, vector<128x128xf32>, vector<8x128xf32> -> vector<8x128xf32>
    %50 = arith.addf %47, %49 : vector<8x128xf32>
    %cst_42 = arith.constant 0.000000e+00 : f32
    %51 = vector.broadcast %cst_42 : f32 to vector<8x128xf32>
    %52 = arith.maximumf %50, %51 : vector<8x128xf32>
    %c5_i32 = arith.constant 5 : i32
    %53 = arith.index_cast %c5_i32 : i32 to index
    %c0_43 = arith.constant 0 : index
    %c0_44 = arith.constant 0 : index
    %54 = vector.load %arg11[%53, %c0_43, %c0_44] : memref<8x8x128xf32, #tpu.memory_space<vmem>>, vector<1x8x128xf32>
    %55 = vector.shape_cast %54 : vector<1x8x128xf32> to vector<8x128xf32>
    %c0_45 = arith.constant 0 : index
    %c0_46 = arith.constant 0 : index
    %56 = vector.load %arg9[%c0_45, %c0_46] : memref<128x128xf32, #tpu.memory_space<vmem>>, vector<128x128xf32>
    %cst_47 = arith.constant dense<0.000000e+00> : vector<8x128xf32>
    %57 = tpu.matmul %52, %56, %cst_47 {dimension_numbers = #tpu.dot_dimension_numbers<[1], [0], [0], [1], [0, 0, 1, 1], [], []>} : vector<8x128xf32>, vector<128x128xf32>, vector<8x128xf32> -> vector<8x128xf32>
    %58 = arith.addf %55, %57 : vector<8x128xf32>
    %cst_48 = arith.constant 0.000000e+00 : f32
    %59 = vector.broadcast %cst_48 : f32 to vector<8x128xf32>
    %60 = arith.maximumf %58, %59 : vector<8x128xf32>
    %c6_i32 = arith.constant 6 : i32
    %61 = arith.index_cast %c6_i32 : i32 to index
    %c0_49 = arith.constant 0 : index
    %c0_50 = arith.constant 0 : index
    %62 = vector.load %arg11[%61, %c0_49, %c0_50] : memref<8x8x128xf32, #tpu.memory_space<vmem>>, vector<1x8x128xf32>
    %63 = vector.shape_cast %62 : vector<1x8x128xf32> to vector<8x128xf32>
    %c0_51 = arith.constant 0 : index
    %c0_52 = arith.constant 0 : index
    %64 = vector.load %arg9[%c0_51, %c0_52] : memref<128x128xf32, #tpu.memory_space<vmem>>, vector<128x128xf32>
    %cst_53 = arith.constant dense<0.000000e+00> : vector<8x128xf32>
    %65 = tpu.matmul %60, %64, %cst_53 {dimension_numbers = #tpu.dot_dimension_numbers<[1], [0], [0], [1], [0, 0, 1, 1], [], []>} : vector<8x128xf32>, vector<128x128xf32>, vector<8x128xf32> -> vector<8x128xf32>
    %66 = arith.addf %63, %65 : vector<8x128xf32>
    %cst_54 = arith.constant 0.000000e+00 : f32
    %67 = vector.broadcast %cst_54 : f32 to vector<8x128xf32>
    %68 = arith.maximumf %66, %67 : vector<8x128xf32>
    %c7_i32 = arith.constant 7 : i32
    %69 = arith.index_cast %c7_i32 : i32 to index
    %c0_55 = arith.constant 0 : index
    %c0_56 = arith.constant 0 : index
    %70 = vector.load %arg11[%69, %c0_55, %c0_56] : memref<8x8x128xf32, #tpu.memory_space<vmem>>, vector<1x8x128xf32>
    %71 = vector.shape_cast %70 : vector<1x8x128xf32> to vector<8x128xf32>
    %c0_57 = arith.constant 0 : index
    %c0_58 = arith.constant 0 : index
    %72 = vector.load %arg9[%c0_57, %c0_58] : memref<128x128xf32, #tpu.memory_space<vmem>>, vector<128x128xf32>
    %cst_59 = arith.constant dense<0.000000e+00> : vector<8x128xf32>
    %73 = tpu.matmul %68, %72, %cst_59 {dimension_numbers = #tpu.dot_dimension_numbers<[1], [0], [0], [1], [0, 0, 1, 1], [], []>} : vector<8x128xf32>, vector<128x128xf32>, vector<8x128xf32> -> vector<8x128xf32>
    %74 = arith.addf %71, %73 : vector<8x128xf32>
    %cst_60 = arith.constant 0.000000e+00 : f32
    %75 = vector.broadcast %cst_60 : f32 to vector<8x128xf32>
    %76 = arith.maximumf %74, %75 : vector<8x128xf32>
    %c8_i32 = arith.constant 8 : i32
    %c0_61 = arith.constant 0 : index
    %c0_62 = arith.constant 0 : index
    %77 = vector.load %arg10[%c0_61, %c0_62] : memref<8x128xf32, #tpu.memory_space<vmem>>, vector<8x128xf32>
    tpu.vector_store %arg10[%c0_61, %c0_62], %76 {strides = array<i32>} : memref<8x128xf32, #tpu.memory_space<vmem>>, vector<8x128xf32>,
    %c0_i32_63 = arith.constant 0 : i32
    %78 = arith.cmpi eq, %arg0, %c0_i32_63 : i32
    %79 = arith.extui %78 : i1 to i32
    %c0_i32_64 = arith.constant 0 : i32
    %80 = arith.cmpi ne, %79, %c0_i32_64 : i32
    scf.if %80 {
      %c0_65 = arith.constant 0 : index
      %c0_66 = arith.constant 0 : index
      %81 = vector.load %arg10[%c0_65, %c0_66] : memref<8x128xf32, #tpu.memory_space<vmem>>, vector<8x128xf32>
      %c0_67 = arith.constant 0 : index
      %c0_68 = arith.constant 0 : index
      %82 = vector.load %arg5[%c0_67, %c0_68] : memref<128x128xf32, #tpu.memory_space<vmem>>, vector<128x128xf32>
      %cst_69 = arith.constant dense<0.000000e+00> : vector<8x128xf32>
      %83 = tpu.matmul %81, %82, %cst_69 {dimension_numbers = #tpu.dot_dimension_numbers<[1], [0], [0], [1], [0, 0, 1, 1], [], []>} : vector<8x128xf32>, vector<128x128xf32>, vector<8x128xf32> -> vector<8x128xf32>
      %c0_70 = arith.constant 0 : index
      %c0_71 = arith.constant 0 : index
      %84 = vector.load %arg6[%c0_70, %c0_71] : memref<1x128xf32, #tpu.memory_space<vmem>>, vector<1x128xf32>
      %85 = vector.broadcast %84 : vector<1x128xf32> to vector<8x128xf32>
      %86 = arith.addf %83, %85 : vector<8x128xf32>
      %c0_72 = arith.constant 0 : index
      %c0_73 = arith.constant 0 : index
      %87 = vector.load %arg7[%c0_72, %c0_73] : memref<8x128xf32, #tpu.memory_space<vmem>>, vector<8x128xf32>
      tpu.vector_store %arg7[%c0_72, %c0_73], %86 {strides = array<i32>} : memref<8x128xf32, #tpu.memory_space<vmem>>, vector<8x128xf32>,
    } else {
    }
    return
  }
  func.func @transform_0(%arg0: i32) -> (i32, i32, i32) {
    %c0_i32 = arith.constant 0 : i32
    %c0_i32_0 = arith.constant 0 : i32
    %c0_i32_1 = arith.constant 0 : i32
    return %arg0, %c0_i32, %c0_i32_0 : i32, i32, i32
  }
  func.func @transform_3(%arg0: i32) -> (i32, i32) {
    %c0_i32 = arith.constant 0 : i32
    %c0_i32_0 = arith.constant 0 : i32
    %c0_i32_1 = arith.constant 0 : i32
    return %c0_i32, %c0_i32_0 : i32, i32
  }
  func.func @transform_4(%arg0: i32) -> (i32, i32) {
    %c0_i32 = arith.constant 0 : i32
    %c0_i32_0 = arith.constant 0 : i32
    %c0_i32_1 = arith.constant 0 : i32
    return %c0_i32, %c0_i32_0 : i32, i32
  }
  func.func @transform_5(%arg0: i32) -> (i32, i32) {
    %c0_i32 = arith.constant 0 : i32
    %c0_i32_0 = arith.constant 0 : i32
    %c0_i32_1 = arith.constant 0 : i32
    return %c0_i32, %c0_i32_0 : i32, i32
  }
  func.func @transform_6(%arg0: i32) -> (i32, i32) {
    %c0_i32 = arith.constant 0 : i32
    %c0_i32_0 = arith.constant 0 : i32
    %c0_i32_1 = arith.constant 0 : i32
    return %c0_i32, %c0_i32_0 : i32, i32
  }
}

</mosaic_0001>

<llo_original>
// kernel: rnn_model_forward.3
$region0: #{rnn_model_forward.3}
  #allocation0 [shape = 'u32[]', space=smem, size = 0x4, offset = 0x4, fixed_abs, tag = 'smem constant byte address 0x4 - core index']
  #allocation1 [shape = 'u32[144,128]{1,0:T(1,128)}', space=vmem, size = 0x12000, scoped, tag = 'internal scratch']
  #allocation2 [shape = 'f32[128,128]{1,0:T(8,128)}', space=vmem, size = 0x10000, scoped, tag = 'scratch operand']
  #allocation3 [shape = 'f32[128,128]{1,0:T(8,128)}', space=vmem, size = 0x10000, scoped, tag = 'scratch operand']
  #allocation4 [shape = 'f32[8,128]{1,0:T(8,128)}', space=vmem, size = 0x1000, scoped, tag = 'scratch operand']
  #allocation5 [shape = 'f32[8,8,128]{2,1,0:T(8,128)}', space=vmem, size = 0x8000, scoped, tag = 'scratch operand']
  #allocation6 [shape = 's32[2]{0}', space=sflag, size = 0x8, scoped, tag = 'scratch operand']
  #allocation9 [shape = 's32[]', space=sflag, size = 0x4, offset = 0, fixed_abs, tag = 'sflag constant byte address 0x0 - dummy sync flag']
  #allocation10 [shape = 's32[]', space=sflag, size = 0x4, offset = 0, fixed_abs, tag = 'sflag constant byte address 0x0 - dummy sync flag']
  %s0 = inlined_call_operand.vmem [shape: f32[8,8,128], index: 0, kind: input, shape index: {}]
  %s1 = inlined_call_operand.vmem [shape: f32[128,128], index: 1, kind: input, shape index: {}]
  %s2 = inlined_call_operand.vmem [shape: f32[128,128], index: 2, kind: input, shape index: {}]
  %s3 = inlined_call_operand.vmem [shape: f32[1,128], index: 3, kind: input, shape index: {}]
  %s4 = inlined_call_operand.hbm [shape: f32[128,128], index: 4, kind: input, shape index: {}]
  %s5 = inlined_call_operand.vmem [shape: f32[1,128], index: 5, kind: input, shape index: {}]
  %s6 = inlined_call_operand.vmem [shape: f32[8,128], index: 6, kind: output, shape index: {}]
  %s7 = sld [smem:[#allocation0]]
  $region106: #{rnn_model_forward.3} parent=0
    _
  %s9 = ssub.s32 1, %s7
  %s10 = scalar_select 0, %s9, %s7
  $region1: #{rnn_model_forward.3} parent=0
    #allocation7 [shape = 'u8[65536]{0}', space=vmem, size = 0x10000, scoped, tag = 'input window, operand 4, single buffered']
    #allocation8 [shape = 's32[1]{0}', space=sflag, size = 0x4, scoped, tag = 'scoped memory for rnn_model_forward.3']
    %11 = vsyncpa [#allocation8], 0
    // Predicated region
    $region2: #{rnn_model_forward.3} parent=1 // pred_check
      _
    $region3: #{rnn_model_forward.3} parent=1 // pred_check_branch
      %13 = sbr.rel (0) target = $region5
    $region4: #{rnn_model_forward.3} parent=1 // pred_region
      _
    $region5: #{rnn_model_forward.3} parent=1 // pred_fallthru
      _
    // Predicated region
    $region6: #{rnn_model_forward.3} parent=1 // pred_check
      _
    $region7: #{rnn_model_forward.3} parent=1 // pred_check_branch
      %15 = sbr.rel (0) target = $region9
    $region8: #{rnn_model_forward.3} parent=1 // pred_region
      _
    $region9: #{rnn_model_forward.3} parent=1 // pred_fallthru
      _
    // Predicated region
    $region10: #{rnn_model_forward.3} parent=1 // pred_check
      _
    $region11: #{rnn_model_forward.3} parent=1 // pred_check_branch
      %17 = sbr.rel (0) target = $region13
    $region12: #{rnn_model_forward.3} parent=1 // pred_region
      %s19 = ssub.s32 2048, 2048
      %20 = vsyncadd [#allocation8], %s19
      %s21 = sshll.u32 [#allocation7], 4
      %s22 = int_to_ptr.vmem [resolvable:$true] %s21
      %27 = dma.hbm_to_vmem [thread:$0]  %s4, 2048, %s22, [#allocation8], 128, 128, 8
    $region13: #{rnn_model_forward.3} parent=1 // pred_fallthru
      _
    // Predicated region
    $region14: #{rnn_model_forward.3} parent=1 // pred_check
      _
    $region15: #{rnn_model_forward.3} parent=1 // pred_check_branch
      %29 = sbr.rel (0) target = $region17
    $region16: #{rnn_model_forward.3} parent=1 // pred_region
      _
    $region17: #{rnn_model_forward.3} parent=1 // pred_fallthru
      _
    // Predicated region
    $region18: #{rnn_model_forward.3} parent=1 // pred_check
      _
    $region19: #{rnn_model_forward.3} parent=1 // pred_check_branch
      %31 = sbr.rel (0) target = $region21
    $region20: #{rnn_model_forward.3} parent=1 // pred_region
      %32 = dma.done [#allocation8], 2048
    $region21: #{rnn_model_forward.3} parent=1 // pred_fallthru
      _
    %p33 = scmp.eq.s32.totalorder 0, 0
    // Predicated region
    $region22: #{rnn_model_forward.3} parent=1 // pred_check
      %p34 = pneg %p33
    $region23: #{rnn_model_forward.3} parent=1 // pred_check_branch
      %36 = sbr.rel (%p34) target = $region25
    $region24: #{rnn_model_forward.3} parent=1 // pred_region
      %p38 = scmp.lt.u32.totalorder 128, 8
      %p39 = pneg %p38
      // Predicated region
      $region26: #{rnn_model_forward.3} parent=24 // pred_check
        _
      $region27: #{rnn_model_forward.3} parent=24 // pred_check_branch
        %41 = sbr.rel (%p38) target = $region29
      $region28: #{rnn_model_forward.3} parent=24 // pred_region
        %s56 = sand.u32 128, 7
        %p57 = scmp.eq.s32.totalorder %s56, 0
        // Predicated region
        $region41: #{rnn_model_forward.3} parent=28 // pred_check
          %p58 = pneg %p57
        $region42: #{rnn_model_forward.3} parent=28 // pred_check_branch
          %60 = sbr.rel (%p58) target = $region44
        $region43: #{rnn_model_forward.3} parent=28 // pred_region
          loop: start=0, step=1, limit=1
          $region45: #{rnn_model_forward.3} parent=43 // loop_pre_header
            _
          $region46: #{rnn_model_forward.3} parent=43 // loop_header
            %s62 = sphi 0, %s66
            %p63 = scmp.ge.s32.totalorder %s62, 1
            %s67 = sphi %s1, %s1
            %s68 = sphi [#allocation2], [#allocation2]
          $region47: #{rnn_model_forward.3} parent=43 // loop_header_branch
            %65 = sbr.rel (%p63) target = $region51
          $region48: #{rnn_model_forward.3} parent=43 // loop_body
            %v69 = vld [vmem:[%s67] sm:$0xff]
            %70 = vst [vmem:[%s68] sm:$0xff] %v69
            %v71 = vld [vmem:[%s67 + $0x8] sm:$0xff]
            %72 = vst [vmem:[%s68 + $0x8] sm:$0xff] %v71
            %v73 = vld [vmem:[%s67 + $0x10] sm:$0xff]
            %74 = vst [vmem:[%s68 + $0x10] sm:$0xff] %v73
            %v75 = vld [vmem:[%s67 + $0x18] sm:$0xff]
            %76 = vst [vmem:[%s68 + $0x18] sm:$0xff] %v75
            %v77 = vld [vmem:[%s67 + $0x20] sm:$0xff]
            %78 = vst [vmem:[%s68 + $0x20] sm:$0xff] %v77
            %v79 = vld [vmem:[%s67 + $0x28] sm:$0xff]
            %80 = vst [vmem:[%s68 + $0x28] sm:$0xff] %v79
            %v81 = vld [vmem:[%s67 + $0x30] sm:$0xff]
            %82 = vst [vmem:[%s68 + $0x30] sm:$0xff] %v81
            %v83 = vld [vmem:[%s67 + $0x38] sm:$0xff]
            %84 = vst [vmem:[%s68 + $0x38] sm:$0xff] %v83
            %v85 = vld [vmem:[%s67 + $0x40] sm:$0xff]
            %86 = vst [vmem:[%s68 + $0x40] sm:$0xff] %v85
            %v87 = vld [vmem:[%s67 + $0x48] sm:$0xff]
            %88 = vst [vmem:[%s68 + $0x48] sm:$0xff] %v87
            %v89 = vld [vmem:[%s67 + $0x50] sm:$0xff]
            %90 = vst [vmem:[%s68 + $0x50] sm:$0xff] %v89
            %v91 = vld [vmem:[%s67 + $0x58] sm:$0xff]
            %92 = vst [vmem:[%s68 + $0x58] sm:$0xff] %v91
            %v93 = vld [vmem:[%s67 + $0x60] sm:$0xff]
            %94 = vst [vmem:[%s68 + $0x60] sm:$0xff] %v93
            %v95 = vld [vmem:[%s67 + $0x68] sm:$0xff]
            %96 = vst [vmem:[%s68 + $0x68] sm:$0xff] %v95
            %v97 = vld [vmem:[%s67 + $0x70] sm:$0xff]
            %98 = vst [vmem:[%s68 + $0x70] sm:$0xff] %v97
            %v99 = vld [vmem:[%s67 + $0x78] sm:$0xff]
            %100 = vst [vmem:[%s68 + $0x78] sm:$0xff] %v99
          $region49: #{rnn_model_forward.3} parent=43 // loop_footer
            %s66 = sadd.s32 1, %s62
          $region50: #{rnn_model_forward.3} parent=43 // loop_footer_branch
            %61 = sbr.rel target = $region46
          $region51: #{rnn_model_forward.3} parent=43 // loop_exit
            _
        $region44: #{rnn_model_forward.3} parent=28 // pred_fallthru
          _
        %p101 = pneg %p57
        // Predicated region
        $region52: #{rnn_model_forward.3} parent=28 // pred_check
          _
        $region53: #{rnn_model_forward.3} parent=28 // pred_check_branch
          %103 = sbr.rel (%p57) target = $region55
        $region54: #{rnn_model_forward.3} parent=28 // pred_region
          %s104 = sand.u32 128, 7
        $region55: #{rnn_model_forward.3} parent=28 // pred_fallthru
          _
      $region29: #{rnn_model_forward.3} parent=24 // pred_fallthru
        _
      // Predicated region
      $region30: #{rnn_model_forward.3} parent=24 // pred_check
        %p42 = pneg %p38
      $region31: #{rnn_model_forward.3} parent=24 // pred_check_branch
        %44 = sbr.rel (%p42) target = $region33
      $region32: #{rnn_model_forward.3} parent=24 // pred_region
        %s45 = sshllo.u32 0, 128
        loop: start=0, step=1, limit=1
        $region34: #{rnn_model_forward.3} parent=32 // loop_pre_header
          _
        $region35: #{rnn_model_forward.3} parent=32 // loop_header
          %s47 = sphi 0, %s51
          %p48 = scmp.ge.s32.totalorder %s47, 1
          %s52 = sphi %s1, %s1
          %s53 = sphi [#allocation2], [#allocation2]
        $region36: #{rnn_model_forward.3} parent=32 // loop_header_branch
          %50 = sbr.rel (%p48) target = $region40
        $region37: #{rnn_model_forward.3} parent=32 // loop_body
          %v54 = vld [vmem:[%s52] sm:%s45]
          %55 = vst [vmem:[%s53] sm:%s45] %v54
        $region38: #{rnn_model_forward.3} parent=32 // loop_footer
          %s51 = sadd.s32 1, %s47
        $region39: #{rnn_model_forward.3} parent=32 // loop_footer_branch
          %46 = sbr.rel target = $region35
        $region40: #{rnn_model_forward.3} parent=32 // loop_exit
          _
      $region33: #{rnn_model_forward.3} parent=24 // pred_fallthru
        _
      // Predicated region
      $region56: #{rnn_model_forward.3} parent=24 // pred_check
        _
      $region57: #{rnn_model_forward.3} parent=24 // pred_check_branch
        %107 = sbr.rel (0) target = $region59
      $region58: #{rnn_model_forward.3} parent=24 // pred_region
        %108 = vsyncadd [#allocation6], 2048
      $region59: #{rnn_model_forward.3} parent=24 // pred_fallthru
        _
      %s109 = scalar_lea.sflag [#allocation6], 1
      %p111 = scmp.lt.u32.totalorder 128, 8
      %p112 = pneg %p111
      // Predicated region
      $region60: #{rnn_model_forward.3} parent=24 // pred_check
        _
      $region61: #{rnn_model_forward.3} parent=24 // pred_check_branch
        %114 = sbr.rel (%p111) target = $region63
      $region62: #{rnn_model_forward.3} parent=24 // pred_region
        %s129 = sand.u32 128, 7
        %p130 = scmp.eq.s32.totalorder %s129, 0
        // Predicated region
        $region75: #{rnn_model_forward.3} parent=62 // pred_check
          %p131 = pneg %p130
        $region76: #{rnn_model_forward.3} parent=62 // pred_check_branch
          %133 = sbr.rel (%p131) target = $region78
        $region77: #{rnn_model_forward.3} parent=62 // pred_region
          loop: start=0, step=1, limit=1
          $region79: #{rnn_model_forward.3} parent=77 // loop_pre_header
            _
          $region80: #{rnn_model_forward.3} parent=77 // loop_header
            %s135 = sphi 0, %s139
            %p136 = scmp.ge.s32.totalorder %s135, 1
            %s140 = sphi %s2, %s2
            %s141 = sphi [#allocation3], [#allocation3]
          $region81: #{rnn_model_forward.3} parent=77 // loop_header_branch
            %138 = sbr.rel (%p136) target = $region85
          $region82: #{rnn_model_forward.3} parent=77 // loop_body
            %v142 = vld [vmem:[%s140] sm:$0xff]
            %143 = vst [vmem:[%s141] sm:$0xff] %v142
            %v144 = vld [vmem:[%s140 + $0x8] sm:$0xff]
            %145 = vst [vmem:[%s141 + $0x8] sm:$0xff] %v144
            %v146 = vld [vmem:[%s140 + $0x10] sm:$0xff]
            %147 = vst [vmem:[%s141 + $0x10] sm:$0xff] %v146
            %v148 = vld [vmem:[%s140 + $0x18] sm:$0xff]
            %149 = vst [vmem:[%s141 + $0x18] sm:$0xff] %v148
            %v150 = vld [vmem:[%s140 + $0x20] sm:$0xff]
            %151 = vst [vmem:[%s141 + $0x20] sm:$0xff] %v150
            %v152 = vld [vmem:[%s140 + $0x28] sm:$0xff]
            %153 = vst [vmem:[%s141 + $0x28] sm:$0xff] %v152
            %v154 = vld [vmem:[%s140 + $0x30] sm:$0xff]
            %155 = vst [vmem:[%s141 + $0x30] sm:$0xff] %v154
            %v156 = vld [vmem:[%s140 + $0x38] sm:$0xff]
            %157 = vst [vmem:[%s141 + $0x38] sm:$0xff] %v156
            %v158 = vld [vmem:[%s140 + $0x40] sm:$0xff]
            %159 = vst [vmem:[%s141 + $0x40] sm:$0xff] %v158
            %v160 = vld [vmem:[%s140 + $0x48] sm:$0xff]
            %161 = vst [vmem:[%s141 + $0x48] sm:$0xff] %v160
            %v162 = vld [vmem:[%s140 + $0x50] sm:$0xff]
            %163 = vst [vmem:[%s141 + $0x50] sm:$0xff] %v162
            %v164 = vld [vmem:[%s140 + $0x58] sm:$0xff]
            %165 = vst [vmem:[%s141 + $0x58] sm:$0xff] %v164
            %v166 = vld [vmem:[%s140 + $0x60] sm:$0xff]
            %167 = vst [vmem:[%s141 + $0x60] sm:$0xff] %v166
            %v168 = vld [vmem:[%s140 + $0x68] sm:$0xff]
            %169 = vst [vmem:[%s141 + $0x68] sm:$0xff] %v168
            %v170 = vld [vmem:[%s140 + $0x70] sm:$0xff]
            %171 = vst [vmem:[%s141 + $0x70] sm:$0xff] %v170
            %v172 = vld [vmem:[%s140 + $0x78] sm:$0xff]
            %173 = vst [vmem:[%s141 + $0x78] sm:$0xff] %v172
          $region83: #{rnn_model_forward.3} parent=77 // loop_footer
            %s139 = sadd.s32 1, %s135
          $region84: #{rnn_model_forward.3} parent=77 // loop_footer_branch
            %134 = sbr.rel target = $region80
          $region85: #{rnn_model_forward.3} parent=77 // loop_exit
            _
        $region78: #{rnn_model_forward.3} parent=62 // pred_fallthru
          _
        %p174 = pneg %p130
        // Predicated region
        $region86: #{rnn_model_forward.3} parent=62 // pred_check
          _
        $region87: #{rnn_model_forward.3} parent=62 // pred_check_branch
          %176 = sbr.rel (%p130) target = $region89
        $region88: #{rnn_model_forward.3} parent=62 // pred_region
          %s177 = sand.u32 128, 7
        $region89: #{rnn_model_forward.3} parent=62 // pred_fallthru
          _
      $region63: #{rnn_model_forward.3} parent=24 // pred_fallthru
        _
      // Predicated region
      $region64: #{rnn_model_forward.3} parent=24 // pred_check
        %p115 = pneg %p111
      $region65: #{rnn_model_forward.3} parent=24 // pred_check_branch
        %117 = sbr.rel (%p115) target = $region67
      $region66: #{rnn_model_forward.3} parent=24 // pred_region
        %s118 = sshllo.u32 0, 128
        loop: start=0, step=1, limit=1
        $region68: #{rnn_model_forward.3} parent=66 // loop_pre_header
          _
        $region69: #{rnn_model_forward.3} parent=66 // loop_header
          %s120 = sphi 0, %s124
          %p121 = scmp.ge.s32.totalorder %s120, 1
          %s125 = sphi %s2, %s2
          %s126 = sphi [#allocation3], [#allocation3]
        $region70: #{rnn_model_forward.3} parent=66 // loop_header_branch
          %123 = sbr.rel (%p121) target = $region74
        $region71: #{rnn_model_forward.3} parent=66 // loop_body
          %v127 = vld [vmem:[%s125] sm:%s118]
          %128 = vst [vmem:[%s126] sm:%s118] %v127
        $region72: #{rnn_model_forward.3} parent=66 // loop_footer
          %s124 = sadd.s32 1, %s120
        $region73: #{rnn_model_forward.3} parent=66 // loop_footer_branch
          %119 = sbr.rel target = $region69
        $region74: #{rnn_model_forward.3} parent=66 // loop_exit
          _
      $region67: #{rnn_model_forward.3} parent=24 // pred_fallthru
        _
      // Predicated region
      $region90: #{rnn_model_forward.3} parent=24 // pred_check
        _
      $region91: #{rnn_model_forward.3} parent=24 // pred_check_branch
        %180 = sbr.rel (0) target = $region93
      $region92: #{rnn_model_forward.3} parent=24 // pred_region
        %181 = vsyncadd %s109, 2048
      $region93: #{rnn_model_forward.3} parent=24 // pred_fallthru
        _
      %s182 = smul.u32 128, 1
      %s183 = sshll.u32 %s182, 4
      %184 = dma.done [#allocation6], %s183
      %s185 = sshll.u32 %s182, 4
      %186 = dma.done %s109, %s185
      %187 = vst [vmem:[#allocation4] sm:$0xff] 0.0
      %188 = vst [vmem:[%s6] sm:$0xff] 0.0
    $region25: #{rnn_model_forward.3} parent=1 // pred_fallthru
      _
    %v189 = vld [vmem:[%s0] sm:$0xff]
    %v190 = vld [vmem:[%s0 + $0x8] sm:$0xff]
    %v191 = vld [vmem:[%s0 + $0x10] sm:$0xff]
    %v192 = vld [vmem:[%s0 + $0x18] sm:$0xff]
    %v193 = vld [vmem:[%s0 + $0x20] sm:$0xff]
    %v194 = vld [vmem:[%s0 + $0x28] sm:$0xff]
    %v195 = vld [vmem:[%s0 + $0x30] sm:$0xff]
    %v196 = vld [vmem:[%s0 + $0x38] sm:$0xff]
    %v197 = vld [vmem:[#allocation2] sm:$0xff]
    %v198 = vld [vmem:[#allocation2 + $0x8] sm:$0xff]
    %v199 = vld [vmem:[#allocation2 + $0x10] sm:$0xff]
    %v200 = vld [vmem:[#allocation2 + $0x18] sm:$0xff]
    %v201 = vld [vmem:[#allocation2 + $0x20] sm:$0xff]
    %v202 = vld [vmem:[#allocation2 + $0x28] sm:$0xff]
    %v203 = vld [vmem:[#allocation2 + $0x30] sm:$0xff]
    %v204 = vld [vmem:[#allocation2 + $0x38] sm:$0xff]
    %v205 = vld [vmem:[#allocation2 + $0x40] sm:$0xff]
    %v206 = vld [vmem:[#allocation2 + $0x48] sm:$0xff]
    %v207 = vld [vmem:[#allocation2 + $0x50] sm:$0xff]
    %v208 = vld [vmem:[#allocation2 + $0x58] sm:$0xff]
    %v209 = vld [vmem:[#allocation2 + $0x60] sm:$0xff]
    %v210 = vld [vmem:[#allocation2 + $0x68] sm:$0xff]
    %v211 = vld [vmem:[#allocation2 + $0x70] sm:$0xff]
    %v212 = vld [vmem:[#allocation2 + $0x78] sm:$0xff]
    %v213 = vld [vmem:[%s3] sm:$0x1]
    %v215 = vlaneseq
    %v216 = vshrl.u32 %v215, 7
    %v217 = vsub.s32 0, %v216
    %v218 = vrot.slane %v213, %v217
    %220 = vmatprep.subr.mxu0 0.0
    %221 = vmatpush1.msra.mxu0 %v197
    %222 = vmatprep.subr.mxu0 0.0
    %223 = vmatpush1.msra.mxu0 %v198
    %224 = vmatprep.subr.mxu0 0.0
    %225 = vmatpush1.msra.mxu0 %v199
    %226 = vmatprep.subr.mxu0 0.0
    %227 = vmatpush1.msra.mxu0 %v200
    %228 = vmatprep.subr.mxu0 0.0
    %229 = vmatpush1.msra.mxu0 %v201
    %230 = vmatprep.subr.mxu0 0.0
    %231 = vmatpush1.msra.mxu0 %v202
    %232 = vmatprep.subr.mxu0 0.0
    %233 = vmatpush1.msra.mxu0 %v203
    %234 = vmatprep.subr.mxu0 0.0
    %235 = vmatpush1.msra.mxu0 %v204
    %236 = vmatprep.subr.mxu0 0.0
    %237 = vmatpush1.msra.mxu0 %v205
    %238 = vmatprep.subr.mxu0 0.0
    %239 = vmatpush1.msra.mxu0 %v206
    %240 = vmatprep.subr.mxu0 0.0
    %241 = vmatpush1.msra.mxu0 %v207
    %242 = vmatprep.subr.mxu0 0.0
    %243 = vmatpush1.msra.mxu0 %v208
    %244 = vmatprep.subr.mxu0 0.0
    %245 = vmatpush1.msra.mxu0 %v209
    %246 = vmatprep.subr.mxu0 0.0
    %247 = vmatpush1.msra.mxu0 %v210
    %248 = vmatprep.subr.mxu0 0.0
    %249 = vmatpush1.msra.mxu0 %v211
    %250 = vmatprep.subr.mxu0 0.0
    %251 = vmatpush1.msra.mxu0 %v212
    %252 = vmatprep.subr.mxu0 0.0
    %253 = vmatpush1.msra.mxu0 0.0
    %254 = vmatprep.subr.mxu0 0.0
    %255 = vmatpush1.msra.mxu0 0.0
    %256 = vmatprep.subr.mxu0 0.0
    %257 = vmatpush1.msra.mxu0 0.0
    %258 = vmatprep.subr.mxu0 0.0
    %259 = vmatpush1.msra.mxu0 0.0
    %260 = vmatprep.subr.mxu0 0.0
    %261 = vmatpush1.msra.mxu0 0.0
    %262 = vmatprep.subr.mxu0 0.0
    %263 = vmatpush1.msra.mxu0 0.0
    %264 = vmatprep.subr.mxu0 0.0
    %265 = vmatpush1.msra.mxu0 0.0
    %266 = vmatprep.subr.mxu0 0.0
    %267 = vmatpush1.msra.mxu0 0.0
    %268 = vmatprep.subr.mxu0 0.0
    %269 = vmatpush1.msra.mxu0 0.0
    %270 = vmatprep.subr.mxu0 0.0
    %271 = vmatpush1.msra.mxu0 0.0
    %272 = vmatprep.subr.mxu0 0.0
    %273 = vmatpush1.msra.mxu0 0.0
    %274 = vmatprep.subr.mxu0 0.0
    %275 = vmatpush1.msra.mxu0 0.0
    %276 = vmatprep.subr.mxu0 0.0
    %277 = vmatpush1.msra.mxu0 0.0
    %278 = vmatprep.subr.mxu0 0.0
    %279 = vmatpush1.msra.mxu0 0.0
    %280 = vmatprep.subr.mxu0 0.0
    %281 = vmatpush1.msra.mxu0 0.0
    %282 = vmatprep.subr.mxu0 0.0
    %283 = vmatpush1.msra.mxu0 0.0
    %284 = vmatprep.mubr.f32.mxu0 0.0
    %285 = vmatmul.mubr.f32.gmra.mrb[0].mxu0 %v189
    %v286 = vpop.f32.mrb[0].mxu0
    %v287 = vadd.f32 %v218, %v286
    %v288 = vpop.f32.mrb[0].mxu0
    %289 = vmatprep.mubr.f32.mxu0 0.0
    %290 = vmatmul.mubr.f32.gmra.mrb[0].mxu0 %v190
    %v291 = vpop.f32.mrb[0].mxu0
    %v292 = vadd.f32 %v218, %v291
    %v293 = vpop.f32.mrb[0].mxu0
    %294 = vmatprep.mubr.f32.mxu0 0.0
    %295 = vmatmul.mubr.f32.gmra.mrb[0].mxu0 %v191
    %v296 = vpop.f32.mrb[0].mxu0
    %v297 = vadd.f32 %v218, %v296
    %v298 = vpop.f32.mrb[0].mxu0
    %299 = vmatprep.mubr.f32.mxu0 0.0
    %300 = vmatmul.mubr.f32.gmra.mrb[0].mxu0 %v192
    %v301 = vpop.f32.mrb[0].mxu0
    %v302 = vadd.f32 %v218, %v301
    %v303 = vpop.f32.mrb[0].mxu0
    %304 = vmatprep.mubr.f32.mxu0 0.0
    %305 = vmatmul.mubr.f32.gmra.mrb[0].mxu0 %v193
    %v306 = vpop.f32.mrb[0].mxu0
    %v307 = vadd.f32 %v218, %v306
    %v308 = vpop.f32.mrb[0].mxu0
    %309 = vmatprep.mubr.f32.mxu0 0.0
    %310 = vmatmul.mubr.f32.gmra.mrb[0].mxu0 %v194
    %v311 = vpop.f32.mrb[0].mxu0
    %v312 = vadd.f32 %v218, %v311
    %v313 = vpop.f32.mrb[0].mxu0
    %314 = vmatprep.mubr.f32.mxu0 0.0
    %315 = vmatmul.mubr.f32.gmra.mrb[0].mxu0 %v195
    %v316 = vpop.f32.mrb[0].mxu0
    %v317 = vadd.f32 %v218, %v316
    %v318 = vpop.f32.mrb[0].mxu0
    %319 = vmatprep.mubr.f32.mxu0 0.0
    %320 = vmatmul.mubr.f32.gmra.mrb[0].mxu0 %v196
    %v321 = vpop.f32.mrb[0].mxu0
    %v322 = vadd.f32 %v218, %v321
    %v323 = vpop.f32.mrb[0].mxu0
    %324 = vdwg.mxu0
    %325 = vst [vmem:[#allocation5] sm:$0xff] %v287
    %326 = vst [vmem:[#allocation5 + $0x8] sm:$0xff] %v292
    %327 = vst [vmem:[#allocation5 + $0x10] sm:$0xff] %v297
    %328 = vst [vmem:[#allocation5 + $0x18] sm:$0xff] %v302
    %329 = vst [vmem:[#allocation5 + $0x20] sm:$0xff] %v307
    %330 = vst [vmem:[#allocation5 + $0x28] sm:$0xff] %v312
    %331 = vst [vmem:[#allocation5 + $0x30] sm:$0xff] %v317
    %332 = vst [vmem:[#allocation5 + $0x38] sm:$0xff] %v322
    %v333 = vld [vmem:[#allocation4] sm:$0xff]
    %v334 = vld [vmem:[#allocation5] sm:$0xff]
    %v335 = vld [vmem:[#allocation3] sm:$0xff]
    %v336 = vld [vmem:[#allocation3 + $0x8] sm:$0xff]
    %v337 = vld [vmem:[#allocation3 + $0x10] sm:$0xff]
    %v338 = vld [vmem:[#allocation3 + $0x18] sm:$0xff]
    %v339 = vld [vmem:[#allocation3 + $0x20] sm:$0xff]
    %v340 = vld [vmem:[#allocation3 + $0x28] sm:$0xff]
    %v341 = vld [vmem:[#allocation3 + $0x30] sm:$0xff]
    %v342 = vld [vmem:[#allocation3 + $0x38] sm:$0xff]
    %v343 = vld [vmem:[#allocation3 + $0x40] sm:$0xff]
    %v344 = vld [vmem:[#allocation3 + $0x48] sm:$0xff]
    %v345 = vld [vmem:[#allocation3 + $0x50] sm:$0xff]
    %v346 = vld [vmem:[#allocation3 + $0x58] sm:$0xff]
    %v347 = vld [vmem:[#allocation3 + $0x60] sm:$0xff]
    %v348 = vld [vmem:[#allocation3 + $0x68] sm:$0xff]
    %v349 = vld [vmem:[#allocation3 + $0x70] sm:$0xff]
    %v350 = vld [vmem:[#allocation3 + $0x78] sm:$0xff]
    %351 = vmatprep.subr.mxu0 0.0
    %352 = vmatpush1.msra.mxu0 %v335
    %353 = vmatprep.subr.mxu0 0.0
    %354 = vmatpush1.msra.mxu0 %v336
    %355 = vmatprep.subr.mxu0 0.0
    %356 = vmatpush1.msra.mxu0 %v337
    %357 = vmatprep.subr.mxu0 0.0
    %358 = vmatpush1.msra.mxu0 %v338
    %359 = vmatprep.subr.mxu0 0.0
    %360 = vmatpush1.msra.mxu0 %v339
    %361 = vmatprep.subr.mxu0 0.0
    %362 = vmatpush1.msra.mxu0 %v340
    %363 = vmatprep.subr.mxu0 0.0
    %364 = vmatpush1.msra.mxu0 %v341
    %365 = vmatprep.subr.mxu0 0.0
    %366 = vmatpush1.msra.mxu0 %v342
    %367 = vmatprep.subr.mxu0 0.0
    %368 = vmatpush1.msra.mxu0 %v343
    %369 = vmatprep.subr.mxu0 0.0
    %370 = vmatpush1.msra.mxu0 %v344
    %371 = vmatprep.subr.mxu0 0.0
    %372 = vmatpush1.msra.mxu0 %v345
    %373 = vmatprep.subr.mxu0 0.0
    %374 = vmatpush1.msra.mxu0 %v346
    %375 = vmatprep.subr.mxu0 0.0
    %376 = vmatpush1.msra.mxu0 %v347
    %377 = vmatprep.subr.mxu0 0.0
    %378 = vmatpush1.msra.mxu0 %v348
    %379 = vmatprep.subr.mxu0 0.0
    %380 = vmatpush1.msra.mxu0 %v349
    %381 = vmatprep.subr.mxu0 0.0
    %382 = vmatpush1.msra.mxu0 %v350
    %383 = vmatprep.subr.mxu0 0.0
    %384 = vmatpush1.msra.mxu0 0.0
    %385 = vmatprep.subr.mxu0 0.0
    %386 = vmatpush1.msra.mxu0 0.0
    %387 = vmatprep.subr.mxu0 0.0
    %388 = vmatpush1.msra.mxu0 0.0
    %389 = vmatprep.subr.mxu0 0.0
    %390 = vmatpush1.msra.mxu0 0.0
    %391 = vmatprep.subr.mxu0 0.0
    %392 = vmatpush1.msra.mxu0 0.0
    %393 = vmatprep.subr.mxu0 0.0
    %394 = vmatpush1.msra.mxu0 0.0
    %395 = vmatprep.subr.mxu0 0.0
    %396 = vmatpush1.msra.mxu0 0.0
    %397 = vmatprep.subr.mxu0 0.0
    %398 = vmatpush1.msra.mxu0 0.0
    %399 = vmatprep.subr.mxu0 0.0
    %400 = vmatpush1.msra.mxu0 0.0
    %401 = vmatprep.subr.mxu0 0.0
    %402 = vmatpush1.msra.mxu0 0.0
    %403 = vmatprep.subr.mxu0 0.0
    %404 = vmatpush1.msra.mxu0 0.0
    %405 = vmatprep.subr.mxu0 0.0
    %406 = vmatpush1.msra.mxu0 0.0
    %407 = vmatprep.subr.mxu0 0.0
    %408 = vmatpush1.msra.mxu0 0.0
    %409 = vmatprep.subr.mxu0 0.0
    %410 = vmatpush1.msra.mxu0 0.0
    %411 = vmatprep.subr.mxu0 0.0
    %412 = vmatpush1.msra.mxu0 0.0
    %413 = vmatprep.subr.mxu0 0.0
    %414 = vmatpush1.msra.mxu0 0.0
    %415 = vmatprep.mubr.f32.mxu0 0.0
    %416 = vmatmul.mubr.f32.gmra.mrb[0].mxu0 %v333
    %v417 = vpop.f32.mrb[0].mxu0
    %v418 = vadd.f32 0.0, %v417
    %v419 = vpop.f32.mrb[0].mxu0
    %420 = vdwg.mxu0
    %v421 = vadd.f32 %v334, %v418
    %v422 = vmax.f32 %v421, 0.0
    %s423 = scalar_lea.vmem [#allocation5], 8
    %v424 = vld [vmem:[%s423] sm:$0xff]
    %425 = vmatprep.subr.mxu0 0.0
    %426 = vmatpush1.msra.mxu0 %v335
    %427 = vmatprep.subr.mxu0 0.0
    %428 = vmatpush1.msra.mxu0 %v336
    %429 = vmatprep.subr.mxu0 0.0
    %430 = vmatpush1.msra.mxu0 %v337
    %431 = vmatprep.subr.mxu0 0.0
    %432 = vmatpush1.msra.mxu0 %v338
    %433 = vmatprep.subr.mxu0 0.0
    %434 = vmatpush1.msra.mxu0 %v339
    %435 = vmatprep.subr.mxu0 0.0
    %436 = vmatpush1.msra.mxu0 %v340
    %437 = vmatprep.subr.mxu0 0.0
    %438 = vmatpush1.msra.mxu0 %v341
    %439 = vmatprep.subr.mxu0 0.0
    %440 = vmatpush1.msra.mxu0 %v342
    %441 = vmatprep.subr.mxu0 0.0
    %442 = vmatpush1.msra.mxu0 %v343
    %443 = vmatprep.subr.mxu0 0.0
    %444 = vmatpush1.msra.mxu0 %v344
    %445 = vmatprep.subr.mxu0 0.0
    %446 = vmatpush1.msra.mxu0 %v345
    %447 = vmatprep.subr.mxu0 0.0
    %448 = vmatpush1.msra.mxu0 %v346
    %449 = vmatprep.subr.mxu0 0.0
    %450 = vmatpush1.msra.mxu0 %v347
    %451 = vmatprep.subr.mxu0 0.0
    %452 = vmatpush1.msra.mxu0 %v348
    %453 = vmatprep.subr.mxu0 0.0
    %454 = vmatpush1.msra.mxu0 %v349
    %455 = vmatprep.subr.mxu0 0.0
    %456 = vmatpush1.msra.mxu0 %v350
    %457 = vmatprep.subr.mxu0 0.0
    %458 = vmatpush1.msra.mxu0 0.0
    %459 = vmatprep.subr.mxu0 0.0
    %460 = vmatpush1.msra.mxu0 0.0
    %461 = vmatprep.subr.mxu0 0.0
    %462 = vmatpush1.msra.mxu0 0.0
    %463 = vmatprep.subr.mxu0 0.0
    %464 = vmatpush1.msra.mxu0 0.0
    %465 = vmatprep.subr.mxu0 0.0
    %466 = vmatpush1.msra.mxu0 0.0
    %467 = vmatprep.subr.mxu0 0.0
    %468 = vmatpush1.msra.mxu0 0.0
    %469 = vmatprep.subr.mxu0 0.0
    %470 = vmatpush1.msra.mxu0 0.0
    %471 = vmatprep.subr.mxu0 0.0
    %472 = vmatpush1.msra.mxu0 0.0
    %473 = vmatprep.subr.mxu0 0.0
    %474 = vmatpush1.msra.mxu0 0.0
    %475 = vmatprep.subr.mxu0 0.0
    %476 = vmatpush1.msra.mxu0 0.0
    %477 = vmatprep.subr.mxu0 0.0
    %478 = vmatpush1.msra.mxu0 0.0
    %479 = vmatprep.subr.mxu0 0.0
    %480 = vmatpush1.msra.mxu0 0.0
    %481 = vmatprep.subr.mxu0 0.0
    %482 = vmatpush1.msra.mxu0 0.0
    %483 = vmatprep.subr.mxu0 0.0
    %484 = vmatpush1.msra.mxu0 0.0
    %485 = vmatprep.subr.mxu0 0.0
    %486 = vmatpush1.msra.mxu0 0.0
    %487 = vmatprep.subr.mxu0 0.0
    %488 = vmatpush1.msra.mxu0 0.0
    %489 = vmatprep.mubr.f32.mxu0 0.0
    %490 = vmatmul.mubr.f32.gmra.mrb[0].mxu0 %v422
    %v491 = vpop.f32.mrb[0].mxu0
    %v492 = vadd.f32 0.0, %v491
    %v493 = vpop.f32.mrb[0].mxu0
    %494 = vdwg.mxu0
    %v495 = vadd.f32 %v424, %v492
    %v496 = vmax.f32 %v495, 0.0
    %s497 = scalar_lea.vmem [#allocation5], 16
    %v498 = vld [vmem:[%s497] sm:$0xff]
    %499 = vmatprep.subr.mxu0 0.0
    %500 = vmatpush1.msra.mxu0 %v335
    %501 = vmatprep.subr.mxu0 0.0
    %502 = vmatpush1.msra.mxu0 %v336
    %503 = vmatprep.subr.mxu0 0.0
    %504 = vmatpush1.msra.mxu0 %v337
    %505 = vmatprep.subr.mxu0 0.0
    %506 = vmatpush1.msra.mxu0 %v338
    %507 = vmatprep.subr.mxu0 0.0
    %508 = vmatpush1.msra.mxu0 %v339
    %509 = vmatprep.subr.mxu0 0.0
    %510 = vmatpush1.msra.mxu0 %v340
    %511 = vmatprep.subr.mxu0 0.0
    %512 = vmatpush1.msra.mxu0 %v341
    %513 = vmatprep.subr.mxu0 0.0
    %514 = vmatpush1.msra.mxu0 %v342
    %515 = vmatprep.subr.mxu0 0.0
    %516 = vmatpush1.msra.mxu0 %v343
    %517 = vmatprep.subr.mxu0 0.0
    %518 = vmatpush1.msra.mxu0 %v344
    %519 = vmatprep.subr.mxu0 0.0
    %520 = vmatpush1.msra.mxu0 %v345
    %521 = vmatprep.subr.mxu0 0.0
    %522 = vmatpush1.msra.mxu0 %v346
    %523 = vmatprep.subr.mxu0 0.0
    %524 = vmatpush1.msra.mxu0 %v347
    %525 = vmatprep.subr.mxu0 0.0
    %526 = vmatpush1.msra.mxu0 %v348
    %527 = vmatprep.subr.mxu0 0.0
    %528 = vmatpush1.msra.mxu0 %v349
    %529 = vmatprep.subr.mxu0 0.0
    %530 = vmatpush1.msra.mxu0 %v350
    %531 = vmatprep.subr.mxu0 0.0
    %532 = vmatpush1.msra.mxu0 0.0
    %533 = vmatprep.subr.mxu0 0.0
    %534 = vmatpush1.msra.mxu0 0.0
    %535 = vmatprep.subr.mxu0 0.0
    %536 = vmatpush1.msra.mxu0 0.0
    %537 = vmatprep.subr.mxu0 0.0
    %538 = vmatpush1.msra.mxu0 0.0
    %539 = vmatprep.subr.mxu0 0.0
    %540 = vmatpush1.msra.mxu0 0.0
    %541 = vmatprep.subr.mxu0 0.0
    %542 = vmatpush1.msra.mxu0 0.0
    %543 = vmatprep.subr.mxu0 0.0
    %544 = vmatpush1.msra.mxu0 0.0
    %545 = vmatprep.subr.mxu0 0.0
    %546 = vmatpush1.msra.mxu0 0.0
    %547 = vmatprep.subr.mxu0 0.0
    %548 = vmatpush1.msra.mxu0 0.0
    %549 = vmatprep.subr.mxu0 0.0
    %550 = vmatpush1.msra.mxu0 0.0
    %551 = vmatprep.subr.mxu0 0.0
    %552 = vmatpush1.msra.mxu0 0.0
    %553 = vmatprep.subr.mxu0 0.0
    %554 = vmatpush1.msra.mxu0 0.0
    %555 = vmatprep.subr.mxu0 0.0
    %556 = vmatpush1.msra.mxu0 0.0
    %557 = vmatprep.subr.mxu0 0.0
    %558 = vmatpush1.msra.mxu0 0.0
    %559 = vmatprep.subr.mxu0 0.0
    %560 = vmatpush1.msra.mxu0 0.0
    %561 = vmatprep.subr.mxu0 0.0
    %562 = vmatpush1.msra.mxu0 0.0
    %563 = vmatprep.mubr.f32.mxu0 0.0
    %564 = vmatmul.mubr.f32.gmra.mrb[0].mxu0 %v496
    %v565 = vpop.f32.mrb[0].mxu0
    %v566 = vadd.f32 0.0, %v565
    %v567 = vpop.f32.mrb[0].mxu0
    %568 = vdwg.mxu0
    %v569 = vadd.f32 %v498, %v566
    %v570 = vmax.f32 %v569, 0.0
    %s571 = scalar_lea.vmem [#allocation5], 24
    %v572 = vld [vmem:[%s571] sm:$0xff]
    %573 = vmatprep.subr.mxu0 0.0
    %574 = vmatpush1.msra.mxu0 %v335
    %575 = vmatprep.subr.mxu0 0.0
    %576 = vmatpush1.msra.mxu0 %v336
    %577 = vmatprep.subr.mxu0 0.0
    %578 = vmatpush1.msra.mxu0 %v337
    %579 = vmatprep.subr.mxu0 0.0
    %580 = vmatpush1.msra.mxu0 %v338
    %581 = vmatprep.subr.mxu0 0.0
    %582 = vmatpush1.msra.mxu0 %v339
    %583 = vmatprep.subr.mxu0 0.0
    %584 = vmatpush1.msra.mxu0 %v340
    %585 = vmatprep.subr.mxu0 0.0
    %586 = vmatpush1.msra.mxu0 %v341
    %587 = vmatprep.subr.mxu0 0.0
    %588 = vmatpush1.msra.mxu0 %v342
    %589 = vmatprep.subr.mxu0 0.0
    %590 = vmatpush1.msra.mxu0 %v343
    %591 = vmatprep.subr.mxu0 0.0
    %592 = vmatpush1.msra.mxu0 %v344
    %593 = vmatprep.subr.mxu0 0.0
    %594 = vmatpush1.msra.mxu0 %v345
    %595 = vmatprep.subr.mxu0 0.0
    %596 = vmatpush1.msra.mxu0 %v346
    %597 = vmatprep.subr.mxu0 0.0
    %598 = vmatpush1.msra.mxu0 %v347
    %599 = vmatprep.subr.mxu0 0.0
    %600 = vmatpush1.msra.mxu0 %v348
    %601 = vmatprep.subr.mxu0 0.0
    %602 = vmatpush1.msra.mxu0 %v349
    %603 = vmatprep.subr.mxu0 0.0
    %604 = vmatpush1.msra.mxu0 %v350
    %605 = vmatprep.subr.mxu0 0.0
    %606 = vmatpush1.msra.mxu0 0.0
    %607 = vmatprep.subr.mxu0 0.0
    %608 = vmatpush1.msra.mxu0 0.0
    %609 = vmatprep.subr.mxu0 0.0
    %610 = vmatpush1.msra.mxu0 0.0
    %611 = vmatprep.subr.mxu0 0.0
    %612 = vmatpush1.msra.mxu0 0.0
    %613 = vmatprep.subr.mxu0 0.0
    %614 = vmatpush1.msra.mxu0 0.0
    %615 = vmatprep.subr.mxu0 0.0
    %616 = vmatpush1.msra.mxu0 0.0
    %617 = vmatprep.subr.mxu0 0.0
    %618 = vmatpush1.msra.mxu0 0.0
    %619 = vmatprep.subr.mxu0 0.0
    %620 = vmatpush1.msra.mxu0 0.0
    %621 = vmatprep.subr.mxu0 0.0
    %622 = vmatpush1.msra.mxu0 0.0
    %623 = vmatprep.subr.mxu0 0.0
    %624 = vmatpush1.msra.mxu0 0.0
    %625 = vmatprep.subr.mxu0 0.0
    %626 = vmatpush1.msra.mxu0 0.0
    %627 = vmatprep.subr.mxu0 0.0
    %628 = vmatpush1.msra.mxu0 0.0
    %629 = vmatprep.subr.mxu0 0.0
    %630 = vmatpush1.msra.mxu0 0.0
    %631 = vmatprep.subr.mxu0 0.0
    %632 = vmatpush1.msra.mxu0 0.0
    %633 = vmatprep.subr.mxu0 0.0
    %634 = vmatpush1.msra.mxu0 0.0
    %635 = vmatprep.subr.mxu0 0.0
    %636 = vmatpush1.msra.mxu0 0.0
    %637 = vmatprep.mubr.f32.mxu0 0.0
    %638 = vmatmul.mubr.f32.gmra.mrb[0].mxu0 %v570
    %v639 = vpop.f32.mrb[0].mxu0
    %v640 = vadd.f32 0.0, %v639
    %v641 = vpop.f32.mrb[0].mxu0
    %642 = vdwg.mxu0
    %v643 = vadd.f32 %v572, %v640
    %v644 = vmax.f32 %v643, 0.0
    %s645 = scalar_lea.vmem [#allocation5], 32
    %v646 = vld [vmem:[%s645] sm:$0xff]
    %647 = vmatprep.subr.mxu0 0.0
    %648 = vmatpush1.msra.mxu0 %v335
    %649 = vmatprep.subr.mxu0 0.0
    %650 = vmatpush1.msra.mxu0 %v336
    %651 = vmatprep.subr.mxu0 0.0
    %652 = vmatpush1.msra.mxu0 %v337
    %653 = vmatprep.subr.mxu0 0.0
    %654 = vmatpush1.msra.mxu0 %v338
    %655 = vmatprep.subr.mxu0 0.0
    %656 = vmatpush1.msra.mxu0 %v339
    %657 = vmatprep.subr.mxu0 0.0
    %658 = vmatpush1.msra.mxu0 %v340
    %659 = vmatprep.subr.mxu0 0.0
    %660 = vmatpush1.msra.mxu0 %v341
    %661 = vmatprep.subr.mxu0 0.0
    %662 = vmatpush1.msra.mxu0 %v342
    %663 = vmatprep.subr.mxu0 0.0
    %664 = vmatpush1.msra.mxu0 %v343
    %665 = vmatprep.subr.mxu0 0.0
    %666 = vmatpush1.msra.mxu0 %v344
    %667 = vmatprep.subr.mxu0 0.0
    %668 = vmatpush1.msra.mxu0 %v345
    %669 = vmatprep.subr.mxu0 0.0
    %670 = vmatpush1.msra.mxu0 %v346
    %671 = vmatprep.subr.mxu0 0.0
    %672 = vmatpush1.msra.mxu0 %v347
    %673 = vmatprep.subr.mxu0 0.0
    %674 = vmatpush1.msra.mxu0 %v348
    %675 = vmatprep.subr.mxu0 0.0
    %676 = vmatpush1.msra.mxu0 %v349
    %677 = vmatprep.subr.mxu0 0.0
    %678 = vmatpush1.msra.mxu0 %v350
    %679 = vmatprep.subr.mxu0 0.0
    %680 = vmatpush1.msra.mxu0 0.0
    %681 = vmatprep.subr.mxu0 0.0
    %682 = vmatpush1.msra.mxu0 0.0
    %683 = vmatprep.subr.mxu0 0.0
    %684 = vmatpush1.msra.mxu0 0.0
    %685 = vmatprep.subr.mxu0 0.0
    %686 = vmatpush1.msra.mxu0 0.0
    %687 = vmatprep.subr.mxu0 0.0
    %688 = vmatpush1.msra.mxu0 0.0
    %689 = vmatprep.subr.mxu0 0.0
    %690 = vmatpush1.msra.mxu0 0.0
    %691 = vmatprep.subr.mxu0 0.0
    %692 = vmatpush1.msra.mxu0 0.0
    %693 = vmatprep.subr.mxu0 0.0
    %694 = vmatpush1.msra.mxu0 0.0
    %695 = vmatprep.subr.mxu0 0.0
    %696 = vmatpush1.msra.mxu0 0.0
    %697 = vmatprep.subr.mxu0 0.0
    %698 = vmatpush1.msra.mxu0 0.0
    %699 = vmatprep.subr.mxu0 0.0
    %700 = vmatpush1.msra.mxu0 0.0
    %701 = vmatprep.subr.mxu0 0.0
    %702 = vmatpush1.msra.mxu0 0.0
    %703 = vmatprep.subr.mxu0 0.0
    %704 = vmatpush1.msra.mxu0 0.0
    %705 = vmatprep.subr.mxu0 0.0
    %706 = vmatpush1.msra.mxu0 0.0
    %707 = vmatprep.subr.mxu0 0.0
    %708 = vmatpush1.msra.mxu0 0.0
    %709 = vmatprep.subr.mxu0 0.0
    %710 = vmatpush1.msra.mxu0 0.0
    %711 = vmatprep.mubr.f32.mxu0 0.0
    %712 = vmatmul.mubr.f32.gmra.mrb[0].mxu0 %v644
    %v713 = vpop.f32.mrb[0].mxu0
    %v714 = vadd.f32 0.0, %v713
    %v715 = vpop.f32.mrb[0].mxu0
    %716 = vdwg.mxu0
    %v717 = vadd.f32 %v646, %v714
    %v718 = vmax.f32 %v717, 0.0
    %s719 = scalar_lea.vmem [#allocation5], 40
    %v720 = vld [vmem:[%s719] sm:$0xff]
    %721 = vmatprep.subr.mxu0 0.0
    %722 = vmatpush1.msra.mxu0 %v335
    %723 = vmatprep.subr.mxu0 0.0
    %724 = vmatpush1.msra.mxu0 %v336
    %725 = vmatprep.subr.mxu0 0.0
    %726 = vmatpush1.msra.mxu0 %v337
    %727 = vmatprep.subr.mxu0 0.0
    %728 = vmatpush1.msra.mxu0 %v338
    %729 = vmatprep.subr.mxu0 0.0
    %730 = vmatpush1.msra.mxu0 %v339
    %731 = vmatprep.subr.mxu0 0.0
    %732 = vmatpush1.msra.mxu0 %v340
    %733 = vmatprep.subr.mxu0 0.0
    %734 = vmatpush1.msra.mxu0 %v341
    %735 = vmatprep.subr.mxu0 0.0
    %736 = vmatpush1.msra.mxu0 %v342
    %737 = vmatprep.subr.mxu0 0.0
    %738 = vmatpush1.msra.mxu0 %v343
    %739 = vmatprep.subr.mxu0 0.0
    %740 = vmatpush1.msra.mxu0 %v344
    %741 = vmatprep.subr.mxu0 0.0
    %742 = vmatpush1.msra.mxu0 %v345
    %743 = vmatprep.subr.mxu0 0.0
    %744 = vmatpush1.msra.mxu0 %v346
    %745 = vmatprep.subr.mxu0 0.0
    %746 = vmatpush1.msra.mxu0 %v347
    %747 = vmatprep.subr.mxu0 0.0
    %748 = vmatpush1.msra.mxu0 %v348
    %749 = vmatprep.subr.mxu0 0.0
    %750 = vmatpush1.msra.mxu0 %v349
    %751 = vmatprep.subr.mxu0 0.0
    %752 = vmatpush1.msra.mxu0 %v350
    %753 = vmatprep.subr.mxu0 0.0
    %754 = vmatpush1.msra.mxu0 0.0
    %755 = vmatprep.subr.mxu0 0.0
    %756 = vmatpush1.msra.mxu0 0.0
    %757 = vmatprep.subr.mxu0 0.0
    %758 = vmatpush1.msra.mxu0 0.0
    %759 = vmatprep.subr.mxu0 0.0
    %760 = vmatpush1.msra.mxu0 0.0
    %761 = vmatprep.subr.mxu0 0.0
    %762 = vmatpush1.msra.mxu0 0.0
    %763 = vmatprep.subr.mxu0 0.0
    %764 = vmatpush1.msra.mxu0 0.0
    %765 = vmatprep.subr.mxu0 0.0
    %766 = vmatpush1.msra.mxu0 0.0
    %767 = vmatprep.subr.mxu0 0.0
    %768 = vmatpush1.msra.mxu0 0.0
    %769 = vmatprep.subr.mxu0 0.0
    %770 = vmatpush1.msra.mxu0 0.0
    %771 = vmatprep.subr.mxu0 0.0
    %772 = vmatpush1.msra.mxu0 0.0
    %773 = vmatprep.subr.mxu0 0.0
    %774 = vmatpush1.msra.mxu0 0.0
    %775 = vmatprep.subr.mxu0 0.0
    %776 = vmatpush1.msra.mxu0 0.0
    %777 = vmatprep.subr.mxu0 0.0
    %778 = vmatpush1.msra.mxu0 0.0
    %779 = vmatprep.subr.mxu0 0.0
    %780 = vmatpush1.msra.mxu0 0.0
    %781 = vmatprep.subr.mxu0 0.0
    %782 = vmatpush1.msra.mxu0 0.0
    %783 = vmatprep.subr.mxu0 0.0
    %784 = vmatpush1.msra.mxu0 0.0
    %785 = vmatprep.mubr.f32.mxu0 0.0
    %786 = vmatmul.mubr.f32.gmra.mrb[0].mxu0 %v718
    %v787 = vpop.f32.mrb[0].mxu0
    %v788 = vadd.f32 0.0, %v787
    %v789 = vpop.f32.mrb[0].mxu0
    %790 = vdwg.mxu0
    %v791 = vadd.f32 %v720, %v788
    %v792 = vmax.f32 %v791, 0.0
    %s793 = scalar_lea.vmem [#allocation5], 48
    %v794 = vld [vmem:[%s793] sm:$0xff]
    %795 = vmatprep.subr.mxu0 0.0
    %796 = vmatpush1.msra.mxu0 %v335
    %797 = vmatprep.subr.mxu0 0.0
    %798 = vmatpush1.msra.mxu0 %v336
    %799 = vmatprep.subr.mxu0 0.0
    %800 = vmatpush1.msra.mxu0 %v337
    %801 = vmatprep.subr.mxu0 0.0
    %802 = vmatpush1.msra.mxu0 %v338
    %803 = vmatprep.subr.mxu0 0.0
    %804 = vmatpush1.msra.mxu0 %v339
    %805 = vmatprep.subr.mxu0 0.0
    %806 = vmatpush1.msra.mxu0 %v340
    %807 = vmatprep.subr.mxu0 0.0
    %808 = vmatpush1.msra.mxu0 %v341
    %809 = vmatprep.subr.mxu0 0.0
    %810 = vmatpush1.msra.mxu0 %v342
    %811 = vmatprep.subr.mxu0 0.0
    %812 = vmatpush1.msra.mxu0 %v343
    %813 = vmatprep.subr.mxu0 0.0
    %814 = vmatpush1.msra.mxu0 %v344
    %815 = vmatprep.subr.mxu0 0.0
    %816 = vmatpush1.msra.mxu0 %v345
    %817 = vmatprep.subr.mxu0 0.0
    %818 = vmatpush1.msra.mxu0 %v346
    %819 = vmatprep.subr.mxu0 0.0
    %820 = vmatpush1.msra.mxu0 %v347
    %821 = vmatprep.subr.mxu0 0.0
    %822 = vmatpush1.msra.mxu0 %v348
    %823 = vmatprep.subr.mxu0 0.0
    %824 = vmatpush1.msra.mxu0 %v349
    %825 = vmatprep.subr.mxu0 0.0
    %826 = vmatpush1.msra.mxu0 %v350
    %827 = vmatprep.subr.mxu0 0.0
    %828 = vmatpush1.msra.mxu0 0.0
    %829 = vmatprep.subr.mxu0 0.0
    %830 = vmatpush1.msra.mxu0 0.0
    %831 = vmatprep.subr.mxu0 0.0
    %832 = vmatpush1.msra.mxu0 0.0
    %833 = vmatprep.subr.mxu0 0.0
    %834 = vmatpush1.msra.mxu0 0.0
    %835 = vmatprep.subr.mxu0 0.0
    %836 = vmatpush1.msra.mxu0 0.0
    %837 = vmatprep.subr.mxu0 0.0
    %838 = vmatpush1.msra.mxu0 0.0
    %839 = vmatprep.subr.mxu0 0.0
    %840 = vmatpush1.msra.mxu0 0.0
    %841 = vmatprep.subr.mxu0 0.0
    %842 = vmatpush1.msra.mxu0 0.0
    %843 = vmatprep.subr.mxu0 0.0
    %844 = vmatpush1.msra.mxu0 0.0
    %845 = vmatprep.subr.mxu0 0.0
    %846 = vmatpush1.msra.mxu0 0.0
    %847 = vmatprep.subr.mxu0 0.0
    %848 = vmatpush1.msra.mxu0 0.0
    %849 = vmatprep.subr.mxu0 0.0
    %850 = vmatpush1.msra.mxu0 0.0
    %851 = vmatprep.subr.mxu0 0.0
    %852 = vmatpush1.msra.mxu0 0.0
    %853 = vmatprep.subr.mxu0 0.0
    %854 = vmatpush1.msra.mxu0 0.0
    %855 = vmatprep.subr.mxu0 0.0
    %856 = vmatpush1.msra.mxu0 0.0
    %857 = vmatprep.subr.mxu0 0.0
    %858 = vmatpush1.msra.mxu0 0.0
    %859 = vmatprep.mubr.f32.mxu0 0.0
    %860 = vmatmul.mubr.f32.gmra.mrb[0].mxu0 %v792
    %v861 = vpop.f32.mrb[0].mxu0
    %v862 = vadd.f32 0.0, %v861
    %v863 = vpop.f32.mrb[0].mxu0
    %864 = vdwg.mxu0
    %v865 = vadd.f32 %v794, %v862
    %v866 = vmax.f32 %v865, 0.0
    %s867 = scalar_lea.vmem [#allocation5], 56
    %v868 = vld [vmem:[%s867] sm:$0xff]
    %869 = vmatprep.subr.mxu0 0.0
    %870 = vmatpush1.msra.mxu0 %v335
    %871 = vmatprep.subr.mxu0 0.0
    %872 = vmatpush1.msra.mxu0 %v336
    %873 = vmatprep.subr.mxu0 0.0
    %874 = vmatpush1.msra.mxu0 %v337
    %875 = vmatprep.subr.mxu0 0.0
    %876 = vmatpush1.msra.mxu0 %v338
    %877 = vmatprep.subr.mxu0 0.0
    %878 = vmatpush1.msra.mxu0 %v339
    %879 = vmatprep.subr.mxu0 0.0
    %880 = vmatpush1.msra.mxu0 %v340
    %881 = vmatprep.subr.mxu0 0.0
    %882 = vmatpush1.msra.mxu0 %v341
    %883 = vmatprep.subr.mxu0 0.0
    %884 = vmatpush1.msra.mxu0 %v342
    %885 = vmatprep.subr.mxu0 0.0
    %886 = vmatpush1.msra.mxu0 %v343
    %887 = vmatprep.subr.mxu0 0.0
    %888 = vmatpush1.msra.mxu0 %v344
    %889 = vmatprep.subr.mxu0 0.0
    %890 = vmatpush1.msra.mxu0 %v345
    %891 = vmatprep.subr.mxu0 0.0
    %892 = vmatpush1.msra.mxu0 %v346
    %893 = vmatprep.subr.mxu0 0.0
    %894 = vmatpush1.msra.mxu0 %v347
    %895 = vmatprep.subr.mxu0 0.0
    %896 = vmatpush1.msra.mxu0 %v348
    %897 = vmatprep.subr.mxu0 0.0
    %898 = vmatpush1.msra.mxu0 %v349
    %899 = vmatprep.subr.mxu0 0.0
    %900 = vmatpush1.msra.mxu0 %v350
    %901 = vmatprep.subr.mxu0 0.0
    %902 = vmatpush1.msra.mxu0 0.0
    %903 = vmatprep.subr.mxu0 0.0
    %904 = vmatpush1.msra.mxu0 0.0
    %905 = vmatprep.subr.mxu0 0.0
    %906 = vmatpush1.msra.mxu0 0.0
    %907 = vmatprep.subr.mxu0 0.0
    %908 = vmatpush1.msra.mxu0 0.0
    %909 = vmatprep.subr.mxu0 0.0
    %910 = vmatpush1.msra.mxu0 0.0
    %911 = vmatprep.subr.mxu0 0.0
    %912 = vmatpush1.msra.mxu0 0.0
    %913 = vmatprep.subr.mxu0 0.0
    %914 = vmatpush1.msra.mxu0 0.0
    %915 = vmatprep.subr.mxu0 0.0
    %916 = vmatpush1.msra.mxu0 0.0
    %917 = vmatprep.subr.mxu0 0.0
    %918 = vmatpush1.msra.mxu0 0.0
    %919 = vmatprep.subr.mxu0 0.0
    %920 = vmatpush1.msra.mxu0 0.0
    %921 = vmatprep.subr.mxu0 0.0
    %922 = vmatpush1.msra.mxu0 0.0
    %923 = vmatprep.subr.mxu0 0.0
    %924 = vmatpush1.msra.mxu0 0.0
    %925 = vmatprep.subr.mxu0 0.0
    %926 = vmatpush1.msra.mxu0 0.0
    %927 = vmatprep.subr.mxu0 0.0
    %928 = vmatpush1.msra.mxu0 0.0
    %929 = vmatprep.subr.mxu0 0.0
    %930 = vmatpush1.msra.mxu0 0.0
    %931 = vmatprep.subr.mxu0 0.0
    %932 = vmatpush1.msra.mxu0 0.0
    %933 = vmatprep.mubr.f32.mxu0 0.0
    %934 = vmatmul.mubr.f32.gmra.mrb[0].mxu0 %v866
    %v935 = vpop.f32.mrb[0].mxu0
    %v936 = vadd.f32 0.0, %v935
    %v937 = vpop.f32.mrb[0].mxu0
    %938 = vdwg.mxu0
    %v939 = vadd.f32 %v868, %v936
    %v940 = vmax.f32 %v939, 0.0
    %941 = vst [vmem:[#allocation4] sm:$0xff] %v940
    // Predicated region
    $region94: #{rnn_model_forward.3} parent=1 // pred_check
      %p942 = pneg %p33
    $region95: #{rnn_model_forward.3} parent=1 // pred_check_branch
      %944 = sbr.rel (%p942) target = $region97
    $region96: #{rnn_model_forward.3} parent=1 // pred_region
      %v945 = vld [vmem:[#allocation4] sm:$0xff]
      %v946 = vld [vmem:[#allocation7] sm:$0xff]
      %v947 = vld [vmem:[#allocation7 + $0x8] sm:$0xff]
      %v948 = vld [vmem:[#allocation7 + $0x10] sm:$0xff]
      %v949 = vld [vmem:[#allocation7 + $0x18] sm:$0xff]
      %v950 = vld [vmem:[#allocation7 + $0x20] sm:$0xff]
      %v951 = vld [vmem:[#allocation7 + $0x28] sm:$0xff]
      %v952 = vld [vmem:[#allocation7 + $0x30] sm:$0xff]
      %v953 = vld [vmem:[#allocation7 + $0x38] sm:$0xff]
      %v954 = vld [vmem:[#allocation7 + $0x40] sm:$0xff]
      %v955 = vld [vmem:[#allocation7 + $0x48] sm:$0xff]
      %v956 = vld [vmem:[#allocation7 + $0x50] sm:$0xff]
      %v957 = vld [vmem:[#allocation7 + $0x58] sm:$0xff]
      %v958 = vld [vmem:[#allocation7 + $0x60] sm:$0xff]
      %v959 = vld [vmem:[#allocation7 + $0x68] sm:$0xff]
      %v960 = vld [vmem:[#allocation7 + $0x70] sm:$0xff]
      %v961 = vld [vmem:[#allocation7 + $0x78] sm:$0xff]
      %v962 = vld [vmem:[%s5] sm:$0x1]
      %v964 = vlaneseq
      %v965 = vshrl.u32 %v964, 7
      %v966 = vsub.s32 0, %v965
      %v967 = vrot.slane %v962, %v966
      %969 = vmatprep.subr.mxu0 0.0
      %970 = vmatpush1.msra.mxu0 %v946
      %971 = vmatprep.subr.mxu0 0.0
      %972 = vmatpush1.msra.mxu0 %v947
      %973 = vmatprep.subr.mxu0 0.0
      %974 = vmatpush1.msra.mxu0 %v948
      %975 = vmatprep.subr.mxu0 0.0
      %976 = vmatpush1.msra.mxu0 %v949
      %977 = vmatprep.subr.mxu0 0.0
      %978 = vmatpush1.msra.mxu0 %v950
      %979 = vmatprep.subr.mxu0 0.0
      %980 = vmatpush1.msra.mxu0 %v951
      %981 = vmatprep.subr.mxu0 0.0
      %982 = vmatpush1.msra.mxu0 %v952
      %983 = vmatprep.subr.mxu0 0.0
      %984 = vmatpush1.msra.mxu0 %v953
      %985 = vmatprep.subr.mxu0 0.0
      %986 = vmatpush1.msra.mxu0 %v954
      %987 = vmatprep.subr.mxu0 0.0
      %988 = vmatpush1.msra.mxu0 %v955
      %989 = vmatprep.subr.mxu0 0.0
      %990 = vmatpush1.msra.mxu0 %v956
      %991 = vmatprep.subr.mxu0 0.0
      %992 = vmatpush1.msra.mxu0 %v957
      %993 = vmatprep.subr.mxu0 0.0
      %994 = vmatpush1.msra.mxu0 %v958
      %995 = vmatprep.subr.mxu0 0.0
      %996 = vmatpush1.msra.mxu0 %v959
      %997 = vmatprep.subr.mxu0 0.0
      %998 = vmatpush1.msra.mxu0 %v960
      %999 = vmatprep.subr.mxu0 0.0
      %1000 = vmatpush1.msra.mxu0 %v961
      %1001 = vmatprep.subr.mxu0 0.0
      %1002 = vmatpush1.msra.mxu0 0.0
      %1003 = vmatprep.subr.mxu0 0.0
      %1004 = vmatpush1.msra.mxu0 0.0
      %1005 = vmatprep.subr.mxu0 0.0
      %1006 = vmatpush1.msra.mxu0 0.0
      %1007 = vmatprep.subr.mxu0 0.0
      %1008 = vmatpush1.msra.mxu0 0.0
      %1009 = vmatprep.subr.mxu0 0.0
      %1010 = vmatpush1.msra.mxu0 0.0
      %1011 = vmatprep.subr.mxu0 0.0
      %1012 = vmatpush1.msra.mxu0 0.0
      %1013 = vmatprep.subr.mxu0 0.0
      %1014 = vmatpush1.msra.mxu0 0.0
      %1015 = vmatprep.subr.mxu0 0.0
      %1016 = vmatpush1.msra.mxu0 0.0
      %1017 = vmatprep.subr.mxu0 0.0
      %1018 = vmatpush1.msra.mxu0 0.0
      %1019 = vmatprep.subr.mxu0 0.0
      %1020 = vmatpush1.msra.mxu0 0.0
      %1021 = vmatprep.subr.mxu0 0.0
      %1022 = vmatpush1.msra.mxu0 0.0
      %1023 = vmatprep.subr.mxu0 0.0
      %1024 = vmatpush1.msra.mxu0 0.0
      %1025 = vmatprep.subr.mxu0 0.0
      %1026 = vmatpush1.msra.mxu0 0.0
      %1027 = vmatprep.subr.mxu0 0.0
      %1028 = vmatpush1.msra.mxu0 0.0
      %1029 = vmatprep.subr.mxu0 0.0
      %1030 = vmatpush1.msra.mxu0 0.0
      %1031 = vmatprep.subr.mxu0 0.0
      %1032 = vmatpush1.msra.mxu0 0.0
      %1033 = vmatprep.mubr.f32.mxu0 0.0
      %1034 = vmatmul.mubr.f32.gmra.mrb[0].mxu0 %v945
      %v1035 = vpop.f32.mrb[0].mxu0
      %v1036 = vadd.f32 %v967, %v1035
      %v1037 = vpop.f32.mrb[0].mxu0
      %1038 = vdwg.mxu0
      %1039 = vst [vmem:[%s6] sm:$0xff] %v1036
    $region97: #{rnn_model_forward.3} parent=1 // pred_fallthru
      _
    // Predicated region
    $region98: #{rnn_model_forward.3} parent=1 // pred_check
      _
    $region99: #{rnn_model_forward.3} parent=1 // pred_check_branch
      %1041 = sbr.rel (0) target = $region101
    $region100: #{rnn_model_forward.3} parent=1 // pred_region
      _
    $region101: #{rnn_model_forward.3} parent=1 // pred_fallthru
      _
    // Predicated region
    $region102: #{rnn_model_forward.3} parent=1 // pred_check
      _
    $region103: #{rnn_model_forward.3} parent=1 // pred_check_branch
      %1043 = sbr.rel (0) target = $region105
    $region104: #{rnn_model_forward.3} parent=1 // pred_region
      _
    $region105: #{rnn_model_forward.3} parent=1 // pred_fallthru
      _
    %1044 = vsyncpa [#allocation8], 1
  %1045 = vsyncmov [#allocation6]
  %s1046 = vpop.sfrf %1045
  %p1047 = scmp.eq.s32.totalorder %s1046, 0
  %p1048 = pneg %p1047
  %1050 = shalt.err (%p1048)
  %s1051 = scalar_lea.sflag [#allocation6], 1
  %1052 = vsyncmov %s1051
  %s1053 = vpop.sfrf %1052
  %p1054 = scmp.eq.s32.totalorder %s1053, 0
  %p1055 = pneg %p1054
  %1057 = shalt.err (%p1055)

// kernel: rnn_model_forward.2
$region0: #{rnn_model_forward.2}
  #allocation0 [shape = 'u32[]', space=smem, size = 0x4, offset = 0x4, fixed_abs, tag = 'smem constant byte address 0x4 - core index']
  #allocation1 [shape = 'u32[144,128]{1,0:T(1,128)}', space=vmem, size = 0x12000, scoped, tag = 'internal scratch']
  #allocation2 [shape = 'f32[4,128]{1,0:T(4,128)}', space=vmem, size = 0x800, scoped, tag = 'scratch operand']
  #allocation3 [shape = 'f32[128,128]{1,0:T(8,128)}', space=vmem, size = 0x10000, scoped, tag = 'scratch operand']
  #allocation4 [shape = 'f32[8,128]{1,0:T(8,128)}', space=vmem, size = 0x1000, scoped, tag = 'scratch operand']
  #allocation5 [shape = 'f32[8,8,128]{2,1,0:T(8,128)}', space=vmem, size = 0x8000, scoped, tag = 'scratch operand']
  #allocation6 [shape = 's32[2]{0}', space=sflag, size = 0x8, scoped, tag = 'scratch operand']
  #allocation7 [shape = 's32[]', space=sflag, size = 0x4, offset = 0, fixed_abs, tag = 'sflag constant byte address 0x0 - dummy sync flag']
  #allocation8 [shape = 's32[]', space=sflag, size = 0x4, offset = 0, fixed_abs, tag = 'sflag constant byte address 0x0 - dummy sync flag']
  #allocation9 [shape = 's32[]', space=sflag, size = 0x4, offset = 0, fixed_abs, tag = 'sflag constant byte address 0x0 - dummy sync flag']
  #allocation10 [shape = 'u32[]', space=smem, size = 0x4, offset = 0x44, fixed_abs, tag = 'smem constant byte address 0x44 - assertion arg 0']
  #allocation11 [shape = 'u32[]', space=smem, size = 0x4, offset = 0x48, fixed_abs, tag = 'smem constant byte address 0x48 - assertion arg 1']
  %s0 = inlined_call_operand.vmem [shape: f32[8,8,4], index: 0, kind: input, shape index: {}]
  %s1 = inlined_call_operand.vmem [shape: f32[4,128], index: 1, kind: input, shape index: {}]
  %s2 = inlined_call_operand.hbm [shape: f32[128,128], index: 2, kind: input, shape index: {}]
  %s3 = inlined_call_operand.vmem [shape: f32[1,128], index: 3, kind: input, shape index: {}]
  %s4 = inlined_call_operand.vmem [shape: f32[8,8,128], index: 4, kind: output, shape index: {}]
  %s5 = sld [smem:[#allocation0]]
  $region56: #{rnn_model_forward.2} parent=0
    _
  %s7 = ssub.s32 1, %s5
  %s8 = scalar_select 0, %s7, %s5
  // Predicated region
  $region2: #{rnn_model_forward.2} parent=0 // pred_check
    _
  $region3: #{rnn_model_forward.2} parent=0 // pred_check_branch
    %10 = sbr.rel (0) target = $region5
  $region4: #{rnn_model_forward.2} parent=0 // pred_region
    _
  $region5: #{rnn_model_forward.2} parent=0 // pred_fallthru
    _
  // Predicated region
  $region6: #{rnn_model_forward.2} parent=0 // pred_check
    _
  $region7: #{rnn_model_forward.2} parent=0 // pred_check_branch
    %12 = sbr.rel (0) target = $region9
  $region8: #{rnn_model_forward.2} parent=0 // pred_region
    _
  $region9: #{rnn_model_forward.2} parent=0 // pred_fallthru
    _
  %p13 = scmp.eq.s32.totalorder 0, 0
  // Predicated region
  $region10: #{rnn_model_forward.2} parent=0 // pred_check
    %p14 = pneg %p13
  $region11: #{rnn_model_forward.2} parent=0 // pred_check_branch
    %16 = sbr.rel (%p14) target = $region13
  $region12: #{rnn_model_forward.2} parent=0 // pred_region
    %p18 = scmp.lt.u32.totalorder 4, 8
    %p19 = pneg %p18
    // Predicated region
    $region14: #{rnn_model_forward.2} parent=12 // pred_check
      _
    $region15: #{rnn_model_forward.2} parent=12 // pred_check_branch
      %21 = sbr.rel (%p18) target = $region17
    $region16: #{rnn_model_forward.2} parent=12 // pred_region
      %s36 = sand.u32 4, 7
      %p37 = scmp.eq.s32.totalorder %s36, 0
      %p38 = pneg %p37
      // Predicated region
      $region29: #{rnn_model_forward.2} parent=16 // pred_check
        _
      $region30: #{rnn_model_forward.2} parent=16 // pred_check_branch
        %40 = sbr.rel (%p37) target = $region32
      $region31: #{rnn_model_forward.2} parent=16 // pred_region
        %s41 = sand.u32 4, 7
        %s42 = ssub.s32 4, %s41
        %s43 = scalar_lea.vmem %s1, %s42
        %s44 = ssub.s32 4, %s41
        %s45 = scalar_lea.vmem [#allocation2], %s44
        %s46 = sshllo.u32 0, %s41
        loop: start=0, step=1, limit=1
        $region33: #{rnn_model_forward.2} parent=31 // loop_pre_header
          _
        $region34: #{rnn_model_forward.2} parent=31 // loop_header
          %s48 = sphi 0, %s52
          %p49 = scmp.ge.s32.totalorder %s48, 1
          %s53 = sphi %s43, %s43
          %s54 = sphi %s45, %s45
        $region35: #{rnn_model_forward.2} parent=31 // loop_header_branch
          %51 = sbr.rel (%p49) target = $region39
        $region36: #{rnn_model_forward.2} parent=31 // loop_body
          %v55 = vld [vmem:[%s53] sm:%s46]
          %56 = vst [vmem:[%s54] sm:%s46] %v55
        $region37: #{rnn_model_forward.2} parent=31 // loop_footer
          %s52 = sadd.s32 1, %s48
        $region38: #{rnn_model_forward.2} parent=31 // loop_footer_branch
          %47 = sbr.rel target = $region34
        $region39: #{rnn_model_forward.2} parent=31 // loop_exit
          _
      $region32: #{rnn_model_forward.2} parent=16 // pred_fallthru
        _
    $region17: #{rnn_model_forward.2} parent=12 // pred_fallthru
      _
    // Predicated region
    $region18: #{rnn_model_forward.2} parent=12 // pred_check
      %p22 = pneg %p18
    $region19: #{rnn_model_forward.2} parent=12 // pred_check_branch
      %24 = sbr.rel (%p22) target = $region21
    $region20: #{rnn_model_forward.2} parent=12 // pred_region
      %s25 = sshllo.u32 0, 4
      loop: start=0, step=1, limit=1
      $region22: #{rnn_model_forward.2} parent=20 // loop_pre_header
        _
      $region23: #{rnn_model_forward.2} parent=20 // loop_header
        %s27 = sphi 0, %s31
        %p28 = scmp.ge.s32.totalorder %s27, 1
        %s32 = sphi %s1, %s1
        %s33 = sphi [#allocation2], [#allocation2]
      $region24: #{rnn_model_forward.2} parent=20 // loop_header_branch
        %30 = sbr.rel (%p28) target = $region28
      $region25: #{rnn_model_forward.2} parent=20 // loop_body
        %v34 = vld [vmem:[%s32] sm:%s25]
        %35 = vst [vmem:[%s33] sm:%s25] %v34
      $region26: #{rnn_model_forward.2} parent=20 // loop_footer
        %s31 = sadd.s32 1, %s27
      $region27: #{rnn_model_forward.2} parent=20 // loop_footer_branch
        %26 = sbr.rel target = $region23
      $region28: #{rnn_model_forward.2} parent=20 // loop_exit
        _
    $region21: #{rnn_model_forward.2} parent=12 // pred_fallthru
      _
    // Predicated region
    $region40: #{rnn_model_forward.2} parent=12 // pred_check
      _
    $region41: #{rnn_model_forward.2} parent=12 // pred_check_branch
      %59 = sbr.rel (0) target = $region43
    $region42: #{rnn_model_forward.2} parent=12 // pred_region
      %60 = vsyncadd [#allocation6], 64
    $region43: #{rnn_model_forward.2} parent=12 // pred_fallthru
      _
    %s61 = scalar_lea.sflag [#allocation6], 1
    // Predicated region
    $region44: #{rnn_model_forward.2} parent=12 // pred_check
      _
    $region45: #{rnn_model_forward.2} parent=12 // pred_check_branch
      %63 = sbr.rel target = $region47
    $region46: #{rnn_model_forward.2} parent=12 // pred_region
      %64 = sst [smem:[#allocation10]] [#allocation9]
      %65 = sst [smem:[#allocation11]] [#allocation8]
    $region47: #{rnn_model_forward.2} parent=12 // pred_fallthru
      _
    %67 = shalt.err (0)
    %s69 = sshll.u32 [#allocation3], 4
    %s70 = int_to_ptr.vmem [resolvable:$true] %s69
    %72 = dma.hbm_to_vmem [thread:$0]  %s2, 2048, %s70, %s61
    %s73 = smul.u32 4, 1
    %s74 = sshll.u32 %s73, 4
    %75 = dma.done [#allocation6], %s74
    %s76 = smul.u32 128, 1
    %s77 = sshll.u32 %s76, 4
    %78 = dma.done %s61, %s77
    %79 = vst [vmem:[#allocation4] sm:$0xff] 0.0
  $region13: #{rnn_model_forward.2} parent=0 // pred_fallthru
    _
  %v80 = vld [vmem:[%s0] sm:$0xff]
  %v81 = vld [vmem:[%s0 + $0x8] sm:$0xff]
  %v82 = vld [vmem:[%s0 + $0x10] sm:$0xff]
  %v83 = vld [vmem:[%s0 + $0x18] sm:$0xff]
  %v84 = vld [vmem:[%s0 + $0x20] sm:$0xff]
  %v85 = vld [vmem:[%s0 + $0x28] sm:$0xff]
  %v86 = vld [vmem:[%s0 + $0x30] sm:$0xff]
  %v87 = vld [vmem:[%s0 + $0x38] sm:$0xff]
  %v88 = vld [vmem:[#allocation2] sm:$0xf]
  %v89 = vld [vmem:[%s3] sm:$0x1]
  %v91 = vlaneseq
  %v92 = vshrl.u32 %v91, 7
  %v93 = vsub.s32 0, %v92
  %v94 = vrot.slane %v89, %v93
  %vm96 = vcmask 31744
  %v98 = vsel %vm96, %v80, 0
  %v101 = vsel %vm96, %v81, 0
  %v104 = vsel %vm96, %v82, 0
  %v107 = vsel %vm96, %v83, 0
  %v110 = vsel %vm96, %v84, 0
  %v113 = vsel %vm96, %v85, 0
  %v116 = vsel %vm96, %v86, 0
  %v119 = vsel %vm96, %v87, 0
  %vm121 = vcmask 1043456
  %v123 = vsel %vm121, %v88, 0
  %125 = vmatprep.subr.mxu0 0.0
  %126 = vmatpush1.msra.mxu0 %v123
  %127 = vmatprep.subr.mxu0 0.0
  %128 = vmatpush1.msra.mxu0 0.0
  %129 = vmatprep.subr.mxu0 0.0
  %130 = vmatpush1.msra.mxu0 0.0
  %131 = vmatprep.subr.mxu0 0.0
  %132 = vmatpush1.msra.mxu0 0.0
  %133 = vmatprep.subr.mxu0 0.0
  %134 = vmatpush1.msra.mxu0 0.0
  %135 = vmatprep.subr.mxu0 0.0
  %136 = vmatpush1.msra.mxu0 0.0
  %137 = vmatprep.subr.mxu0 0.0
  %138 = vmatpush1.msra.mxu0 0.0
  %139 = vmatprep.subr.mxu0 0.0
  %140 = vmatpush1.msra.mxu0 0.0
  %141 = vmatprep.subr.mxu0 0.0
  %142 = vmatpush1.msra.mxu0 0.0
  %143 = vmatprep.subr.mxu0 0.0
  %144 = vmatpush1.msra.mxu0 0.0
  %145 = vmatprep.subr.mxu0 0.0
  %146 = vmatpush1.msra.mxu0 0.0
  %147 = vmatprep.subr.mxu0 0.0
  %148 = vmatpush1.msra.mxu0 0.0
  %149 = vmatprep.subr.mxu0 0.0
  %150 = vmatpush1.msra.mxu0 0.0
  %151 = vmatprep.subr.mxu0 0.0
  %152 = vmatpush1.msra.mxu0 0.0
  %153 = vmatprep.subr.mxu0 0.0
  %154 = vmatpush1.msra.mxu0 0.0
  %155 = vmatprep.subr.mxu0 0.0
  %156 = vmatpush1.msra.mxu0 0.0
  %157 = vmatprep.subr.mxu0 0.0
  %158 = vmatpush1.msra.mxu0 0.0
  %159 = vmatprep.subr.mxu0 0.0
  %160 = vmatpush1.msra.mxu0 0.0
  %161 = vmatprep.subr.mxu0 0.0
  %162 = vmatpush1.msra.mxu0 0.0
  %163 = vmatprep.subr.mxu0 0.0
  %164 = vmatpush1.msra.mxu0 0.0
  %165 = vmatprep.subr.mxu0 0.0
  %166 = vmatpush1.msra.mxu0 0.0
  %167 = vmatprep.subr.mxu0 0.0
  %168 = vmatpush1.msra.mxu0 0.0
  %169 = vmatprep.subr.mxu0 0.0
  %170 = vmatpush1.msra.mxu0 0.0
  %171 = vmatprep.subr.mxu0 0.0
  %172 = vmatpush1.msra.mxu0 0.0
  %173 = vmatprep.subr.mxu0 0.0
  %174 = vmatpush1.msra.mxu0 0.0
  %175 = vmatprep.subr.mxu0 0.0
  %176 = vmatpush1.msra.mxu0 0.0
  %177 = vmatprep.subr.mxu0 0.0
  %178 = vmatpush1.msra.mxu0 0.0
  %179 = vmatprep.subr.mxu0 0.0
  %180 = vmatpush1.msra.mxu0 0.0
  %181 = vmatprep.subr.mxu0 0.0
  %182 = vmatpush1.msra.mxu0 0.0
  %183 = vmatprep.subr.mxu0 0.0
  %184 = vmatpush1.msra.mxu0 0.0
  %185 = vmatprep.subr.mxu0 0.0
  %186 = vmatpush1.msra.mxu0 0.0
  %187 = vmatprep.subr.mxu0 0.0
  %188 = vmatpush1.msra.mxu0 0.0
  %189 = vmatprep.mubr.f32.mxu0 0.0
  %190 = vmatmul.mubr.f32.gmra.mrb[0].mxu0 %v98
  %v191 = vpop.f32.mrb[0].mxu0
  %v192 = vadd.f32 %v94, %v191
  %v193 = vpop.f32.mrb[0].mxu0
  %194 = vmatprep.mubr.f32.mxu0 0.0
  %195 = vmatmul.mubr.f32.gmra.mrb[0].mxu0 %v101
  %v196 = vpop.f32.mrb[0].mxu0
  %v197 = vadd.f32 %v94, %v196
  %v198 = vpop.f32.mrb[0].mxu0
  %199 = vmatprep.mubr.f32.mxu0 0.0
  %200 = vmatmul.mubr.f32.gmra.mrb[0].mxu0 %v104
  %v201 = vpop.f32.mrb[0].mxu0
  %v202 = vadd.f32 %v94, %v201
  %v203 = vpop.f32.mrb[0].mxu0
  %204 = vmatprep.mubr.f32.mxu0 0.0
  %205 = vmatmul.mubr.f32.gmra.mrb[0].mxu0 %v107
  %v206 = vpop.f32.mrb[0].mxu0
  %v207 = vadd.f32 %v94, %v206
  %v208 = vpop.f32.mrb[0].mxu0
  %209 = vmatprep.mubr.f32.mxu0 0.0
  %210 = vmatmul.mubr.f32.gmra.mrb[0].mxu0 %v110
  %v211 = vpop.f32.mrb[0].mxu0
  %v212 = vadd.f32 %v94, %v211
  %v213 = vpop.f32.mrb[0].mxu0
  %214 = vmatprep.mubr.f32.mxu0 0.0
  %215 = vmatmul.mubr.f32.gmra.mrb[0].mxu0 %v113
  %v216 = vpop.f32.mrb[0].mxu0
  %v217 = vadd.f32 %v94, %v216
  %v218 = vpop.f32.mrb[0].mxu0
  %219 = vmatprep.mubr.f32.mxu0 0.0
  %220 = vmatmul.mubr.f32.gmra.mrb[0].mxu0 %v116
  %v221 = vpop.f32.mrb[0].mxu0
  %v222 = vadd.f32 %v94, %v221
  %v223 = vpop.f32.mrb[0].mxu0
  %224 = vmatprep.mubr.f32.mxu0 0.0
  %225 = vmatmul.mubr.f32.gmra.mrb[0].mxu0 %v119
  %v226 = vpop.f32.mrb[0].mxu0
  %v227 = vadd.f32 %v94, %v226
  %v228 = vpop.f32.mrb[0].mxu0
  %229 = vdwg.mxu0
  %230 = vst [vmem:[#allocation5] sm:$0xff] %v192
  %231 = vst [vmem:[#allocation5 + $0x8] sm:$0xff] %v197
  %232 = vst [vmem:[#allocation5 + $0x10] sm:$0xff] %v202
  %233 = vst [vmem:[#allocation5 + $0x18] sm:$0xff] %v207
  %234 = vst [vmem:[#allocation5 + $0x20] sm:$0xff] %v212
  %235 = vst [vmem:[#allocation5 + $0x28] sm:$0xff] %v217
  %236 = vst [vmem:[#allocation5 + $0x30] sm:$0xff] %v222
  %237 = vst [vmem:[#allocation5 + $0x38] sm:$0xff] %v227
  %v238 = vld [vmem:[#allocation4] sm:$0xff]
  %v239 = vld [vmem:[#allocation5] sm:$0xff]
  %v240 = vld [vmem:[#allocation3] sm:$0xff]
  %v241 = vld [vmem:[#allocation3 + $0x8] sm:$0xff]
  %v242 = vld [vmem:[#allocation3 + $0x10] sm:$0xff]
  %v243 = vld [vmem:[#allocation3 + $0x18] sm:$0xff]
  %v244 = vld [vmem:[#allocation3 + $0x20] sm:$0xff]
  %v245 = vld [vmem:[#allocation3 + $0x28] sm:$0xff]
  %v246 = vld [vmem:[#allocation3 + $0x30] sm:$0xff]
  %v247 = vld [vmem:[#allocation3 + $0x38] sm:$0xff]
  %v248 = vld [vmem:[#allocation3 + $0x40] sm:$0xff]
  %v249 = vld [vmem:[#allocation3 + $0x48] sm:$0xff]
  %v250 = vld [vmem:[#allocation3 + $0x50] sm:$0xff]
  %v251 = vld [vmem:[#allocation3 + $0x58] sm:$0xff]
  %v252 = vld [vmem:[#allocation3 + $0x60] sm:$0xff]
  %v253 = vld [vmem:[#allocation3 + $0x68] sm:$0xff]
  %v254 = vld [vmem:[#allocation3 + $0x70] sm:$0xff]
  %v255 = vld [vmem:[#allocation3 + $0x78] sm:$0xff]
  %256 = vmatprep.subr.mxu0 0.0
  %257 = vmatpush1.msra.mxu0 %v240
  %258 = vmatprep.subr.mxu0 0.0
  %259 = vmatpush1.msra.mxu0 %v241
  %260 = vmatprep.subr.mxu0 0.0
  %261 = vmatpush1.msra.mxu0 %v242
  %262 = vmatprep.subr.mxu0 0.0
  %263 = vmatpush1.msra.mxu0 %v243
  %264 = vmatprep.subr.mxu0 0.0
  %265 = vmatpush1.msra.mxu0 %v244
  %266 = vmatprep.subr.mxu0 0.0
  %267 = vmatpush1.msra.mxu0 %v245
  %268 = vmatprep.subr.mxu0 0.0
  %269 = vmatpush1.msra.mxu0 %v246
  %270 = vmatprep.subr.mxu0 0.0
  %271 = vmatpush1.msra.mxu0 %v247
  %272 = vmatprep.subr.mxu0 0.0
  %273 = vmatpush1.msra.mxu0 %v248
  %274 = vmatprep.subr.mxu0 0.0
  %275 = vmatpush1.msra.mxu0 %v249
  %276 = vmatprep.subr.mxu0 0.0
  %277 = vmatpush1.msra.mxu0 %v250
  %278 = vmatprep.subr.mxu0 0.0
  %279 = vmatpush1.msra.mxu0 %v251
  %280 = vmatprep.subr.mxu0 0.0
  %281 = vmatpush1.msra.mxu0 %v252
  %282 = vmatprep.subr.mxu0 0.0
  %283 = vmatpush1.msra.mxu0 %v253
  %284 = vmatprep.subr.mxu0 0.0
  %285 = vmatpush1.msra.mxu0 %v254
  %286 = vmatprep.subr.mxu0 0.0
  %287 = vmatpush1.msra.mxu0 %v255
  %288 = vmatprep.subr.mxu0 0.0
  %289 = vmatpush1.msra.mxu0 0.0
  %290 = vmatprep.subr.mxu0 0.0
  %291 = vmatpush1.msra.mxu0 0.0
  %292 = vmatprep.subr.mxu0 0.0
  %293 = vmatpush1.msra.mxu0 0.0
  %294 = vmatprep.subr.mxu0 0.0
  %295 = vmatpush1.msra.mxu0 0.0
  %296 = vmatprep.subr.mxu0 0.0
  %297 = vmatpush1.msra.mxu0 0.0
  %298 = vmatprep.subr.mxu0 0.0
  %299 = vmatpush1.msra.mxu0 0.0
  %300 = vmatprep.subr.mxu0 0.0
  %301 = vmatpush1.msra.mxu0 0.0
  %302 = vmatprep.subr.mxu0 0.0
  %303 = vmatpush1.msra.mxu0 0.0
  %304 = vmatprep.subr.mxu0 0.0
  %305 = vmatpush1.msra.mxu0 0.0
  %306 = vmatprep.subr.mxu0 0.0
  %307 = vmatpush1.msra.mxu0 0.0
  %308 = vmatprep.subr.mxu0 0.0
  %309 = vmatpush1.msra.mxu0 0.0
  %310 = vmatprep.subr.mxu0 0.0
  %311 = vmatpush1.msra.mxu0 0.0
  %312 = vmatprep.subr.mxu0 0.0
  %313 = vmatpush1.msra.mxu0 0.0
  %314 = vmatprep.subr.mxu0 0.0
  %315 = vmatpush1.msra.mxu0 0.0
  %316 = vmatprep.subr.mxu0 0.0
  %317 = vmatpush1.msra.mxu0 0.0
  %318 = vmatprep.subr.mxu0 0.0
  %319 = vmatpush1.msra.mxu0 0.0
  %320 = vmatprep.mubr.f32.mxu0 0.0
  %321 = vmatmul.mubr.f32.gmra.mrb[0].mxu0 %v238
  %v322 = vpop.f32.mrb[0].mxu0
  %v323 = vadd.f32 0.0, %v322
  %v324 = vpop.f32.mrb[0].mxu0
  %325 = vdwg.mxu0
  %v326 = vadd.f32 %v239, %v323
  %v327 = vmax.f32 %v326, 0.0
  %328 = vst [vmem:[%s4] sm:$0xff] %v327
  %s329 = scalar_lea.vmem [#allocation5], 8
  %v330 = vld [vmem:[%s329] sm:$0xff]
  %v331 = vld [vmem:[#allocation3] sm:$0xff]
  %v332 = vld [vmem:[#allocation3 + $0x8] sm:$0xff]
  %v333 = vld [vmem:[#allocation3 + $0x10] sm:$0xff]
  %v334 = vld [vmem:[#allocation3 + $0x18] sm:$0xff]
  %v335 = vld [vmem:[#allocation3 + $0x20] sm:$0xff]
  %v336 = vld [vmem:[#allocation3 + $0x28] sm:$0xff]
  %v337 = vld [vmem:[#allocation3 + $0x30] sm:$0xff]
  %v338 = vld [vmem:[#allocation3 + $0x38] sm:$0xff]
  %v339 = vld [vmem:[#allocation3 + $0x40] sm:$0xff]
  %v340 = vld [vmem:[#allocation3 + $0x48] sm:$0xff]
  %v341 = vld [vmem:[#allocation3 + $0x50] sm:$0xff]
  %v342 = vld [vmem:[#allocation3 + $0x58] sm:$0xff]
  %v343 = vld [vmem:[#allocation3 + $0x60] sm:$0xff]
  %v344 = vld [vmem:[#allocation3 + $0x68] sm:$0xff]
  %v345 = vld [vmem:[#allocation3 + $0x70] sm:$0xff]
  %v346 = vld [vmem:[#allocation3 + $0x78] sm:$0xff]
  %347 = vmatprep.subr.mxu0 0.0
  %348 = vmatpush1.msra.mxu0 %v331
  %349 = vmatprep.subr.mxu0 0.0
  %350 = vmatpush1.msra.mxu0 %v332
  %351 = vmatprep.subr.mxu0 0.0
  %352 = vmatpush1.msra.mxu0 %v333
  %353 = vmatprep.subr.mxu0 0.0
  %354 = vmatpush1.msra.mxu0 %v334
  %355 = vmatprep.subr.mxu0 0.0
  %356 = vmatpush1.msra.mxu0 %v335
  %357 = vmatprep.subr.mxu0 0.0
  %358 = vmatpush1.msra.mxu0 %v336
  %359 = vmatprep.subr.mxu0 0.0
  %360 = vmatpush1.msra.mxu0 %v337
  %361 = vmatprep.subr.mxu0 0.0
  %362 = vmatpush1.msra.mxu0 %v338
  %363 = vmatprep.subr.mxu0 0.0
  %364 = vmatpush1.msra.mxu0 %v339
  %365 = vmatprep.subr.mxu0 0.0
  %366 = vmatpush1.msra.mxu0 %v340
  %367 = vmatprep.subr.mxu0 0.0
  %368 = vmatpush1.msra.mxu0 %v341
  %369 = vmatprep.subr.mxu0 0.0
  %370 = vmatpush1.msra.mxu0 %v342
  %371 = vmatprep.subr.mxu0 0.0
  %372 = vmatpush1.msra.mxu0 %v343
  %373 = vmatprep.subr.mxu0 0.0
  %374 = vmatpush1.msra.mxu0 %v344
  %375 = vmatprep.subr.mxu0 0.0
  %376 = vmatpush1.msra.mxu0 %v345
  %377 = vmatprep.subr.mxu0 0.0
  %378 = vmatpush1.msra.mxu0 %v346
  %379 = vmatprep.subr.mxu0 0.0
  %380 = vmatpush1.msra.mxu0 0.0
  %381 = vmatprep.subr.mxu0 0.0
  %382 = vmatpush1.msra.mxu0 0.0
  %383 = vmatprep.subr.mxu0 0.0
  %384 = vmatpush1.msra.mxu0 0.0
  %385 = vmatprep.subr.mxu0 0.0
  %386 = vmatpush1.msra.mxu0 0.0
  %387 = vmatprep.subr.mxu0 0.0
  %388 = vmatpush1.msra.mxu0 0.0
  %389 = vmatprep.subr.mxu0 0.0
  %390 = vmatpush1.msra.mxu0 0.0
  %391 = vmatprep.subr.mxu0 0.0
  %392 = vmatpush1.msra.mxu0 0.0
  %393 = vmatprep.subr.mxu0 0.0
  %394 = vmatpush1.msra.mxu0 0.0
  %395 = vmatprep.subr.mxu0 0.0
  %396 = vmatpush1.msra.mxu0 0.0
  %397 = vmatprep.subr.mxu0 0.0
  %398 = vmatpush1.msra.mxu0 0.0
  %399 = vmatprep.subr.mxu0 0.0
  %400 = vmatpush1.msra.mxu0 0.0
  %401 = vmatprep.subr.mxu0 0.0
  %402 = vmatpush1.msra.mxu0 0.0
  %403 = vmatprep.subr.mxu0 0.0
  %404 = vmatpush1.msra.mxu0 0.0
  %405 = vmatprep.subr.mxu0 0.0
  %406 = vmatpush1.msra.mxu0 0.0
  %407 = vmatprep.subr.mxu0 0.0
  %408 = vmatpush1.msra.mxu0 0.0
  %409 = vmatprep.subr.mxu0 0.0
  %410 = vmatpush1.msra.mxu0 0.0
  %411 = vmatprep.mubr.f32.mxu0 0.0
  %412 = vmatmul.mubr.f32.gmra.mrb[0].mxu0 %v327
  %v413 = vpop.f32.mrb[0].mxu0
  %v414 = vadd.f32 0.0, %v413
  %v415 = vpop.f32.mrb[0].mxu0
  %416 = vdwg.mxu0
  %v417 = vadd.f32 %v330, %v414
  %v418 = vmax.f32 %v417, 0.0
  %s419 = scalar_lea.vmem %s4, 8
  %420 = vst [vmem:[%s419] sm:$0xff] %v418
  %s421 = scalar_lea.vmem [#allocation5], 16
  %v422 = vld [vmem:[%s421] sm:$0xff]
  %v423 = vld [vmem:[#allocation3] sm:$0xff]
  %v424 = vld [vmem:[#allocation3 + $0x8] sm:$0xff]
  %v425 = vld [vmem:[#allocation3 + $0x10] sm:$0xff]
  %v426 = vld [vmem:[#allocation3 + $0x18] sm:$0xff]
  %v427 = vld [vmem:[#allocation3 + $0x20] sm:$0xff]
  %v428 = vld [vmem:[#allocation3 + $0x28] sm:$0xff]
  %v429 = vld [vmem:[#allocation3 + $0x30] sm:$0xff]
  %v430 = vld [vmem:[#allocation3 + $0x38] sm:$0xff]
  %v431 = vld [vmem:[#allocation3 + $0x40] sm:$0xff]
  %v432 = vld [vmem:[#allocation3 + $0x48] sm:$0xff]
  %v433 = vld [vmem:[#allocation3 + $0x50] sm:$0xff]
  %v434 = vld [vmem:[#allocation3 + $0x58] sm:$0xff]
  %v435 = vld [vmem:[#allocation3 + $0x60] sm:$0xff]
  %v436 = vld [vmem:[#allocation3 + $0x68] sm:$0xff]
  %v437 = vld [vmem:[#allocation3 + $0x70] sm:$0xff]
  %v438 = vld [vmem:[#allocation3 + $0x78] sm:$0xff]
  %439 = vmatprep.subr.mxu0 0.0
  %440 = vmatpush1.msra.mxu0 %v423
  %441 = vmatprep.subr.mxu0 0.0
  %442 = vmatpush1.msra.mxu0 %v424
  %443 = vmatprep.subr.mxu0 0.0
  %444 = vmatpush1.msra.mxu0 %v425
  %445 = vmatprep.subr.mxu0 0.0
  %446 = vmatpush1.msra.mxu0 %v426
  %447 = vmatprep.subr.mxu0 0.0
  %448 = vmatpush1.msra.mxu0 %v427
  %449 = vmatprep.subr.mxu0 0.0
  %450 = vmatpush1.msra.mxu0 %v428
  %451 = vmatprep.subr.mxu0 0.0
  %452 = vmatpush1.msra.mxu0 %v429
  %453 = vmatprep.subr.mxu0 0.0
  %454 = vmatpush1.msra.mxu0 %v430
  %455 = vmatprep.subr.mxu0 0.0
  %456 = vmatpush1.msra.mxu0 %v431
  %457 = vmatprep.subr.mxu0 0.0
  %458 = vmatpush1.msra.mxu0 %v432
  %459 = vmatprep.subr.mxu0 0.0
  %460 = vmatpush1.msra.mxu0 %v433
  %461 = vmatprep.subr.mxu0 0.0
  %462 = vmatpush1.msra.mxu0 %v434
  %463 = vmatprep.subr.mxu0 0.0
  %464 = vmatpush1.msra.mxu0 %v435
  %465 = vmatprep.subr.mxu0 0.0
  %466 = vmatpush1.msra.mxu0 %v436
  %467 = vmatprep.subr.mxu0 0.0
  %468 = vmatpush1.msra.mxu0 %v437
  %469 = vmatprep.subr.mxu0 0.0
  %470 = vmatpush1.msra.mxu0 %v438
  %471 = vmatprep.subr.mxu0 0.0
  %472 = vmatpush1.msra.mxu0 0.0
  %473 = vmatprep.subr.mxu0 0.0
  %474 = vmatpush1.msra.mxu0 0.0
  %475 = vmatprep.subr.mxu0 0.0
  %476 = vmatpush1.msra.mxu0 0.0
  %477 = vmatprep.subr.mxu0 0.0
  %478 = vmatpush1.msra.mxu0 0.0
  %479 = vmatprep.subr.mxu0 0.0
  %480 = vmatpush1.msra.mxu0 0.0
  %481 = vmatprep.subr.mxu0 0.0
  %482 = vmatpush1.msra.mxu0 0.0
  %483 = vmatprep.subr.mxu0 0.0
  %484 = vmatpush1.msra.mxu0 0.0
  %485 = vmatprep.subr.mxu0 0.0
  %486 = vmatpush1.msra.mxu0 0.0
  %487 = vmatprep.subr.mxu0 0.0
  %488 = vmatpush1.msra.mxu0 0.0
  %489 = vmatprep.subr.mxu0 0.0
  %490 = vmatpush1.msra.mxu0 0.0
  %491 = vmatprep.subr.mxu0 0.0
  %492 = vmatpush1.msra.mxu0 0.0
  %493 = vmatprep.subr.mxu0 0.0
  %494 = vmatpush1.msra.mxu0 0.0
  %495 = vmatprep.subr.mxu0 0.0
  %496 = vmatpush1.msra.mxu0 0.0
  %497 = vmatprep.subr.mxu0 0.0
  %498 = vmatpush1.msra.mxu0 0.0
  %499 = vmatprep.subr.mxu0 0.0
  %500 = vmatpush1.msra.mxu0 0.0
  %501 = vmatprep.subr.mxu0 0.0
  %502 = vmatpush1.msra.mxu0 0.0
  %503 = vmatprep.mubr.f32.mxu0 0.0
  %504 = vmatmul.mubr.f32.gmra.mrb[0].mxu0 %v418
  %v505 = vpop.f32.mrb[0].mxu0
  %v506 = vadd.f32 0.0, %v505
  %v507 = vpop.f32.mrb[0].mxu0
  %508 = vdwg.mxu0
  %v509 = vadd.f32 %v422, %v506
  %v510 = vmax.f32 %v509, 0.0
  %s511 = scalar_lea.vmem %s4, 16
  %512 = vst [vmem:[%s511] sm:$0xff] %v510
  %s513 = scalar_lea.vmem [#allocation5], 24
  %v514 = vld [vmem:[%s513] sm:$0xff]
  %v515 = vld [vmem:[#allocation3] sm:$0xff]
  %v516 = vld [vmem:[#allocation3 + $0x8] sm:$0xff]
  %v517 = vld [vmem:[#allocation3 + $0x10] sm:$0xff]
  %v518 = vld [vmem:[#allocation3 + $0x18] sm:$0xff]
  %v519 = vld [vmem:[#allocation3 + $0x20] sm:$0xff]
  %v520 = vld [vmem:[#allocation3 + $0x28] sm:$0xff]
  %v521 = vld [vmem:[#allocation3 + $0x30] sm:$0xff]
  %v522 = vld [vmem:[#allocation3 + $0x38] sm:$0xff]
  %v523 = vld [vmem:[#allocation3 + $0x40] sm:$0xff]
  %v524 = vld [vmem:[#allocation3 + $0x48] sm:$0xff]
  %v525 = vld [vmem:[#allocation3 + $0x50] sm:$0xff]
  %v526 = vld [vmem:[#allocation3 + $0x58] sm:$0xff]
  %v527 = vld [vmem:[#allocation3 + $0x60] sm:$0xff]
  %v528 = vld [vmem:[#allocation3 + $0x68] sm:$0xff]
  %v529 = vld [vmem:[#allocation3 + $0x70] sm:$0xff]
  %v530 = vld [vmem:[#allocation3 + $0x78] sm:$0xff]
  %531 = vmatprep.subr.mxu0 0.0
  %532 = vmatpush1.msra.mxu0 %v515
  %533 = vmatprep.subr.mxu0 0.0
  %534 = vmatpush1.msra.mxu0 %v516
  %535 = vmatprep.subr.mxu0 0.0
  %536 = vmatpush1.msra.mxu0 %v517
  %537 = vmatprep.subr.mxu0 0.0
  %538 = vmatpush1.msra.mxu0 %v518
  %539 = vmatprep.subr.mxu0 0.0
  %540 = vmatpush1.msra.mxu0 %v519
  %541 = vmatprep.subr.mxu0 0.0
  %542 = vmatpush1.msra.mxu0 %v520
  %543 = vmatprep.subr.mxu0 0.0
  %544 = vmatpush1.msra.mxu0 %v521
  %545 = vmatprep.subr.mxu0 0.0
  %546 = vmatpush1.msra.mxu0 %v522
  %547 = vmatprep.subr.mxu0 0.0
  %548 = vmatpush1.msra.mxu0 %v523
  %549 = vmatprep.subr.mxu0 0.0
  %550 = vmatpush1.msra.mxu0 %v524
  %551 = vmatprep.subr.mxu0 0.0
  %552 = vmatpush1.msra.mxu0 %v525
  %553 = vmatprep.subr.mxu0 0.0
  %554 = vmatpush1.msra.mxu0 %v526
  %555 = vmatprep.subr.mxu0 0.0
  %556 = vmatpush1.msra.mxu0 %v527
  %557 = vmatprep.subr.mxu0 0.0
  %558 = vmatpush1.msra.mxu0 %v528
  %559 = vmatprep.subr.mxu0 0.0
  %560 = vmatpush1.msra.mxu0 %v529
  %561 = vmatprep.subr.mxu0 0.0
  %562 = vmatpush1.msra.mxu0 %v530
  %563 = vmatprep.subr.mxu0 0.0
  %564 = vmatpush1.msra.mxu0 0.0
  %565 = vmatprep.subr.mxu0 0.0
  %566 = vmatpush1.msra.mxu0 0.0
  %567 = vmatprep.subr.mxu0 0.0
  %568 = vmatpush1.msra.mxu0 0.0
  %569 = vmatprep.subr.mxu0 0.0
  %570 = vmatpush1.msra.mxu0 0.0
  %571 = vmatprep.subr.mxu0 0.0
  %572 = vmatpush1.msra.mxu0 0.0
  %573 = vmatprep.subr.mxu0 0.0
  %574 = vmatpush1.msra.mxu0 0.0
  %575 = vmatprep.subr.mxu0 0.0
  %576 = vmatpush1.msra.mxu0 0.0
  %577 = vmatprep.subr.mxu0 0.0
  %578 = vmatpush1.msra.mxu0 0.0
  %579 = vmatprep.subr.mxu0 0.0
  %580 = vmatpush1.msra.mxu0 0.0
  %581 = vmatprep.subr.mxu0 0.0
  %582 = vmatpush1.msra.mxu0 0.0
  %583 = vmatprep.subr.mxu0 0.0
  %584 = vmatpush1.msra.mxu0 0.0
  %585 = vmatprep.subr.mxu0 0.0
  %586 = vmatpush1.msra.mxu0 0.0
  %587 = vmatprep.subr.mxu0 0.0
  %588 = vmatpush1.msra.mxu0 0.0
  %589 = vmatprep.subr.mxu0 0.0
  %590 = vmatpush1.msra.mxu0 0.0
  %591 = vmatprep.subr.mxu0 0.0
  %592 = vmatpush1.msra.mxu0 0.0
  %593 = vmatprep.subr.mxu0 0.0
  %594 = vmatpush1.msra.mxu0 0.0
  %595 = vmatprep.mubr.f32.mxu0 0.0
  %596 = vmatmul.mubr.f32.gmra.mrb[0].mxu0 %v510
  %v597 = vpop.f32.mrb[0].mxu0
  %v598 = vadd.f32 0.0, %v597
  %v599 = vpop.f32.mrb[0].mxu0
  %600 = vdwg.mxu0
  %v601 = vadd.f32 %v514, %v598
  %v602 = vmax.f32 %v601, 0.0
  %s603 = scalar_lea.vmem %s4, 24
  %604 = vst [vmem:[%s603] sm:$0xff] %v602
  %s605 = scalar_lea.vmem [#allocation5], 32
  %v606 = vld [vmem:[%s605] sm:$0xff]
  %v607 = vld [vmem:[#allocation3] sm:$0xff]
  %v608 = vld [vmem:[#allocation3 + $0x8] sm:$0xff]
  %v609 = vld [vmem:[#allocation3 + $0x10] sm:$0xff]
  %v610 = vld [vmem:[#allocation3 + $0x18] sm:$0xff]
  %v611 = vld [vmem:[#allocation3 + $0x20] sm:$0xff]
  %v612 = vld [vmem:[#allocation3 + $0x28] sm:$0xff]
  %v613 = vld [vmem:[#allocation3 + $0x30] sm:$0xff]
  %v614 = vld [vmem:[#allocation3 + $0x38] sm:$0xff]
  %v615 = vld [vmem:[#allocation3 + $0x40] sm:$0xff]
  %v616 = vld [vmem:[#allocation3 + $0x48] sm:$0xff]
  %v617 = vld [vmem:[#allocation3 + $0x50] sm:$0xff]
  %v618 = vld [vmem:[#allocation3 + $0x58] sm:$0xff]
  %v619 = vld [vmem:[#allocation3 + $0x60] sm:$0xff]
  %v620 = vld [vmem:[#allocation3 + $0x68] sm:$0xff]
  %v621 = vld [vmem:[#allocation3 + $0x70] sm:$0xff]
  %v622 = vld [vmem:[#allocation3 + $0x78] sm:$0xff]
  %623 = vmatprep.subr.mxu0 0.0
  %624 = vmatpush1.msra.mxu0 %v607
  %625 = vmatprep.subr.mxu0 0.0
  %626 = vmatpush1.msra.mxu0 %v608
  %627 = vmatprep.subr.mxu0 0.0
  %628 = vmatpush1.msra.mxu0 %v609
  %629 = vmatprep.subr.mxu0 0.0
  %630 = vmatpush1.msra.mxu0 %v610
  %631 = vmatprep.subr.mxu0 0.0
  %632 = vmatpush1.msra.mxu0 %v611
  %633 = vmatprep.subr.mxu0 0.0
  %634 = vmatpush1.msra.mxu0 %v612
  %635 = vmatprep.subr.mxu0 0.0
  %636 = vmatpush1.msra.mxu0 %v613
  %637 = vmatprep.subr.mxu0 0.0
  %638 = vmatpush1.msra.mxu0 %v614
  %639 = vmatprep.subr.mxu0 0.0
  %640 = vmatpush1.msra.mxu0 %v615
  %641 = vmatprep.subr.mxu0 0.0
  %642 = vmatpush1.msra.mxu0 %v616
  %643 = vmatprep.subr.mxu0 0.0
  %644 = vmatpush1.msra.mxu0 %v617
  %645 = vmatprep.subr.mxu0 0.0
  %646 = vmatpush1.msra.mxu0 %v618
  %647 = vmatprep.subr.mxu0 0.0
  %648 = vmatpush1.msra.mxu0 %v619
  %649 = vmatprep.subr.mxu0 0.0
  %650 = vmatpush1.msra.mxu0 %v620
  %651 = vmatprep.subr.mxu0 0.0
  %652 = vmatpush1.msra.mxu0 %v621
  %653 = vmatprep.subr.mxu0 0.0
  %654 = vmatpush1.msra.mxu0 %v622
  %655 = vmatprep.subr.mxu0 0.0
  %656 = vmatpush1.msra.mxu0 0.0
  %657 = vmatprep.subr.mxu0 0.0
  %658 = vmatpush1.msra.mxu0 0.0
  %659 = vmatprep.subr.mxu0 0.0
  %660 = vmatpush1.msra.mxu0 0.0
  %661 = vmatprep.subr.mxu0 0.0
  %662 = vmatpush1.msra.mxu0 0.0
  %663 = vmatprep.subr.mxu0 0.0
  %664 = vmatpush1.msra.mxu0 0.0
  %665 = vmatprep.subr.mxu0 0.0
  %666 = vmatpush1.msra.mxu0 0.0
  %667 = vmatprep.subr.mxu0 0.0
  %668 = vmatpush1.msra.mxu0 0.0
  %669 = vmatprep.subr.mxu0 0.0
  %670 = vmatpush1.msra.mxu0 0.0
  %671 = vmatprep.subr.mxu0 0.0
  %672 = vmatpush1.msra.mxu0 0.0
  %673 = vmatprep.subr.mxu0 0.0
  %674 = vmatpush1.msra.mxu0 0.0
  %675 = vmatprep.subr.mxu0 0.0
  %676 = vmatpush1.msra.mxu0 0.0
  %677 = vmatprep.subr.mxu0 0.0
  %678 = vmatpush1.msra.mxu0 0.0
  %679 = vmatprep.subr.mxu0 0.0
  %680 = vmatpush1.msra.mxu0 0.0
  %681 = vmatprep.subr.mxu0 0.0
  %682 = vmatpush1.msra.mxu0 0.0
  %683 = vmatprep.subr.mxu0 0.0
  %684 = vmatpush1.msra.mxu0 0.0
  %685 = vmatprep.subr.mxu0 0.0
  %686 = vmatpush1.msra.mxu0 0.0
  %687 = vmatprep.mubr.f32.mxu0 0.0
  %688 = vmatmul.mubr.f32.gmra.mrb[0].mxu0 %v602
  %v689 = vpop.f32.mrb[0].mxu0
  %v690 = vadd.f32 0.0, %v689
  %v691 = vpop.f32.mrb[0].mxu0
  %692 = vdwg.mxu0
  %v693 = vadd.f32 %v606, %v690
  %v694 = vmax.f32 %v693, 0.0
  %s695 = scalar_lea.vmem %s4, 32
  %696 = vst [vmem:[%s695] sm:$0xff] %v694
  %s697 = scalar_lea.vmem [#allocation5], 40
  %v698 = vld [vmem:[%s697] sm:$0xff]
  %v699 = vld [vmem:[#allocation3] sm:$0xff]
  %v700 = vld [vmem:[#allocation3 + $0x8] sm:$0xff]
  %v701 = vld [vmem:[#allocation3 + $0x10] sm:$0xff]
  %v702 = vld [vmem:[#allocation3 + $0x18] sm:$0xff]
  %v703 = vld [vmem:[#allocation3 + $0x20] sm:$0xff]
  %v704 = vld [vmem:[#allocation3 + $0x28] sm:$0xff]
  %v705 = vld [vmem:[#allocation3 + $0x30] sm:$0xff]
  %v706 = vld [vmem:[#allocation3 + $0x38] sm:$0xff]
  %v707 = vld [vmem:[#allocation3 + $0x40] sm:$0xff]
  %v708 = vld [vmem:[#allocation3 + $0x48] sm:$0xff]
  %v709 = vld [vmem:[#allocation3 + $0x50] sm:$0xff]
  %v710 = vld [vmem:[#allocation3 + $0x58] sm:$0xff]
  %v711 = vld [vmem:[#allocation3 + $0x60] sm:$0xff]
  %v712 = vld [vmem:[#allocation3 + $0x68] sm:$0xff]
  %v713 = vld [vmem:[#allocation3 + $0x70] sm:$0xff]
  %v714 = vld [vmem:[#allocation3 + $0x78] sm:$0xff]
  %715 = vmatprep.subr.mxu0 0.0
  %716 = vmatpush1.msra.mxu0 %v699
  %717 = vmatprep.subr.mxu0 0.0
  %718 = vmatpush1.msra.mxu0 %v700
  %719 = vmatprep.subr.mxu0 0.0
  %720 = vmatpush1.msra.mxu0 %v701
  %721 = vmatprep.subr.mxu0 0.0
  %722 = vmatpush1.msra.mxu0 %v702
  %723 = vmatprep.subr.mxu0 0.0
  %724 = vmatpush1.msra.mxu0 %v703
  %725 = vmatprep.subr.mxu0 0.0
  %726 = vmatpush1.msra.mxu0 %v704
  %727 = vmatprep.subr.mxu0 0.0
  %728 = vmatpush1.msra.mxu0 %v705
  %729 = vmatprep.subr.mxu0 0.0
  %730 = vmatpush1.msra.mxu0 %v706
  %731 = vmatprep.subr.mxu0 0.0
  %732 = vmatpush1.msra.mxu0 %v707
  %733 = vmatprep.subr.mxu0 0.0
  %734 = vmatpush1.msra.mxu0 %v708
  %735 = vmatprep.subr.mxu0 0.0
  %736 = vmatpush1.msra.mxu0 %v709
  %737 = vmatprep.subr.mxu0 0.0
  %738 = vmatpush1.msra.mxu0 %v710
  %739 = vmatprep.subr.mxu0 0.0
  %740 = vmatpush1.msra.mxu0 %v711
  %741 = vmatprep.subr.mxu0 0.0
  %742 = vmatpush1.msra.mxu0 %v712
  %743 = vmatprep.subr.mxu0 0.0
  %744 = vmatpush1.msra.mxu0 %v713
  %745 = vmatprep.subr.mxu0 0.0
  %746 = vmatpush1.msra.mxu0 %v714
  %747 = vmatprep.subr.mxu0 0.0
  %748 = vmatpush1.msra.mxu0 0.0
  %749 = vmatprep.subr.mxu0 0.0
  %750 = vmatpush1.msra.mxu0 0.0
  %751 = vmatprep.subr.mxu0 0.0
  %752 = vmatpush1.msra.mxu0 0.0
  %753 = vmatprep.subr.mxu0 0.0
  %754 = vmatpush1.msra.mxu0 0.0
  %755 = vmatprep.subr.mxu0 0.0
  %756 = vmatpush1.msra.mxu0 0.0
  %757 = vmatprep.subr.mxu0 0.0
  %758 = vmatpush1.msra.mxu0 0.0
  %759 = vmatprep.subr.mxu0 0.0
  %760 = vmatpush1.msra.mxu0 0.0
  %761 = vmatprep.subr.mxu0 0.0
  %762 = vmatpush1.msra.mxu0 0.0
  %763 = vmatprep.subr.mxu0 0.0
  %764 = vmatpush1.msra.mxu0 0.0
  %765 = vmatprep.subr.mxu0 0.0
  %766 = vmatpush1.msra.mxu0 0.0
  %767 = vmatprep.subr.mxu0 0.0
  %768 = vmatpush1.msra.mxu0 0.0
  %769 = vmatprep.subr.mxu0 0.0
  %770 = vmatpush1.msra.mxu0 0.0
  %771 = vmatprep.subr.mxu0 0.0
  %772 = vmatpush1.msra.mxu0 0.0
  %773 = vmatprep.subr.mxu0 0.0
  %774 = vmatpush1.msra.mxu0 0.0
  %775 = vmatprep.subr.mxu0 0.0
  %776 = vmatpush1.msra.mxu0 0.0
  %777 = vmatprep.subr.mxu0 0.0
  %778 = vmatpush1.msra.mxu0 0.0
  %779 = vmatprep.mubr.f32.mxu0 0.0
  %780 = vmatmul.mubr.f32.gmra.mrb[0].mxu0 %v694
  %v781 = vpop.f32.mrb[0].mxu0
  %v782 = vadd.f32 0.0, %v781
  %v783 = vpop.f32.mrb[0].mxu0
  %784 = vdwg.mxu0
  %v785 = vadd.f32 %v698, %v782
  %v786 = vmax.f32 %v785, 0.0
  %s787 = scalar_lea.vmem %s4, 40
  %788 = vst [vmem:[%s787] sm:$0xff] %v786
  %s789 = scalar_lea.vmem [#allocation5], 48
  %v790 = vld [vmem:[%s789] sm:$0xff]
  %v791 = vld [vmem:[#allocation3] sm:$0xff]
  %v792 = vld [vmem:[#allocation3 + $0x8] sm:$0xff]
  %v793 = vld [vmem:[#allocation3 + $0x10] sm:$0xff]
  %v794 = vld [vmem:[#allocation3 + $0x18] sm:$0xff]
  %v795 = vld [vmem:[#allocation3 + $0x20] sm:$0xff]
  %v796 = vld [vmem:[#allocation3 + $0x28] sm:$0xff]
  %v797 = vld [vmem:[#allocation3 + $0x30] sm:$0xff]
  %v798 = vld [vmem:[#allocation3 + $0x38] sm:$0xff]
  %v799 = vld [vmem:[#allocation3 + $0x40] sm:$0xff]
  %v800 = vld [vmem:[#allocation3 + $0x48] sm:$0xff]
  %v801 = vld [vmem:[#allocation3 + $0x50] sm:$0xff]
  %v802 = vld [vmem:[#allocation3 + $0x58] sm:$0xff]
  %v803 = vld [vmem:[#allocation3 + $0x60] sm:$0xff]
  %v804 = vld [vmem:[#allocation3 + $0x68] sm:$0xff]
  %v805 = vld [vmem:[#allocation3 + $0x70] sm:$0xff]
  %v806 = vld [vmem:[#allocation3 + $0x78] sm:$0xff]
  %807 = vmatprep.subr.mxu0 0.0
  %808 = vmatpush1.msra.mxu0 %v791
  %809 = vmatprep.subr.mxu0 0.0
  %810 = vmatpush1.msra.mxu0 %v792
  %811 = vmatprep.subr.mxu0 0.0
  %812 = vmatpush1.msra.mxu0 %v793
  %813 = vmatprep.subr.mxu0 0.0
  %814 = vmatpush1.msra.mxu0 %v794
  %815 = vmatprep.subr.mxu0 0.0
  %816 = vmatpush1.msra.mxu0 %v795
  %817 = vmatprep.subr.mxu0 0.0
  %818 = vmatpush1.msra.mxu0 %v796
  %819 = vmatprep.subr.mxu0 0.0
  %820 = vmatpush1.msra.mxu0 %v797
  %821 = vmatprep.subr.mxu0 0.0
  %822 = vmatpush1.msra.mxu0 %v798
  %823 = vmatprep.subr.mxu0 0.0
  %824 = vmatpush1.msra.mxu0 %v799
  %825 = vmatprep.subr.mxu0 0.0
  %826 = vmatpush1.msra.mxu0 %v800
  %827 = vmatprep.subr.mxu0 0.0
  %828 = vmatpush1.msra.mxu0 %v801
  %829 = vmatprep.subr.mxu0 0.0
  %830 = vmatpush1.msra.mxu0 %v802
  %831 = vmatprep.subr.mxu0 0.0
  %832 = vmatpush1.msra.mxu0 %v803
  %833 = vmatprep.subr.mxu0 0.0
  %834 = vmatpush1.msra.mxu0 %v804
  %835 = vmatprep.subr.mxu0 0.0
  %836 = vmatpush1.msra.mxu0 %v805
  %837 = vmatprep.subr.mxu0 0.0
  %838 = vmatpush1.msra.mxu0 %v806
  %839 = vmatprep.subr.mxu0 0.0
  %840 = vmatpush1.msra.mxu0 0.0
  %841 = vmatprep.subr.mxu0 0.0
  %842 = vmatpush1.msra.mxu0 0.0
  %843 = vmatprep.subr.mxu0 0.0
  %844 = vmatpush1.msra.mxu0 0.0
  %845 = vmatprep.subr.mxu0 0.0
  %846 = vmatpush1.msra.mxu0 0.0
  %847 = vmatprep.subr.mxu0 0.0
  %848 = vmatpush1.msra.mxu0 0.0
  %849 = vmatprep.subr.mxu0 0.0
  %850 = vmatpush1.msra.mxu0 0.0
  %851 = vmatprep.subr.mxu0 0.0
  %852 = vmatpush1.msra.mxu0 0.0
  %853 = vmatprep.subr.mxu0 0.0
  %854 = vmatpush1.msra.mxu0 0.0
  %855 = vmatprep.subr.mxu0 0.0
  %856 = vmatpush1.msra.mxu0 0.0
  %857 = vmatprep.subr.mxu0 0.0
  %858 = vmatpush1.msra.mxu0 0.0
  %859 = vmatprep.subr.mxu0 0.0
  %860 = vmatpush1.msra.mxu0 0.0
  %861 = vmatprep.subr.mxu0 0.0
  %862 = vmatpush1.msra.mxu0 0.0
  %863 = vmatprep.subr.mxu0 0.0
  %864 = vmatpush1.msra.mxu0 0.0
  %865 = vmatprep.subr.mxu0 0.0
  %866 = vmatpush1.msra.mxu0 0.0
  %867 = vmatprep.subr.mxu0 0.0
  %868 = vmatpush1.msra.mxu0 0.0
  %869 = vmatprep.subr.mxu0 0.0
  %870 = vmatpush1.msra.mxu0 0.0
  %871 = vmatprep.mubr.f32.mxu0 0.0
  %872 = vmatmul.mubr.f32.gmra.mrb[0].mxu0 %v786
  %v873 = vpop.f32.mrb[0].mxu0
  %v874 = vadd.f32 0.0, %v873
  %v875 = vpop.f32.mrb[0].mxu0
  %876 = vdwg.mxu0
  %v877 = vadd.f32 %v790, %v874
  %v878 = vmax.f32 %v877, 0.0
  %s879 = scalar_lea.vmem %s4, 48
  %880 = vst [vmem:[%s879] sm:$0xff] %v878
  %s881 = scalar_lea.vmem [#allocation5], 56
  %v882 = vld [vmem:[%s881] sm:$0xff]
  %v883 = vld [vmem:[#allocation3] sm:$0xff]
  %v884 = vld [vmem:[#allocation3 + $0x8] sm:$0xff]
  %v885 = vld [vmem:[#allocation3 + $0x10] sm:$0xff]
  %v886 = vld [vmem:[#allocation3 + $0x18] sm:$0xff]
  %v887 = vld [vmem:[#allocation3 + $0x20] sm:$0xff]
  %v888 = vld [vmem:[#allocation3 + $0x28] sm:$0xff]
  %v889 = vld [vmem:[#allocation3 + $0x30] sm:$0xff]
  %v890 = vld [vmem:[#allocation3 + $0x38] sm:$0xff]
  %v891 = vld [vmem:[#allocation3 + $0x40] sm:$0xff]
  %v892 = vld [vmem:[#allocation3 + $0x48] sm:$0xff]
  %v893 = vld [vmem:[#allocation3 + $0x50] sm:$0xff]
  %v894 = vld [vmem:[#allocation3 + $0x58] sm:$0xff]
  %v895 = vld [vmem:[#allocation3 + $0x60] sm:$0xff]
  %v896 = vld [vmem:[#allocation3 + $0x68] sm:$0xff]
  %v897 = vld [vmem:[#allocation3 + $0x70] sm:$0xff]
  %v898 = vld [vmem:[#allocation3 + $0x78] sm:$0xff]
  %899 = vmatprep.subr.mxu0 0.0
  %900 = vmatpush1.msra.mxu0 %v883
  %901 = vmatprep.subr.mxu0 0.0
  %902 = vmatpush1.msra.mxu0 %v884
  %903 = vmatprep.subr.mxu0 0.0
  %904 = vmatpush1.msra.mxu0 %v885
  %905 = vmatprep.subr.mxu0 0.0
  %906 = vmatpush1.msra.mxu0 %v886
  %907 = vmatprep.subr.mxu0 0.0
  %908 = vmatpush1.msra.mxu0 %v887
  %909 = vmatprep.subr.mxu0 0.0
  %910 = vmatpush1.msra.mxu0 %v888
  %911 = vmatprep.subr.mxu0 0.0
  %912 = vmatpush1.msra.mxu0 %v889
  %913 = vmatprep.subr.mxu0 0.0
  %914 = vmatpush1.msra.mxu0 %v890
  %915 = vmatprep.subr.mxu0 0.0
  %916 = vmatpush1.msra.mxu0 %v891
  %917 = vmatprep.subr.mxu0 0.0
  %918 = vmatpush1.msra.mxu0 %v892
  %919 = vmatprep.subr.mxu0 0.0
  %920 = vmatpush1.msra.mxu0 %v893
  %921 = vmatprep.subr.mxu0 0.0
  %922 = vmatpush1.msra.mxu0 %v894
  %923 = vmatprep.subr.mxu0 0.0
  %924 = vmatpush1.msra.mxu0 %v895
  %925 = vmatprep.subr.mxu0 0.0
  %926 = vmatpush1.msra.mxu0 %v896
  %927 = vmatprep.subr.mxu0 0.0
  %928 = vmatpush1.msra.mxu0 %v897
  %929 = vmatprep.subr.mxu0 0.0
  %930 = vmatpush1.msra.mxu0 %v898
  %931 = vmatprep.subr.mxu0 0.0
  %932 = vmatpush1.msra.mxu0 0.0
  %933 = vmatprep.subr.mxu0 0.0
  %934 = vmatpush1.msra.mxu0 0.0
  %935 = vmatprep.subr.mxu0 0.0
  %936 = vmatpush1.msra.mxu0 0.0
  %937 = vmatprep.subr.mxu0 0.0
  %938 = vmatpush1.msra.mxu0 0.0
  %939 = vmatprep.subr.mxu0 0.0
  %940 = vmatpush1.msra.mxu0 0.0
  %941 = vmatprep.subr.mxu0 0.0
  %942 = vmatpush1.msra.mxu0 0.0
  %943 = vmatprep.subr.mxu0 0.0
  %944 = vmatpush1.msra.mxu0 0.0
  %945 = vmatprep.subr.mxu0 0.0
  %946 = vmatpush1.msra.mxu0 0.0
  %947 = vmatprep.subr.mxu0 0.0
  %948 = vmatpush1.msra.mxu0 0.0
  %949 = vmatprep.subr.mxu0 0.0
  %950 = vmatpush1.msra.mxu0 0.0
  %951 = vmatprep.subr.mxu0 0.0
  %952 = vmatpush1.msra.mxu0 0.0
  %953 = vmatprep.subr.mxu0 0.0
  %954 = vmatpush1.msra.mxu0 0.0
  %955 = vmatprep.subr.mxu0 0.0
  %956 = vmatpush1.msra.mxu0 0.0
  %957 = vmatprep.subr.mxu0 0.0
  %958 = vmatpush1.msra.mxu0 0.0
  %959 = vmatprep.subr.mxu0 0.0
  %960 = vmatpush1.msra.mxu0 0.0
  %961 = vmatprep.subr.mxu0 0.0
  %962 = vmatpush1.msra.mxu0 0.0
  %963 = vmatprep.mubr.f32.mxu0 0.0
  %964 = vmatmul.mubr.f32.gmra.mrb[0].mxu0 %v878
  %v965 = vpop.f32.mrb[0].mxu0
  %v966 = vadd.f32 0.0, %v965
  %v967 = vpop.f32.mrb[0].mxu0
  %968 = vdwg.mxu0
  %v969 = vadd.f32 %v882, %v966
  %v970 = vmax.f32 %v969, 0.0
  %s971 = scalar_lea.vmem %s4, 56
  %972 = vst [vmem:[%s971] sm:$0xff] %v970
  %973 = vst [vmem:[#allocation4] sm:$0xff] %v970
  // Predicated region
  $region48: #{rnn_model_forward.2} parent=0 // pred_check
    _
  $region49: #{rnn_model_forward.2} parent=0 // pred_check_branch
    %975 = sbr.rel (0) target = $region51
  $region50: #{rnn_model_forward.2} parent=0 // pred_region
    _
  $region51: #{rnn_model_forward.2} parent=0 // pred_fallthru
    _
  // Predicated region
  $region52: #{rnn_model_forward.2} parent=0 // pred_check
    _
  $region53: #{rnn_model_forward.2} parent=0 // pred_check_branch
    %977 = sbr.rel (0) target = $region55
  $region54: #{rnn_model_forward.2} parent=0 // pred_region
    _
  $region55: #{rnn_model_forward.2} parent=0 // pred_fallthru
    _
  %978 = vsyncmov [#allocation6]
  %s979 = vpop.sfrf %978
  %p980 = scmp.eq.s32.totalorder %s979, 0
  %p981 = pneg %p980
  %983 = shalt.err (%p981)
  %s984 = scalar_lea.sflag [#allocation6], 1
  %985 = vsyncmov %s984
  %s986 = vpop.sfrf %985
  %p987 = scmp.eq.s32.totalorder %s986, 0
  %p988 = pneg %p987
  %990 = shalt.err (%p988)

</llo_original>
